<compile_context>
chip_gen: v5e
topology: v5e:2x2
jax: 0.10.0
libtpu: 0.0.40
codegen_flags: <defaults>
</compile_context>

<pallas_src>
import functools
import math

import jax
import jax.numpy as jnp
from jax import lax
from jax.experimental import pallas as pl
from jax.experimental.pallas import tpu as pltpu


def _layer_norm(x, gamma, beta, eps=1e-5):
    # x: (R, D) f32; gamma/beta: (1, D). PyTorch LayerNorm (biased variance).
    mean = jnp.mean(x, axis=-1, keepdims=True)
    xc = x - mean
    var = jnp.mean(xc * xc, axis=-1, keepdims=True)
    return xc * lax.rsqrt(var + jnp.float32(eps)) * gamma + beta


def _encoder_block_kernel(valid_len_ref,                    # SMEM (B*H,) int32
                          x_ref,                            # (Bt, S, D)
                          wq_ref, wk_ref, wv_ref, wo_ref,   # (D, D) compute dtype
                          g1_ref, be1_ref,                  # (1, D)
                          w1_ref, b1_ref,                   # (D, F), (1, F)
                          w2_ref, b2_ref,                   # (F, D), (1, D)
                          g2_ref, be2_ref,                  # (1, D)
                          o_ref,                            # (Bt, S, D)
                          attn_slab,                        # VMEM (Bt*S, D) f32
                          *, num_heads, batch_tile, approx_recip, compute_dtype):
    i = pl.program_id(0)
    f32 = jnp.float32
    cdt = compute_dtype
    Bt = batch_tile
    _, S, D = x_ref.shape
    H = num_heads
    dh = D // H
    R = Bt * S

    # Residual / LayerNorm path stays f32; matmuls feed the MXU in compute dtype.
    x = x_ref[...].reshape(R, D).astype(f32)

    def mm(a, w):                                           # a @ w, f32 accumulation
        return lax.dot_general(a.astype(cdt), w.astype(cdt),
                               (((1,), (0,)), ((), ())),
                               preferred_element_type=f32)

    # ---- Multi-head attention: projections over the whole (Bt*S, D) slab ----
    inv_sqrt_dh = f32(1.0 / math.sqrt(dh))
    q = mm(x * inv_sqrt_dh, wq_ref[...])                    # scale folded into x
    k = mm(x, wk_ref[...])
    v = mm(x, wv_ref[...])

    # Hoisted, loop-invariant key-position iota for d2l's masked_softmax.
    col = lax.broadcasted_iota(jnp.int32, (S, S), 1)

    for bb in range(Bt):                                    # static unroll (tiny trips)
        r0 = bb * S
        for h in range(H):
            lo = h * dh
            qh = q[r0:r0 + S, lo:lo + dh]
            kh = k[r0:r0 + S, lo:lo + dh]
            vh = v[r0:r0 + S, lo:lo + dh]
            # q_h @ k_h^T without materializing a transpose: contract dh of both.
            s = lax.dot_general(qh.astype(cdt), kh.astype(cdt),
                                (((1,), (1,)), ((), ())),
                                preferred_element_type=f32)          # (S, S)
            # d2l masked_softmax: positions >= valid_len -> -1e6 before softmax.
            # torch `.repeat(H)` tiling => head-batch j = b*H + h uses vl[j % B].
            vl = valid_len_ref[(i * Bt + bb) * H + h]
            s = jnp.where(col < vl, s, f32(-1e6))
            s = s - jnp.max(s, axis=-1, keepdims=True)
            p = jnp.exp(s)
            denom = jnp.sum(p, axis=-1, keepdims=True)
            if approx_recip:
                p = p * pl.reciprocal(denom, approx=True)            # EUP slot
            else:
                p = p / denom
            # TODO(synk): training-mode attention dropout not implemented.
            oh = lax.dot_general(p.astype(cdt), vh.astype(cdt),
                                 (((1,), (0,)), ((), ())),
                                 preferred_element_type=f32)          # (S, dh)
            # Concat-free: write this head's output into its (row, lane) slot.
            attn_slab[r0:r0 + S, lo:lo + dh] = oh

    # One large lane-dense matmul with Wo instead of a lane-axis concat.
    attn = mm(attn_slab[...], wo_ref[...])                            # (R, D)

    # ---- AddNorm 1 (f32) ----
    y = _layer_norm(x + attn, g1_ref[...].astype(f32), be1_ref[...].astype(f32))

    # ---- Position-wise FFN ----
    h1 = jnp.maximum(mm(y, w1_ref[...]) + b1_ref[...].astype(f32), f32(0.0))
    h2 = mm(h1, w2_ref[...]) + b2_ref[...].astype(f32)

    # ---- AddNorm 2 (f32) ----
    z = _layer_norm(y + h2, g2_ref[...].astype(f32), be2_ref[...].astype(f32))

    o_ref[...] = z.reshape(Bt, S, D).astype(o_ref.dtype)


def _pick_batch_tile(batch, seq, target_rows=256):
    """Batch-block size: aim for ~256 MXU rows per step, keep >=2 grid steps."""
    bt = max(1, min(batch, target_rows // max(seq, 1)))
    while batch % bt != 0:
        bt -= 1
    # v7x has 2 TensorCores: prefer >= 2 parallel grid steps when batch allows.
    if batch // bt < 2 and batch >= 2:
        bt = max(1, batch // 2)
        while batch % bt != 0:
            bt -= 1
    return bt


def _vmem_limit_bytes():
    cap = 64 * 1024 * 1024                 # conservative default: v7x per-TC VMEM
    try:
        cap = int(getattr(pltpu.get_tpu_info(), "vmem_capacity_bytes", cap))
    except Exception:
        pass
    # ~75% of physical, capped at 100 MiB: ≈48 MiB on v7x, ≈96-100 MiB on v5e/v6e.
    return int(min(cap * 3 // 4, 100 * 1024 * 1024))


def encoder_block(x, valid_len, params, *, num_heads,
                  compute_dtype=jnp.bfloat16, approx_recip=True):
    """Fused d2l EncoderBlock forward (eval mode).

    x: (B, S, D); valid_len: (B,) int32 or None; params: dict of weights.
    Matmuls use `compute_dtype` operands with f32 accumulation; LayerNorm,
    softmax and residual math stay f32. Set compute_dtype=jnp.float32 and
    approx_recip=False for a bit-closer comparison against the PyTorch module.
    """
    B, S, D = x.shape
    F = params["w1"].shape[-1]
    H = num_heads
    assert D % H == 0, "num_hiddens must be divisible by num_heads"

    Bt = _pick_batch_tile(B, S)
    nsteps = B // Bt

    if valid_len is None:
        vl_rep = jnp.full((B * H,), S, dtype=jnp.int32)
    else:
        # torch `valid_len.repeat(num_heads)` == tiling (exact d2l ordering).
        vl_rep = jnp.tile(valid_len.astype(jnp.int32), H)

    # Big matmul weights travel / reside in compute_dtype (halves VMEM + DMA);
    # small affine params stay in their original dtype for f32 elementwise math.
    cast = lambda w: w.astype(compute_dtype)
    wq, wk, wv, wo = cast(params["wq"]), cast(params["wk"]), cast(params["wv"]), cast(params["wo"])
    w1, w2 = cast(params["w1"]), cast(params["w2"])
    g1, be1 = params["g1"], params["be1"]
    b1, b2 = params["b1"], params["b2"]
    g2, be2 = params["g2"], params["be2"]

    operands = (vl_rep, x, wq, wk, wv, wo, g1, be1, w1, b1, w2, b2, g2, be2)

    bpe_x = x.dtype.itemsize
    flops = int(B * (8 * S * D * D + 4 * S * S * D + 4 * S * D * F))
    transcendentals = int(B * H * S * (S + 1) + 2 * B * S)
    bytes_accessed = int(2 * B * S * D * bpe_x
                         + sum(int(a.size) * a.dtype.itemsize for a in operands[2:]))

    kernel = functools.partial(_encoder_block_kernel, num_heads=H, batch_tile=Bt,
                               approx_recip=approx_recip, compute_dtype=compute_dtype)

    def _xmap(i, vl):
        return (i, 0, 0)

    def _const(i, vl):
        return (0, 0)

    def _build(single_buffer_weights):
        if single_buffer_weights:
            # Constant-index blocks never change -> second pipeline buffer is waste.
            wspec = lambda shp: pl.BlockSpec(shp, _const, pipeline_mode=pl.Buffered(1))
        else:
            wspec = lambda shp: pl.BlockSpec(shp, _const)
        grid_spec = pltpu.PrefetchScalarGridSpec(
            num_scalar_prefetch=1,
            grid=(nsteps,),
            in_specs=[
                pl.BlockSpec((Bt, S, D), _xmap),   # X
                wspec((D, D)),                     # Wq
                wspec((D, D)),                     # Wk
                wspec((D, D)),                     # Wv
                wspec((D, D)),                     # Wo
                wspec((1, D)),                     # ln1 gamma
                wspec((1, D)),                     # ln1 beta
                wspec((D, F)),                     # W1
                wspec((1, F)),                     # b1
                wspec((F, D)),                     # W2
                wspec((1, D)),                     # b2
                wspec((1, D)),                     # ln2 gamma
                wspec((1, D)),                     # ln2 beta
            ],
            out_specs=pl.BlockSpec((Bt, S, D), _xmap),
            scratch_shapes=[pltpu.VMEM((Bt * S, D), jnp.float32)],
        )
        return pl.pallas_call(
            kernel,
            out_shape=jax.ShapeDtypeStruct((B, S, D), x.dtype),
            grid_spec=grid_spec,
            compiler_params=pltpu.CompilerParams(
                dimension_semantics=("parallel",),
                vmem_limit_bytes=_vmem_limit_bytes()),
            cost_estimate=pl.CostEstimate(flops=flops,
                                          transcendentals=transcendentals,
                                          bytes_accessed=bytes_accessed),
        )

    err = None
    for single_buffer_weights in (True, False):
        try:
            return _build(single_buffer_weights)(*operands)
        except Exception as e:  # pl.Buffered(1) plumbing is jax-version dependent
            err = e
    raise err


def _reference(x, valid_len, params, num_heads):
    """Pure-JAX f32 reference mirroring the PyTorch EncoderBlock code exactly."""
    B, S, D = x.shape
    H = num_heads
    dh = D // H
    q, k, v = x @ params["wq"], x @ params["wk"], x @ params["wv"]

    def transpose_qkv(t):
        t = t.reshape(B, S, H, dh).transpose(0, 2, 1, 3)
        return t.reshape(B * H, S, dh)

    qh, kh, vh = transpose_qkv(q), transpose_qkv(k), transpose_qkv(v)
    scores = jnp.einsum("bqd,bkd->bqk", qh, kh) / math.sqrt(dh)
    if valid_len is not None:
        vl_rep = jnp.tile(valid_len, H)                     # torch .repeat(H)
        col = jnp.arange(S)[None, None, :]
        scores = jnp.where(col < vl_rep[:, None, None], scores, -1e6)
    w = jax.nn.softmax(scores, axis=-1)
    o = jnp.einsum("bqk,bkv->bqv", w, vh)
    o = o.reshape(B, H, S, dh).transpose(0, 2, 1, 3).reshape(B, S, D)
    attn = o @ params["wo"]

    def ln(t, g, be):
        mean = t.mean(axis=-1, keepdims=True)
        var = ((t - mean) ** 2).mean(axis=-1, keepdims=True)
        return (t - mean) / jnp.sqrt(var + 1e-5) * g + be

    y = ln(x + attn, params["g1"], params["be1"])
    f = jnp.maximum(y @ params["w1"] + params["b1"], 0.0) @ params["w2"] + params["b2"]
    return ln(y + f, params["g2"], params["be2"])


if __name__ == "__main__":
    # Small shapes consistent with the module: batch=2, seq=8, num_hiddens=32,
    # num_heads=4, ffn_num_hiddens=64 (correctness-only; production configs
    # should use lane-dense multiples of 128).
    B, S, D, H, F = 2, 8, 32, 4, 64
    keys = jax.random.split(jax.random.PRNGKey(0), 13)

    def lin(kk, fan_in, shape):
        return jax.random.normal(kk, shape, jnp.float32) / math.sqrt(fan_in)

    params = dict(
        wq=lin(keys[0], D, (D, D)),
        wk=lin(keys[1], D, (D, D)),
        wv=lin(keys[2], D, (D, D)),
        wo=lin(keys[3], D, (D, D)),
        g1=1.0 + 0.1 * jax.random.normal(keys[4], (1, D), jnp.float32),
        be1=0.1 * jax.random.normal(keys[5], (1, D), jnp.float32),
        w1=lin(keys[6], D, (D, F)),
        b1=0.1 * jax.random.normal(keys[7], (1, F), jnp.float32),
        w2=lin(keys[8], F, (F, D)),
        b2=0.1 * jax.random.normal(keys[9], (1, D), jnp.float32),
        g2=1.0 + 0.1 * jax.random.normal(keys[10], (1, D), jnp.float32),
        be2=0.1 * jax.random.normal(keys[11], (1, D), jnp.float32),
    )
    x = jax.random.normal(keys[12], (B, S, D), jnp.float32)
    valid_len = jnp.array([3, 6], dtype=jnp.int32)

    ref = _reference(x, valid_len, params, H)
    ref_nomask = _reference(x, None, params, H)

    # Fast path: bf16 MXU operands + f32 accumulation (~1% relative error budget).
    out = jax.block_until_ready(encoder_block(x, valid_len, params, num_heads=H))
    assert out.shape == (B, S, D)
    assert jnp.allclose(out, ref, atol=3e-2, rtol=3e-2), "bf16 path mismatch (masked)"

    out_nm = jax.block_until_ready(encoder_block(x, None, params, num_heads=H))
    assert jnp.allclose(out_nm, ref_nomask, atol=3e-2, rtol=3e-2), "bf16 path mismatch (no mask)"

    # Exactness check: f32 operands + exact softmax reciprocal, tight tolerance.
    out32 = jax.block_until_ready(
        encoder_block(x, valid_len, params, num_heads=H,
                      compute_dtype=jnp.float32, approx_recip=False))
    assert jnp.allclose(out32, ref, atol=1e-3, rtol=1e-3), "f32 path mismatch (masked)"

    print("KERNEL_OK")
</pallas_src>

<mosaic_0001>
module attributes {stable_mosaic.version = 11 : i64} {
  func.func @_encoder_block_kernel(%arg0: i32, %arg1: memref<8xi32, #tpu.memory_space<smem>>, %arg2: memref<1x8x32xf32, #tpu.memory_space<vmem>>, %arg3: memref<32x32xbf16, #tpu.memory_space<vmem>>, %arg4: memref<32x32xbf16, #tpu.memory_space<vmem>>, %arg5: memref<32x32xbf16, #tpu.memory_space<vmem>>, %arg6: memref<32x32xbf16, #tpu.memory_space<vmem>>, %arg7: memref<1x32xf32, #tpu.memory_space<vmem>>, %arg8: memref<1x32xf32, #tpu.memory_space<vmem>>, %arg9: memref<32x64xbf16, #tpu.memory_space<vmem>>, %arg10: memref<1x64xf32, #tpu.memory_space<vmem>>, %arg11: memref<64x32xbf16, #tpu.memory_space<vmem>>, %arg12: memref<1x32xf32, #tpu.memory_space<vmem>>, %arg13: memref<1x32xf32, #tpu.memory_space<vmem>>, %arg14: memref<1x32xf32, #tpu.memory_space<vmem>>, %arg15: memref<1x8x32xf32, #tpu.memory_space<vmem>>, %arg16: memref<8x32xf32, #tpu.memory_space<vmem>>) attributes {dimension_semantics = [#tpu.dimension_semantics<parallel>], iteration_bounds = array<i64: 2>, scalar_prefetch = 1 : i64, scratch_operands = 1 : i64, tpu.core_type = #tpu.core_type<tc>, window_params = [{transform_indices = @transform_0, window_bounds = array<i64: 1, 8, 32>}, {pipeline_mode = #tpu.pipeline_mode<synchronous>, transform_indices = @transform_1, window_bounds = array<i64: 32, 32>}, {pipeline_mode = #tpu.pipeline_mode<synchronous>, transform_indices = @transform_2, window_bounds = array<i64: 32, 32>}, {pipeline_mode = #tpu.pipeline_mode<synchronous>, transform_indices = @transform_3, window_bounds = array<i64: 32, 32>}, {pipeline_mode = #tpu.pipeline_mode<synchronous>, transform_indices = @transform_4, window_bounds = array<i64: 32, 32>}, {pipeline_mode = #tpu.pipeline_mode<synchronous>, transform_indices = @transform_5, window_bounds = array<i64: 1, 32>}, {pipeline_mode = #tpu.pipeline_mode<synchronous>, transform_indices = @transform_6, window_bounds = array<i64: 1, 32>}, {pipeline_mode = #tpu.pipeline_mode<synchronous>, transform_indices = @transform_7, window_bounds = array<i64: 32, 64>}, {pipeline_mode = #tpu.pipeline_mode<synchronous>, transform_indices = @transform_8, window_bounds = array<i64: 1, 64>}, {pipeline_mode = #tpu.pipeline_mode<synchronous>, transform_indices = @transform_9, window_bounds = array<i64: 64, 32>}, {pipeline_mode = #tpu.pipeline_mode<synchronous>, transform_indices = @transform_10, window_bounds = array<i64: 1, 32>}, {pipeline_mode = #tpu.pipeline_mode<synchronous>, transform_indices = @transform_11, window_bounds = array<i64: 1, 32>}, {pipeline_mode = #tpu.pipeline_mode<synchronous>, transform_indices = @transform_12, window_bounds = array<i64: 1, 32>}, {transform_indices = @transform_13, window_bounds = array<i64: 1, 8, 32>}]} {
    %c0 = arith.constant 0 : index
    %c0_0 = arith.constant 0 : index
    %c0_1 = arith.constant 0 : index
    %0 = vector.load %arg2[%c0, %c0_0, %c0_1] : memref<1x8x32xf32, #tpu.memory_space<vmem>>, vector<1x8x32xf32>
    %1 = vector.shape_cast %0 : vector<1x8x32xf32> to vector<8x32xf32>
    %cst = arith.constant 0.353553385 : f32
    %2 = vector.broadcast %cst : f32 to vector<8x32xf32>
    %3 = arith.mulf %1, %2 : vector<8x32xf32>
    %c0_2 = arith.constant 0 : index
    %c0_3 = arith.constant 0 : index
    %4 = vector.load %arg3[%c0_2, %c0_3] : memref<32x32xbf16, #tpu.memory_space<vmem>>, vector<32x32xbf16>
    %5 = arith.truncf %3 : vector<8x32xf32> to vector<8x32xbf16>
    %cst_4 = arith.constant dense<0.000000e+00> : vector<8x32xf32>
    %6 = tpu.matmul %5, %4, %cst_4 {dimension_numbers = #tpu.dot_dimension_numbers<[1], [0], [0], [1], [0, 0, 1, 1], [], []>} : vector<8x32xbf16>, vector<32x32xbf16>, vector<8x32xf32> -> vector<8x32xf32>
    %c0_5 = arith.constant 0 : index
    %c0_6 = arith.constant 0 : index
    %7 = vector.load %arg4[%c0_5, %c0_6] : memref<32x32xbf16, #tpu.memory_space<vmem>>, vector<32x32xbf16>
    %8 = arith.truncf %1 : vector<8x32xf32> to vector<8x32xbf16>
    %cst_7 = arith.constant dense<0.000000e+00> : vector<8x32xf32>
    %9 = tpu.matmul %8, %7, %cst_7 {dimension_numbers = #tpu.dot_dimension_numbers<[1], [0], [0], [1], [0, 0, 1, 1], [], []>} : vector<8x32xbf16>, vector<32x32xbf16>, vector<8x32xf32> -> vector<8x32xf32>
    %c0_8 = arith.constant 0 : index
    %c0_9 = arith.constant 0 : index
    %10 = vector.load %arg5[%c0_8, %c0_9] : memref<32x32xbf16, #tpu.memory_space<vmem>>, vector<32x32xbf16>
    %11 = arith.truncf %1 : vector<8x32xf32> to vector<8x32xbf16>
    %cst_10 = arith.constant dense<0.000000e+00> : vector<8x32xf32>
    %12 = tpu.matmul %11, %10, %cst_10 {dimension_numbers = #tpu.dot_dimension_numbers<[1], [0], [0], [1], [0, 0, 1, 1], [], []>} : vector<8x32xbf16>, vector<32x32xbf16>, vector<8x32xf32> -> vector<8x32xf32>
    %13 = tpu.iota {dimensions = array<i32: 1>} : vector<8x8xi32>
    %14 = vector.extract_strided_slice %6 {offsets = [0, 0], sizes = [8, 8], strides = [1, 1]} : vector<8x32xf32> to vector<8x8xf32>
    %15 = vector.extract_strided_slice %9 {offsets = [0, 0], sizes = [8, 8], strides = [1, 1]} : vector<8x32xf32> to vector<8x8xf32>
    %16 = vector.extract_strided_slice %12 {offsets = [0, 0], sizes = [8, 8], strides = [1, 1]} : vector<8x32xf32> to vector<8x8xf32>
    %17 = arith.truncf %14 : vector<8x8xf32> to vector<8x8xbf16>
    %18 = arith.truncf %15 : vector<8x8xf32> to vector<8x8xbf16>
    %cst_11 = arith.constant dense<0.000000e+00> : vector<8x8xf32>
    %19 = tpu.matmul %17, %18, %cst_11 {dimension_numbers = #tpu.dot_dimension_numbers<[1], [1], [0], [0], [0, 0, 1, 0], [], []>} : vector<8x8xbf16>, vector<8x8xbf16>, vector<8x8xf32> -> vector<8x8xf32>
    %c1_i32 = arith.constant 1 : i32
    %20 = arith.muli %arg0, %c1_i32 : i32
    %c0_i32 = arith.constant 0 : i32
    %21 = arith.addi %20, %c0_i32 : i32
    %c4_i32 = arith.constant 4 : i32
    %22 = arith.muli %21, %c4_i32 : i32
    %c0_i32_12 = arith.constant 0 : i32
    %23 = arith.addi %22, %c0_i32_12 : i32
    %24 = arith.index_cast %23 : i32 to index
    %25 = memref.load %arg1[%24] : memref<8xi32, #tpu.memory_space<smem>>
    %26 = vector.broadcast %25 : i32 to vector<8x8xi32>
    %27 = arith.cmpi slt, %13, %26 : vector<8x8xi32>
    %cst_13 = arith.constant -1.000000e+06 : f32
    %28 = vector.broadcast %cst_13 : f32 to vector<8x8xf32>
    %29 = arith.select %27, %19, %28 : vector<8x8xi1>, vector<8x8xf32>
    %cst_14 = arith.constant dense<0xFF800000> : vector<8xf32>
    %30 = vector.multi_reduction <maximumf>, %29, %cst_14 [1] : vector<8x8xf32> to vector<8xf32>
    %31 = vector.shape_cast %30 : vector<8xf32> to vector<8x1xf32>
    %32 = vector.broadcast %31 : vector<8x1xf32> to vector<8x8xf32>
    %33 = arith.subf %29, %32 : vector<8x8xf32>
    %34 = math.exp %33 : vector<8x8xf32>
    %cst_15 = arith.constant dense<0.000000e+00> : vector<8xf32>
    %35 = vector.multi_reduction <add>, %34, %cst_15 [1] : vector<8x8xf32> to vector<8xf32>
    %36 = vector.shape_cast %35 : vector<8xf32> to vector<8x1xf32>
    %37 = tpu.reciprocal %36 {approx = true} : vector<8x1xf32> -> vector<8x1xf32>
    %38 = vector.broadcast %37 : vector<8x1xf32> to vector<8x8xf32>
    %39 = arith.mulf %34, %38 : vector<8x8xf32>
    %40 = arith.truncf %39 : vector<8x8xf32> to vector<8x8xbf16>
    %41 = arith.truncf %16 : vector<8x8xf32> to vector<8x8xbf16>
    %cst_16 = arith.constant dense<0.000000e+00> : vector<8x8xf32>
    %42 = tpu.matmul %40, %41, %cst_16 {dimension_numbers = #tpu.dot_dimension_numbers<[1], [0], [0], [1], [0, 0, 1, 1], [], []>} : vector<8x8xbf16>, vector<8x8xbf16>, vector<8x8xf32> -> vector<8x8xf32>
    %c0_17 = arith.constant 0 : index
    %c0_18 = arith.constant 0 : index
    %43 = vector.load %arg16[%c0_17, %c0_18] : memref<8x32xf32, #tpu.memory_space<vmem>>, vector<8x8xf32>
    tpu.vector_store %arg16[%c0_17, %c0_18], %42 {strides = array<i32>} : memref<8x32xf32, #tpu.memory_space<vmem>>, vector<8x8xf32>,
    %44 = vector.extract_strided_slice %6 {offsets = [0, 8], sizes = [8, 8], strides = [1, 1]} : vector<8x32xf32> to vector<8x8xf32>
    %45 = vector.extract_strided_slice %9 {offsets = [0, 8], sizes = [8, 8], strides = [1, 1]} : vector<8x32xf32> to vector<8x8xf32>
    %46 = vector.extract_strided_slice %12 {offsets = [0, 8], sizes = [8, 8], strides = [1, 1]} : vector<8x32xf32> to vector<8x8xf32>
    %47 = arith.truncf %44 : vector<8x8xf32> to vector<8x8xbf16>
    %48 = arith.truncf %45 : vector<8x8xf32> to vector<8x8xbf16>
    %cst_19 = arith.constant dense<0.000000e+00> : vector<8x8xf32>
    %49 = tpu.matmul %47, %48, %cst_19 {dimension_numbers = #tpu.dot_dimension_numbers<[1], [1], [0], [0], [0, 0, 1, 0], [], []>} : vector<8x8xbf16>, vector<8x8xbf16>, vector<8x8xf32> -> vector<8x8xf32>
    %c1_i32_20 = arith.constant 1 : i32
    %50 = arith.muli %arg0, %c1_i32_20 : i32
    %c0_i32_21 = arith.constant 0 : i32
    %51 = arith.addi %50, %c0_i32_21 : i32
    %c4_i32_22 = arith.constant 4 : i32
    %52 = arith.muli %51, %c4_i32_22 : i32
    %c1_i32_23 = arith.constant 1 : i32
    %53 = arith.addi %52, %c1_i32_23 : i32
    %54 = arith.index_cast %53 : i32 to index
    %55 = memref.load %arg1[%54] : memref<8xi32, #tpu.memory_space<smem>>
    %56 = vector.broadcast %55 : i32 to vector<8x8xi32>
    %57 = arith.cmpi slt, %13, %56 : vector<8x8xi32>
    %cst_24 = arith.constant -1.000000e+06 : f32
    %58 = vector.broadcast %cst_24 : f32 to vector<8x8xf32>
    %59 = arith.select %57, %49, %58 : vector<8x8xi1>, vector<8x8xf32>
    %cst_25 = arith.constant dense<0xFF800000> : vector<8xf32>
    %60 = vector.multi_reduction <maximumf>, %59, %cst_25 [1] : vector<8x8xf32> to vector<8xf32>
    %61 = vector.shape_cast %60 : vector<8xf32> to vector<8x1xf32>
    %62 = vector.broadcast %61 : vector<8x1xf32> to vector<8x8xf32>
    %63 = arith.subf %59, %62 : vector<8x8xf32>
    %64 = math.exp %63 : vector<8x8xf32>
    %cst_26 = arith.constant dense<0.000000e+00> : vector<8xf32>
    %65 = vector.multi_reduction <add>, %64, %cst_26 [1] : vector<8x8xf32> to vector<8xf32>
    %66 = vector.shape_cast %65 : vector<8xf32> to vector<8x1xf32>
    %67 = tpu.reciprocal %66 {approx = true} : vector<8x1xf32> -> vector<8x1xf32>
    %68 = vector.broadcast %67 : vector<8x1xf32> to vector<8x8xf32>
    %69 = arith.mulf %64, %68 : vector<8x8xf32>
    %70 = arith.truncf %69 : vector<8x8xf32> to vector<8x8xbf16>
    %71 = arith.truncf %46 : vector<8x8xf32> to vector<8x8xbf16>
    %cst_27 = arith.constant dense<0.000000e+00> : vector<8x8xf32>
    %72 = tpu.matmul %70, %71, %cst_27 {dimension_numbers = #tpu.dot_dimension_numbers<[1], [0], [0], [1], [0, 0, 1, 1], [], []>} : vector<8x8xbf16>, vector<8x8xbf16>, vector<8x8xf32> -> vector<8x8xf32>
    %c0_28 = arith.constant 0 : index
    %c8 = arith.constant 8 : index
    %73 = vector.load %arg16[%c0_28, %c8] : memref<8x32xf32, #tpu.memory_space<vmem>>, vector<8x8xf32>
    tpu.vector_store %arg16[%c0_28, %c8], %72 {strides = array<i32>} : memref<8x32xf32, #tpu.memory_space<vmem>>, vector<8x8xf32>,
    %74 = vector.extract_strided_slice %6 {offsets = [0, 16], sizes = [8, 8], strides = [1, 1]} : vector<8x32xf32> to vector<8x8xf32>
    %75 = vector.extract_strided_slice %9 {offsets = [0, 16], sizes = [8, 8], strides = [1, 1]} : vector<8x32xf32> to vector<8x8xf32>
    %76 = vector.extract_strided_slice %12 {offsets = [0, 16], sizes = [8, 8], strides = [1, 1]} : vector<8x32xf32> to vector<8x8xf32>
    %77 = arith.truncf %74 : vector<8x8xf32> to vector<8x8xbf16>
    %78 = arith.truncf %75 : vector<8x8xf32> to vector<8x8xbf16>
    %cst_29 = arith.constant dense<0.000000e+00> : vector<8x8xf32>
    %79 = tpu.matmul %77, %78, %cst_29 {dimension_numbers = #tpu.dot_dimension_numbers<[1], [1], [0], [0], [0, 0, 1, 0], [], []>} : vector<8x8xbf16>, vector<8x8xbf16>, vector<8x8xf32> -> vector<8x8xf32>
    %c1_i32_30 = arith.constant 1 : i32
    %80 = arith.muli %arg0, %c1_i32_30 : i32
    %c0_i32_31 = arith.constant 0 : i32
    %81 = arith.addi %80, %c0_i32_31 : i32
    %c4_i32_32 = arith.constant 4 : i32
    %82 = arith.muli %81, %c4_i32_32 : i32
    %c2_i32 = arith.constant 2 : i32
    %83 = arith.addi %82, %c2_i32 : i32
    %84 = arith.index_cast %83 : i32 to index
    %85 = memref.load %arg1[%84] : memref<8xi32, #tpu.memory_space<smem>>
    %86 = vector.broadcast %85 : i32 to vector<8x8xi32>
    %87 = arith.cmpi slt, %13, %86 : vector<8x8xi32>
    %cst_33 = arith.constant -1.000000e+06 : f32
    %88 = vector.broadcast %cst_33 : f32 to vector<8x8xf32>
    %89 = arith.select %87, %79, %88 : vector<8x8xi1>, vector<8x8xf32>
    %cst_34 = arith.constant dense<0xFF800000> : vector<8xf32>
    %90 = vector.multi_reduction <maximumf>, %89, %cst_34 [1] : vector<8x8xf32> to vector<8xf32>
    %91 = vector.shape_cast %90 : vector<8xf32> to vector<8x1xf32>
    %92 = vector.broadcast %91 : vector<8x1xf32> to vector<8x8xf32>
    %93 = arith.subf %89, %92 : vector<8x8xf32>
    %94 = math.exp %93 : vector<8x8xf32>
    %cst_35 = arith.constant dense<0.000000e+00> : vector<8xf32>
    %95 = vector.multi_reduction <add>, %94, %cst_35 [1] : vector<8x8xf32> to vector<8xf32>
    %96 = vector.shape_cast %95 : vector<8xf32> to vector<8x1xf32>
    %97 = tpu.reciprocal %96 {approx = true} : vector<8x1xf32> -> vector<8x1xf32>
    %98 = vector.broadcast %97 : vector<8x1xf32> to vector<8x8xf32>
    %99 = arith.mulf %94, %98 : vector<8x8xf32>
    %100 = arith.truncf %99 : vector<8x8xf32> to vector<8x8xbf16>
    %101 = arith.truncf %76 : vector<8x8xf32> to vector<8x8xbf16>
    %cst_36 = arith.constant dense<0.000000e+00> : vector<8x8xf32>
    %102 = tpu.matmul %100, %101, %cst_36 {dimension_numbers = #tpu.dot_dimension_numbers<[1], [0], [0], [1], [0, 0, 1, 1], [], []>} : vector<8x8xbf16>, vector<8x8xbf16>, vector<8x8xf32> -> vector<8x8xf32>
    %c0_37 = arith.constant 0 : index
    %c16 = arith.constant 16 : index
    %103 = vector.load %arg16[%c0_37, %c16] : memref<8x32xf32, #tpu.memory_space<vmem>>, vector<8x8xf32>
    tpu.vector_store %arg16[%c0_37, %c16], %102 {strides = array<i32>} : memref<8x32xf32, #tpu.memory_space<vmem>>, vector<8x8xf32>,
    %104 = vector.extract_strided_slice %6 {offsets = [0, 24], sizes = [8, 8], strides = [1, 1]} : vector<8x32xf32> to vector<8x8xf32>
    %105 = vector.extract_strided_slice %9 {offsets = [0, 24], sizes = [8, 8], strides = [1, 1]} : vector<8x32xf32> to vector<8x8xf32>
    %106 = vector.extract_strided_slice %12 {offsets = [0, 24], sizes = [8, 8], strides = [1, 1]} : vector<8x32xf32> to vector<8x8xf32>
    %107 = arith.truncf %104 : vector<8x8xf32> to vector<8x8xbf16>
    %108 = arith.truncf %105 : vector<8x8xf32> to vector<8x8xbf16>
    %cst_38 = arith.constant dense<0.000000e+00> : vector<8x8xf32>
    %109 = tpu.matmul %107, %108, %cst_38 {dimension_numbers = #tpu.dot_dimension_numbers<[1], [1], [0], [0], [0, 0, 1, 0], [], []>} : vector<8x8xbf16>, vector<8x8xbf16>, vector<8x8xf32> -> vector<8x8xf32>
    %c1_i32_39 = arith.constant 1 : i32
    %110 = arith.muli %arg0, %c1_i32_39 : i32
    %c0_i32_40 = arith.constant 0 : i32
    %111 = arith.addi %110, %c0_i32_40 : i32
    %c4_i32_41 = arith.constant 4 : i32
    %112 = arith.muli %111, %c4_i32_41 : i32
    %c3_i32 = arith.constant 3 : i32
    %113 = arith.addi %112, %c3_i32 : i32
    %114 = arith.index_cast %113 : i32 to index
    %115 = memref.load %arg1[%114] : memref<8xi32, #tpu.memory_space<smem>>
    %116 = vector.broadcast %115 : i32 to vector<8x8xi32>
    %117 = arith.cmpi slt, %13, %116 : vector<8x8xi32>
    %cst_42 = arith.constant -1.000000e+06 : f32
    %118 = vector.broadcast %cst_42 : f32 to vector<8x8xf32>
    %119 = arith.select %117, %109, %118 : vector<8x8xi1>, vector<8x8xf32>
    %cst_43 = arith.constant dense<0xFF800000> : vector<8xf32>
    %120 = vector.multi_reduction <maximumf>, %119, %cst_43 [1] : vector<8x8xf32> to vector<8xf32>
    %121 = vector.shape_cast %120 : vector<8xf32> to vector<8x1xf32>
    %122 = vector.broadcast %121 : vector<8x1xf32> to vector<8x8xf32>
    %123 = arith.subf %119, %122 : vector<8x8xf32>
    %124 = math.exp %123 : vector<8x8xf32>
    %cst_44 = arith.constant dense<0.000000e+00> : vector<8xf32>
    %125 = vector.multi_reduction <add>, %124, %cst_44 [1] : vector<8x8xf32> to vector<8xf32>
    %126 = vector.shape_cast %125 : vector<8xf32> to vector<8x1xf32>
    %127 = tpu.reciprocal %126 {approx = true} : vector<8x1xf32> -> vector<8x1xf32>
    %128 = vector.broadcast %127 : vector<8x1xf32> to vector<8x8xf32>
    %129 = arith.mulf %124, %128 : vector<8x8xf32>
    %130 = arith.truncf %129 : vector<8x8xf32> to vector<8x8xbf16>
    %131 = arith.truncf %106 : vector<8x8xf32> to vector<8x8xbf16>
    %cst_45 = arith.constant dense<0.000000e+00> : vector<8x8xf32>
    %132 = tpu.matmul %130, %131, %cst_45 {dimension_numbers = #tpu.dot_dimension_numbers<[1], [0], [0], [1], [0, 0, 1, 1], [], []>} : vector<8x8xbf16>, vector<8x8xbf16>, vector<8x8xf32> -> vector<8x8xf32>
    %c0_46 = arith.constant 0 : index
    %c24 = arith.constant 24 : index
    %133 = vector.load %arg16[%c0_46, %c24] : memref<8x32xf32, #tpu.memory_space<vmem>>, vector<8x8xf32>
    tpu.vector_store %arg16[%c0_46, %c24], %132 {strides = array<i32>} : memref<8x32xf32, #tpu.memory_space<vmem>>, vector<8x8xf32>,
    %c0_47 = arith.constant 0 : index
    %c0_48 = arith.constant 0 : index
    %134 = vector.load %arg16[%c0_47, %c0_48] : memref<8x32xf32, #tpu.memory_space<vmem>>, vector<8x32xf32>
    %c0_49 = arith.constant 0 : index
    %c0_50 = arith.constant 0 : index
    %135 = vector.load %arg6[%c0_49, %c0_50] : memref<32x32xbf16, #tpu.memory_space<vmem>>, vector<32x32xbf16>
    %136 = arith.truncf %134 : vector<8x32xf32> to vector<8x32xbf16>
    %cst_51 = arith.constant dense<0.000000e+00> : vector<8x32xf32>
    %137 = tpu.matmul %136, %135, %cst_51 {dimension_numbers = #tpu.dot_dimension_numbers<[1], [0], [0], [1], [0, 0, 1, 1], [], []>} : vector<8x32xbf16>, vector<32x32xbf16>, vector<8x32xf32> -> vector<8x32xf32>
    %138 = arith.addf %1, %137 : vector<8x32xf32>
    %c0_52 = arith.constant 0 : index
    %c0_53 = arith.constant 0 : index
    %139 = vector.load %arg7[%c0_52, %c0_53] : memref<1x32xf32, #tpu.memory_space<vmem>>, vector<1x32xf32>
    %c0_54 = arith.constant 0 : index
    %c0_55 = arith.constant 0 : index
    %140 = vector.load %arg8[%c0_54, %c0_55] : memref<1x32xf32, #tpu.memory_space<vmem>>, vector<1x32xf32>
    %cst_56 = arith.constant dense<0.000000e+00> : vector<8xf32>
    %141 = vector.multi_reduction <add>, %138, %cst_56 [1] : vector<8x32xf32> to vector<8xf32>
    %142 = vector.shape_cast %141 : vector<8xf32> to vector<8x1xf32>
    %cst_57 = arith.constant 3.200000e+01 : f32
    %143 = vector.broadcast %cst_57 : f32 to vector<8x1xf32>
    %144 = arith.divf %142, %143 : vector<8x1xf32>
    %145 = vector.broadcast %144 : vector<8x1xf32> to vector<8x32xf32>
    %146 = arith.subf %138, %145 : vector<8x32xf32>
    %147 = arith.mulf %146, %146 : vector<8x32xf32>
    %cst_58 = arith.constant dense<0.000000e+00> : vector<8xf32>
    %148 = vector.multi_reduction <add>, %147, %cst_58 [1] : vector<8x32xf32> to vector<8xf32>
    %149 = vector.shape_cast %148 : vector<8xf32> to vector<8x1xf32>
    %cst_59 = arith.constant 3.200000e+01 : f32
    %150 = vector.broadcast %cst_59 : f32 to vector<8x1xf32>
    %151 = arith.divf %149, %150 : vector<8x1xf32>
    %cst_60 = arith.constant 9.99999974E-6 : f32
    %152 = vector.broadcast %cst_60 : f32 to vector<8x1xf32>
    %153 = arith.addf %151, %152 : vector<8x1xf32>
    %154 = math.rsqrt %153 : vector<8x1xf32>
    %155 = vector.broadcast %154 : vector<8x1xf32> to vector<8x32xf32>
    %156 = arith.mulf %146, %155 : vector<8x32xf32>
    %157 = vector.broadcast %139 : vector<1x32xf32> to vector<8x32xf32>
    %158 = arith.mulf %156, %157 : vector<8x32xf32>
    %159 = vector.broadcast %140 : vector<1x32xf32> to vector<8x32xf32>
    %160 = arith.addf %158, %159 : vector<8x32xf32>
    %c0_61 = arith.constant 0 : index
    %c0_62 = arith.constant 0 : index
    %161 = vector.load %arg9[%c0_61, %c0_62] : memref<32x64xbf16, #tpu.memory_space<vmem>>, vector<32x64xbf16>
    %162 = arith.truncf %160 : vector<8x32xf32> to vector<8x32xbf16>
    %cst_63 = arith.constant dense<0.000000e+00> : vector<8x64xf32>
    %163 = tpu.matmul %162, %161, %cst_63 {dimension_numbers = #tpu.dot_dimension_numbers<[1], [0], [0], [1], [0, 0, 1, 1], [], []>} : vector<8x32xbf16>, vector<32x64xbf16>, vector<8x64xf32> -> vector<8x64xf32>
    %c0_64 = arith.constant 0 : index
    %c0_65 = arith.constant 0 : index
    %164 = vector.load %arg10[%c0_64, %c0_65] : memref<1x64xf32, #tpu.memory_space<vmem>>, vector<1x64xf32>
    %165 = vector.broadcast %164 : vector<1x64xf32> to vector<8x64xf32>
    %166 = arith.addf %163, %165 : vector<8x64xf32>
    %cst_66 = arith.constant 0.000000e+00 : f32
    %167 = vector.broadcast %cst_66 : f32 to vector<8x64xf32>
    %168 = arith.maximumf %166, %167 : vector<8x64xf32>
    %c0_67 = arith.constant 0 : index
    %c0_68 = arith.constant 0 : index
    %169 = vector.load %arg11[%c0_67, %c0_68] : memref<64x32xbf16, #tpu.memory_space<vmem>>, vector<64x32xbf16>
    %170 = arith.truncf %168 : vector<8x64xf32> to vector<8x64xbf16>
    %cst_69 = arith.constant dense<0.000000e+00> : vector<8x32xf32>
    %171 = tpu.matmul %170, %169, %cst_69 {dimension_numbers = #tpu.dot_dimension_numbers<[1], [0], [0], [1], [0, 0, 1, 1], [], []>} : vector<8x64xbf16>, vector<64x32xbf16>, vector<8x32xf32> -> vector<8x32xf32>
    %c0_70 = arith.constant 0 : index
    %c0_71 = arith.constant 0 : index
    %172 = vector.load %arg12[%c0_70, %c0_71] : memref<1x32xf32, #tpu.memory_space<vmem>>, vector<1x32xf32>
    %173 = vector.broadcast %172 : vector<1x32xf32> to vector<8x32xf32>
    %174 = arith.addf %171, %173 : vector<8x32xf32>
    %175 = arith.addf %160, %174 : vector<8x32xf32>
    %c0_72 = arith.constant 0 : index
    %c0_73 = arith.constant 0 : index
    %176 = vector.load %arg13[%c0_72, %c0_73] : memref<1x32xf32, #tpu.memory_space<vmem>>, vector<1x32xf32>
    %c0_74 = arith.constant 0 : index
    %c0_75 = arith.constant 0 : index
    %177 = vector.load %arg14[%c0_74, %c0_75] : memref<1x32xf32, #tpu.memory_space<vmem>>, vector<1x32xf32>
    %cst_76 = arith.constant dense<0.000000e+00> : vector<8xf32>
    %178 = vector.multi_reduction <add>, %175, %cst_76 [1] : vector<8x32xf32> to vector<8xf32>
    %179 = vector.shape_cast %178 : vector<8xf32> to vector<8x1xf32>
    %cst_77 = arith.constant 3.200000e+01 : f32
    %180 = vector.broadcast %cst_77 : f32 to vector<8x1xf32>
    %181 = arith.divf %179, %180 : vector<8x1xf32>
    %182 = vector.broadcast %181 : vector<8x1xf32> to vector<8x32xf32>
    %183 = arith.subf %175, %182 : vector<8x32xf32>
    %184 = arith.mulf %183, %183 : vector<8x32xf32>
    %cst_78 = arith.constant dense<0.000000e+00> : vector<8xf32>
    %185 = vector.multi_reduction <add>, %184, %cst_78 [1] : vector<8x32xf32> to vector<8xf32>
    %186 = vector.shape_cast %185 : vector<8xf32> to vector<8x1xf32>
    %cst_79 = arith.constant 3.200000e+01 : f32
    %187 = vector.broadcast %cst_79 : f32 to vector<8x1xf32>
    %188 = arith.divf %186, %187 : vector<8x1xf32>
    %cst_80 = arith.constant 9.99999974E-6 : f32
    %189 = vector.broadcast %cst_80 : f32 to vector<8x1xf32>
    %190 = arith.addf %188, %189 : vector<8x1xf32>
    %191 = math.rsqrt %190 : vector<8x1xf32>
    %192 = vector.broadcast %191 : vector<8x1xf32> to vector<8x32xf32>
    %193 = arith.mulf %183, %192 : vector<8x32xf32>
    %194 = vector.broadcast %176 : vector<1x32xf32> to vector<8x32xf32>
    %195 = arith.mulf %193, %194 : vector<8x32xf32>
    %196 = vector.broadcast %177 : vector<1x32xf32> to vector<8x32xf32>
    %197 = arith.addf %195, %196 : vector<8x32xf32>
    %198 = vector.shape_cast %197 : vector<8x32xf32> to vector<1x8x32xf32>
    %c0_81 = arith.constant 0 : index
    %c0_82 = arith.constant 0 : index
    %c0_83 = arith.constant 0 : index
    %199 = vector.load %arg15[%c0_81, %c0_82, %c0_83] : memref<1x8x32xf32, #tpu.memory_space<vmem>>, vector<1x8x32xf32>
    tpu.vector_store %arg15[%c0_81, %c0_82, %c0_83], %198 {strides = array<i32>} : memref<1x8x32xf32, #tpu.memory_space<vmem>>, vector<1x8x32xf32>,
    return
  }
  func.func @transform_0(%arg0: i32, %arg1: memref<8xi32, #tpu.memory_space<smem>>) -> (i32, i32, i32) {
    %c0_i32 = arith.constant 0 : i32
    %c0_i32_0 = arith.constant 0 : i32
    %c0_i32_1 = arith.constant 0 : i32
    return %arg0, %c0_i32, %c0_i32_0 : i32, i32, i32
  }
  func.func @transform_1(%arg0: i32, %arg1: memref<8xi32, #tpu.memory_space<smem>>) -> (i32, i32) {
    %c0_i32 = arith.constant 0 : i32
    %c0_i32_0 = arith.constant 0 : i32
    %c0_i32_1 = arith.constant 0 : i32
    return %c0_i32, %c0_i32_0 : i32, i32
  }
  func.func @transform_2(%arg0: i32, %arg1: memref<8xi32, #tpu.memory_space<smem>>) -> (i32, i32) {
    %c0_i32 = arith.constant 0 : i32
    %c0_i32_0 = arith.constant 0 : i32
    %c0_i32_1 = arith.constant 0 : i32
    return %c0_i32, %c0_i32_0 : i32, i32
  }
  func.func @transform_3(%arg0: i32, %arg1: memref<8xi32, #tpu.memory_space<smem>>) -> (i32, i32) {
    %c0_i32 = arith.constant 0 : i32
    %c0_i32_0 = arith.constant 0 : i32
    %c0_i32_1 = arith.constant 0 : i32
    return %c0_i32, %c0_i32_0 : i32, i32
  }
  func.func @transform_4(%arg0: i32, %arg1: memref<8xi32, #tpu.memory_space<smem>>) -> (i32, i32) {
    %c0_i32 = arith.constant 0 : i32
    %c0_i32_0 = arith.constant 0 : i32
    %c0_i32_1 = arith.constant 0 : i32
    return %c0_i32, %c0_i32_0 : i32, i32
  }
  func.func @transform_5(%arg0: i32, %arg1: memref<8xi32, #tpu.memory_space<smem>>) -> (i32, i32) {
    %c0_i32 = arith.constant 0 : i32
    %c0_i32_0 = arith.constant 0 : i32
    %c0_i32_1 = arith.constant 0 : i32
    return %c0_i32, %c0_i32_0 : i32, i32
  }
  func.func @transform_6(%arg0: i32, %arg1: memref<8xi32, #tpu.memory_space<smem>>) -> (i32, i32) {
    %c0_i32 = arith.constant 0 : i32
    %c0_i32_0 = arith.constant 0 : i32
    %c0_i32_1 = arith.constant 0 : i32
    return %c0_i32, %c0_i32_0 : i32, i32
  }
  func.func @transform_7(%arg0: i32, %arg1: memref<8xi32, #tpu.memory_space<smem>>) -> (i32, i32) {
    %c0_i32 = arith.constant 0 : i32
    %c0_i32_0 = arith.constant 0 : i32
    %c0_i32_1 = arith.constant 0 : i32
    return %c0_i32, %c0_i32_0 : i32, i32
  }
  func.func @transform_8(%arg0: i32, %arg1: memref<8xi32, #tpu.memory_space<smem>>) -> (i32, i32) {
    %c0_i32 = arith.constant 0 : i32
    %c0_i32_0 = arith.constant 0 : i32
    %c0_i32_1 = arith.constant 0 : i32
    return %c0_i32, %c0_i32_0 : i32, i32
  }
  func.func @transform_9(%arg0: i32, %arg1: memref<8xi32, #tpu.memory_space<smem>>) -> (i32, i32) {
    %c0_i32 = arith.constant 0 : i32
    %c0_i32_0 = arith.constant 0 : i32
    %c0_i32_1 = arith.constant 0 : i32
    return %c0_i32, %c0_i32_0 : i32, i32
  }
  func.func @transform_10(%arg0: i32, %arg1: memref<8xi32, #tpu.memory_space<smem>>) -> (i32, i32) {
    %c0_i32 = arith.constant 0 : i32
    %c0_i32_0 = arith.constant 0 : i32
    %c0_i32_1 = arith.constant 0 : i32
    return %c0_i32, %c0_i32_0 : i32, i32
  }
  func.func @transform_11(%arg0: i32, %arg1: memref<8xi32, #tpu.memory_space<smem>>) -> (i32, i32) {
    %c0_i32 = arith.constant 0 : i32
    %c0_i32_0 = arith.constant 0 : i32
    %c0_i32_1 = arith.constant 0 : i32
    return %c0_i32, %c0_i32_0 : i32, i32
  }
  func.func @transform_12(%arg0: i32, %arg1: memref<8xi32, #tpu.memory_space<smem>>) -> (i32, i32) {
    %c0_i32 = arith.constant 0 : i32
    %c0_i32_0 = arith.constant 0 : i32
    %c0_i32_1 = arith.constant 0 : i32
    return %c0_i32, %c0_i32_0 : i32, i32
  }
  func.func @transform_13(%arg0: i32, %arg1: memref<8xi32, #tpu.memory_space<smem>>) -> (i32, i32, i32) {
    %c0_i32 = arith.constant 0 : i32
    %c0_i32_0 = arith.constant 0 : i32
    %c0_i32_1 = arith.constant 0 : i32
    return %arg0, %c0_i32, %c0_i32_0 : i32, i32, i32
  }
}

module attributes {stable_mosaic.version = 11 : i64} {
  func.func @_encoder_block_kernel(%arg0: i32, %arg1: memref<8xi32, #tpu.memory_space<smem>>, %arg2: memref<1x8x32xf32, #tpu.memory_space<vmem>>, %arg3: memref<32x32xbf16, #tpu.memory_space<vmem>>, %arg4: memref<32x32xbf16, #tpu.memory_space<vmem>>, %arg5: memref<32x32xbf16, #tpu.memory_space<vmem>>, %arg6: memref<32x32xbf16, #tpu.memory_space<vmem>>, %arg7: memref<1x32xf32, #tpu.memory_space<vmem>>, %arg8: memref<1x32xf32, #tpu.memory_space<vmem>>, %arg9: memref<32x64xbf16, #tpu.memory_space<vmem>>, %arg10: memref<1x64xf32, #tpu.memory_space<vmem>>, %arg11: memref<64x32xbf16, #tpu.memory_space<vmem>>, %arg12: memref<1x32xf32, #tpu.memory_space<vmem>>, %arg13: memref<1x32xf32, #tpu.memory_space<vmem>>, %arg14: memref<1x32xf32, #tpu.memory_space<vmem>>, %arg15: memref<1x8x32xf32, #tpu.memory_space<vmem>>, %arg16: memref<8x32xf32, #tpu.memory_space<vmem>>) attributes {dimension_semantics = [#tpu.dimension_semantics<parallel>], iteration_bounds = array<i64: 2>, scalar_prefetch = 1 : i64, scratch_operands = 1 : i64, tpu.core_type = #tpu.core_type<tc>, window_params = [{transform_indices = @transform_0, window_bounds = array<i64: 1, 8, 32>}, {pipeline_mode = #tpu.pipeline_mode<synchronous>, transform_indices = @transform_1, window_bounds = array<i64: 32, 32>}, {pipeline_mode = #tpu.pipeline_mode<synchronous>, transform_indices = @transform_2, window_bounds = array<i64: 32, 32>}, {pipeline_mode = #tpu.pipeline_mode<synchronous>, transform_indices = @transform_3, window_bounds = array<i64: 32, 32>}, {pipeline_mode = #tpu.pipeline_mode<synchronous>, transform_indices = @transform_4, window_bounds = array<i64: 32, 32>}, {pipeline_mode = #tpu.pipeline_mode<synchronous>, transform_indices = @transform_5, window_bounds = array<i64: 1, 32>}, {pipeline_mode = #tpu.pipeline_mode<synchronous>, transform_indices = @transform_6, window_bounds = array<i64: 1, 32>}, {pipeline_mode = #tpu.pipeline_mode<synchronous>, transform_indices = @transform_7, window_bounds = array<i64: 32, 64>}, {pipeline_mode = #tpu.pipeline_mode<synchronous>, transform_indices = @transform_8, window_bounds = array<i64: 1, 64>}, {pipeline_mode = #tpu.pipeline_mode<synchronous>, transform_indices = @transform_9, window_bounds = array<i64: 64, 32>}, {pipeline_mode = #tpu.pipeline_mode<synchronous>, transform_indices = @transform_10, window_bounds = array<i64: 1, 32>}, {pipeline_mode = #tpu.pipeline_mode<synchronous>, transform_indices = @transform_11, window_bounds = array<i64: 1, 32>}, {pipeline_mode = #tpu.pipeline_mode<synchronous>, transform_indices = @transform_12, window_bounds = array<i64: 1, 32>}, {transform_indices = @transform_13, window_bounds = array<i64: 1, 8, 32>}]} {
    %c0 = arith.constant 0 : index
    %c0_0 = arith.constant 0 : index
    %c0_1 = arith.constant 0 : index
    %0 = vector.load %arg2[%c0, %c0_0, %c0_1] : memref<1x8x32xf32, #tpu.memory_space<vmem>>, vector<1x8x32xf32>
    %1 = vector.shape_cast %0 : vector<1x8x32xf32> to vector<8x32xf32>
    %cst = arith.constant 0.353553385 : f32
    %2 = vector.broadcast %cst : f32 to vector<8x32xf32>
    %3 = arith.mulf %1, %2 : vector<8x32xf32>
    %c0_2 = arith.constant 0 : index
    %c0_3 = arith.constant 0 : index
    %4 = vector.load %arg3[%c0_2, %c0_3] : memref<32x32xbf16, #tpu.memory_space<vmem>>, vector<32x32xbf16>
    %5 = arith.truncf %3 : vector<8x32xf32> to vector<8x32xbf16>
    %cst_4 = arith.constant dense<0.000000e+00> : vector<8x32xf32>
    %6 = tpu.matmul %5, %4, %cst_4 {dimension_numbers = #tpu.dot_dimension_numbers<[1], [0], [0], [1], [0, 0, 1, 1], [], []>} : vector<8x32xbf16>, vector<32x32xbf16>, vector<8x32xf32> -> vector<8x32xf32>
    %c0_5 = arith.constant 0 : index
    %c0_6 = arith.constant 0 : index
    %7 = vector.load %arg4[%c0_5, %c0_6] : memref<32x32xbf16, #tpu.memory_space<vmem>>, vector<32x32xbf16>
    %8 = arith.truncf %1 : vector<8x32xf32> to vector<8x32xbf16>
    %cst_7 = arith.constant dense<0.000000e+00> : vector<8x32xf32>
    %9 = tpu.matmul %8, %7, %cst_7 {dimension_numbers = #tpu.dot_dimension_numbers<[1], [0], [0], [1], [0, 0, 1, 1], [], []>} : vector<8x32xbf16>, vector<32x32xbf16>, vector<8x32xf32> -> vector<8x32xf32>
    %c0_8 = arith.constant 0 : index
    %c0_9 = arith.constant 0 : index
    %10 = vector.load %arg5[%c0_8, %c0_9] : memref<32x32xbf16, #tpu.memory_space<vmem>>, vector<32x32xbf16>
    %11 = arith.truncf %1 : vector<8x32xf32> to vector<8x32xbf16>
    %cst_10 = arith.constant dense<0.000000e+00> : vector<8x32xf32>
    %12 = tpu.matmul %11, %10, %cst_10 {dimension_numbers = #tpu.dot_dimension_numbers<[1], [0], [0], [1], [0, 0, 1, 1], [], []>} : vector<8x32xbf16>, vector<32x32xbf16>, vector<8x32xf32> -> vector<8x32xf32>
    %13 = tpu.iota {dimensions = array<i32: 1>} : vector<8x8xi32>
    %14 = vector.extract_strided_slice %6 {offsets = [0, 0], sizes = [8, 8], strides = [1, 1]} : vector<8x32xf32> to vector<8x8xf32>
    %15 = vector.extract_strided_slice %9 {offsets = [0, 0], sizes = [8, 8], strides = [1, 1]} : vector<8x32xf32> to vector<8x8xf32>
    %16 = vector.extract_strided_slice %12 {offsets = [0, 0], sizes = [8, 8], strides = [1, 1]} : vector<8x32xf32> to vector<8x8xf32>
    %17 = arith.truncf %14 : vector<8x8xf32> to vector<8x8xbf16>
    %18 = arith.truncf %15 : vector<8x8xf32> to vector<8x8xbf16>
    %cst_11 = arith.constant dense<0.000000e+00> : vector<8x8xf32>
    %19 = tpu.matmul %17, %18, %cst_11 {dimension_numbers = #tpu.dot_dimension_numbers<[1], [1], [0], [0], [0, 0, 1, 0], [], []>} : vector<8x8xbf16>, vector<8x8xbf16>, vector<8x8xf32> -> vector<8x8xf32>
    %c1_i32 = arith.constant 1 : i32
    %20 = arith.muli %arg0, %c1_i32 : i32
    %c0_i32 = arith.constant 0 : i32
    %21 = arith.addi %20, %c0_i32 : i32
    %c4_i32 = arith.constant 4 : i32
    %22 = arith.muli %21, %c4_i32 : i32
    %c0_i32_12 = arith.constant 0 : i32
    %23 = arith.addi %22, %c0_i32_12 : i32
    %24 = arith.index_cast %23 : i32 to index
    %25 = memref.load %arg1[%24] : memref<8xi32, #tpu.memory_space<smem>>
    %26 = vector.broadcast %25 : i32 to vector<8x8xi32>
    %27 = arith.cmpi slt, %13, %26 : vector<8x8xi32>
    %cst_13 = arith.constant -1.000000e+06 : f32
    %28 = vector.broadcast %cst_13 : f32 to vector<8x8xf32>
    %29 = arith.select %27, %19, %28 : vector<8x8xi1>, vector<8x8xf32>
    %cst_14 = arith.constant dense<0xFF800000> : vector<8xf32>
    %30 = vector.multi_reduction <maximumf>, %29, %cst_14 [1] : vector<8x8xf32> to vector<8xf32>
    %31 = vector.shape_cast %30 : vector<8xf32> to vector<8x1xf32>
    %32 = vector.broadcast %31 : vector<8x1xf32> to vector<8x8xf32>
    %33 = arith.subf %29, %32 : vector<8x8xf32>
    %34 = math.exp %33 : vector<8x8xf32>
    %cst_15 = arith.constant dense<0.000000e+00> : vector<8xf32>
    %35 = vector.multi_reduction <add>, %34, %cst_15 [1] : vector<8x8xf32> to vector<8xf32>
    %36 = vector.shape_cast %35 : vector<8xf32> to vector<8x1xf32>
    %37 = tpu.reciprocal %36 {approx = true} : vector<8x1xf32> -> vector<8x1xf32>
    %38 = vector.broadcast %37 : vector<8x1xf32> to vector<8x8xf32>
    %39 = arith.mulf %34, %38 : vector<8x8xf32>
    %40 = arith.truncf %39 : vector<8x8xf32> to vector<8x8xbf16>
    %41 = arith.truncf %16 : vector<8x8xf32> to vector<8x8xbf16>
    %cst_16 = arith.constant dense<0.000000e+00> : vector<8x8xf32>
    %42 = tpu.matmul %40, %41, %cst_16 {dimension_numbers = #tpu.dot_dimension_numbers<[1], [0], [0], [1], [0, 0, 1, 1], [], []>} : vector<8x8xbf16>, vector<8x8xbf16>, vector<8x8xf32> -> vector<8x8xf32>
    %c0_17 = arith.constant 0 : index
    %c0_18 = arith.constant 0 : index
    %43 = vector.load %arg16[%c0_17, %c0_18] : memref<8x32xf32, #tpu.memory_space<vmem>>, vector<8x8xf32>
    tpu.vector_store %arg16[%c0_17, %c0_18], %42 {strides = array<i32>} : memref<8x32xf32, #tpu.memory_space<vmem>>, vector<8x8xf32>,
    %44 = vector.extract_strided_slice %6 {offsets = [0, 8], sizes = [8, 8], strides = [1, 1]} : vector<8x32xf32> to vector<8x8xf32>
    %45 = vector.extract_strided_slice %9 {offsets = [0, 8], sizes = [8, 8], strides = [1, 1]} : vector<8x32xf32> to vector<8x8xf32>
    %46 = vector.extract_strided_slice %12 {offsets = [0, 8], sizes = [8, 8], strides = [1, 1]} : vector<8x32xf32> to vector<8x8xf32>
    %47 = arith.truncf %44 : vector<8x8xf32> to vector<8x8xbf16>
    %48 = arith.truncf %45 : vector<8x8xf32> to vector<8x8xbf16>
    %cst_19 = arith.constant dense<0.000000e+00> : vector<8x8xf32>
    %49 = tpu.matmul %47, %48, %cst_19 {dimension_numbers = #tpu.dot_dimension_numbers<[1], [1], [0], [0], [0, 0, 1, 0], [], []>} : vector<8x8xbf16>, vector<8x8xbf16>, vector<8x8xf32> -> vector<8x8xf32>
    %c1_i32_20 = arith.constant 1 : i32
    %50 = arith.muli %arg0, %c1_i32_20 : i32
    %c0_i32_21 = arith.constant 0 : i32
    %51 = arith.addi %50, %c0_i32_21 : i32
    %c4_i32_22 = arith.constant 4 : i32
    %52 = arith.muli %51, %c4_i32_22 : i32
    %c1_i32_23 = arith.constant 1 : i32
    %53 = arith.addi %52, %c1_i32_23 : i32
    %54 = arith.index_cast %53 : i32 to index
    %55 = memref.load %arg1[%54] : memref<8xi32, #tpu.memory_space<smem>>
    %56 = vector.broadcast %55 : i32 to vector<8x8xi32>
    %57 = arith.cmpi slt, %13, %56 : vector<8x8xi32>
    %cst_24 = arith.constant -1.000000e+06 : f32
    %58 = vector.broadcast %cst_24 : f32 to vector<8x8xf32>
    %59 = arith.select %57, %49, %58 : vector<8x8xi1>, vector<8x8xf32>
    %cst_25 = arith.constant dense<0xFF800000> : vector<8xf32>
    %60 = vector.multi_reduction <maximumf>, %59, %cst_25 [1] : vector<8x8xf32> to vector<8xf32>
    %61 = vector.shape_cast %60 : vector<8xf32> to vector<8x1xf32>
    %62 = vector.broadcast %61 : vector<8x1xf32> to vector<8x8xf32>
    %63 = arith.subf %59, %62 : vector<8x8xf32>
    %64 = math.exp %63 : vector<8x8xf32>
    %cst_26 = arith.constant dense<0.000000e+00> : vector<8xf32>
    %65 = vector.multi_reduction <add>, %64, %cst_26 [1] : vector<8x8xf32> to vector<8xf32>
    %66 = vector.shape_cast %65 : vector<8xf32> to vector<8x1xf32>
    %67 = tpu.reciprocal %66 {approx = true} : vector<8x1xf32> -> vector<8x1xf32>
    %68 = vector.broadcast %67 : vector<8x1xf32> to vector<8x8xf32>
    %69 = arith.mulf %64, %68 : vector<8x8xf32>
    %70 = arith.truncf %69 : vector<8x8xf32> to vector<8x8xbf16>
    %71 = arith.truncf %46 : vector<8x8xf32> to vector<8x8xbf16>
    %cst_27 = arith.constant dense<0.000000e+00> : vector<8x8xf32>
    %72 = tpu.matmul %70, %71, %cst_27 {dimension_numbers = #tpu.dot_dimension_numbers<[1], [0], [0], [1], [0, 0, 1, 1], [], []>} : vector<8x8xbf16>, vector<8x8xbf16>, vector<8x8xf32> -> vector<8x8xf32>
    %c0_28 = arith.constant 0 : index
    %c8 = arith.constant 8 : index
    %73 = vector.load %arg16[%c0_28, %c8] : memref<8x32xf32, #tpu.memory_space<vmem>>, vector<8x8xf32>
    tpu.vector_store %arg16[%c0_28, %c8], %72 {strides = array<i32>} : memref<8x32xf32, #tpu.memory_space<vmem>>, vector<8x8xf32>,
    %74 = vector.extract_strided_slice %6 {offsets = [0, 16], sizes = [8, 8], strides = [1, 1]} : vector<8x32xf32> to vector<8x8xf32>
    %75 = vector.extract_strided_slice %9 {offsets = [0, 16], sizes = [8, 8], strides = [1, 1]} : vector<8x32xf32> to vector<8x8xf32>
    %76 = vector.extract_strided_slice %12 {offsets = [0, 16], sizes = [8, 8], strides = [1, 1]} : vector<8x32xf32> to vector<8x8xf32>
    %77 = arith.truncf %74 : vector<8x8xf32> to vector<8x8xbf16>
    %78 = arith.truncf %75 : vector<8x8xf32> to vector<8x8xbf16>
    %cst_29 = arith.constant dense<0.000000e+00> : vector<8x8xf32>
    %79 = tpu.matmul %77, %78, %cst_29 {dimension_numbers = #tpu.dot_dimension_numbers<[1], [1], [0], [0], [0, 0, 1, 0], [], []>} : vector<8x8xbf16>, vector<8x8xbf16>, vector<8x8xf32> -> vector<8x8xf32>
    %c1_i32_30 = arith.constant 1 : i32
    %80 = arith.muli %arg0, %c1_i32_30 : i32
    %c0_i32_31 = arith.constant 0 : i32
    %81 = arith.addi %80, %c0_i32_31 : i32
    %c4_i32_32 = arith.constant 4 : i32
    %82 = arith.muli %81, %c4_i32_32 : i32
    %c2_i32 = arith.constant 2 : i32
    %83 = arith.addi %82, %c2_i32 : i32
    %84 = arith.index_cast %83 : i32 to index
    %85 = memref.load %arg1[%84] : memref<8xi32, #tpu.memory_space<smem>>
    %86 = vector.broadcast %85 : i32 to vector<8x8xi32>
    %87 = arith.cmpi slt, %13, %86 : vector<8x8xi32>
    %cst_33 = arith.constant -1.000000e+06 : f32
    %88 = vector.broadcast %cst_33 : f32 to vector<8x8xf32>
    %89 = arith.select %87, %79, %88 : vector<8x8xi1>, vector<8x8xf32>
    %cst_34 = arith.constant dense<0xFF800000> : vector<8xf32>
    %90 = vector.multi_reduction <maximumf>, %89, %cst_34 [1] : vector<8x8xf32> to vector<8xf32>
    %91 = vector.shape_cast %90 : vector<8xf32> to vector<8x1xf32>
    %92 = vector.broadcast %91 : vector<8x1xf32> to vector<8x8xf32>
    %93 = arith.subf %89, %92 : vector<8x8xf32>
    %94 = math.exp %93 : vector<8x8xf32>
    %cst_35 = arith.constant dense<0.000000e+00> : vector<8xf32>
    %95 = vector.multi_reduction <add>, %94, %cst_35 [1] : vector<8x8xf32> to vector<8xf32>
    %96 = vector.shape_cast %95 : vector<8xf32> to vector<8x1xf32>
    %97 = tpu.reciprocal %96 {approx = true} : vector<8x1xf32> -> vector<8x1xf32>
    %98 = vector.broadcast %97 : vector<8x1xf32> to vector<8x8xf32>
    %99 = arith.mulf %94, %98 : vector<8x8xf32>
    %100 = arith.truncf %99 : vector<8x8xf32> to vector<8x8xbf16>
    %101 = arith.truncf %76 : vector<8x8xf32> to vector<8x8xbf16>
    %cst_36 = arith.constant dense<0.000000e+00> : vector<8x8xf32>
    %102 = tpu.matmul %100, %101, %cst_36 {dimension_numbers = #tpu.dot_dimension_numbers<[1], [0], [0], [1], [0, 0, 1, 1], [], []>} : vector<8x8xbf16>, vector<8x8xbf16>, vector<8x8xf32> -> vector<8x8xf32>
    %c0_37 = arith.constant 0 : index
    %c16 = arith.constant 16 : index
    %103 = vector.load %arg16[%c0_37, %c16] : memref<8x32xf32, #tpu.memory_space<vmem>>, vector<8x8xf32>
    tpu.vector_store %arg16[%c0_37, %c16], %102 {strides = array<i32>} : memref<8x32xf32, #tpu.memory_space<vmem>>, vector<8x8xf32>,
    %104 = vector.extract_strided_slice %6 {offsets = [0, 24], sizes = [8, 8], strides = [1, 1]} : vector<8x32xf32> to vector<8x8xf32>
    %105 = vector.extract_strided_slice %9 {offsets = [0, 24], sizes = [8, 8], strides = [1, 1]} : vector<8x32xf32> to vector<8x8xf32>
    %106 = vector.extract_strided_slice %12 {offsets = [0, 24], sizes = [8, 8], strides = [1, 1]} : vector<8x32xf32> to vector<8x8xf32>
    %107 = arith.truncf %104 : vector<8x8xf32> to vector<8x8xbf16>
    %108 = arith.truncf %105 : vector<8x8xf32> to vector<8x8xbf16>
    %cst_38 = arith.constant dense<0.000000e+00> : vector<8x8xf32>
    %109 = tpu.matmul %107, %108, %cst_38 {dimension_numbers = #tpu.dot_dimension_numbers<[1], [1], [0], [0], [0, 0, 1, 0], [], []>} : vector<8x8xbf16>, vector<8x8xbf16>, vector<8x8xf32> -> vector<8x8xf32>
    %c1_i32_39 = arith.constant 1 : i32
    %110 = arith.muli %arg0, %c1_i32_39 : i32
    %c0_i32_40 = arith.constant 0 : i32
    %111 = arith.addi %110, %c0_i32_40 : i32
    %c4_i32_41 = arith.constant 4 : i32
    %112 = arith.muli %111, %c4_i32_41 : i32
    %c3_i32 = arith.constant 3 : i32
    %113 = arith.addi %112, %c3_i32 : i32
    %114 = arith.index_cast %113 : i32 to index
    %115 = memref.load %arg1[%114] : memref<8xi32, #tpu.memory_space<smem>>
    %116 = vector.broadcast %115 : i32 to vector<8x8xi32>
    %117 = arith.cmpi slt, %13, %116 : vector<8x8xi32>
    %cst_42 = arith.constant -1.000000e+06 : f32
    %118 = vector.broadcast %cst_42 : f32 to vector<8x8xf32>
    %119 = arith.select %117, %109, %118 : vector<8x8xi1>, vector<8x8xf32>
    %cst_43 = arith.constant dense<0xFF800000> : vector<8xf32>
    %120 = vector.multi_reduction <maximumf>, %119, %cst_43 [1] : vector<8x8xf32> to vector<8xf32>
    %121 = vector.shape_cast %120 : vector<8xf32> to vector<8x1xf32>
    %122 = vector.broadcast %121 : vector<8x1xf32> to vector<8x8xf32>
    %123 = arith.subf %119, %122 : vector<8x8xf32>
    %124 = math.exp %123 : vector<8x8xf32>
    %cst_44 = arith.constant dense<0.000000e+00> : vector<8xf32>
    %125 = vector.multi_reduction <add>, %124, %cst_44 [1] : vector<8x8xf32> to vector<8xf32>
    %126 = vector.shape_cast %125 : vector<8xf32> to vector<8x1xf32>
    %127 = tpu.reciprocal %126 {approx = true} : vector<8x1xf32> -> vector<8x1xf32>
    %128 = vector.broadcast %127 : vector<8x1xf32> to vector<8x8xf32>
    %129 = arith.mulf %124, %128 : vector<8x8xf32>
    %130 = arith.truncf %129 : vector<8x8xf32> to vector<8x8xbf16>
    %131 = arith.truncf %106 : vector<8x8xf32> to vector<8x8xbf16>
    %cst_45 = arith.constant dense<0.000000e+00> : vector<8x8xf32>
    %132 = tpu.matmul %130, %131, %cst_45 {dimension_numbers = #tpu.dot_dimension_numbers<[1], [0], [0], [1], [0, 0, 1, 1], [], []>} : vector<8x8xbf16>, vector<8x8xbf16>, vector<8x8xf32> -> vector<8x8xf32>
    %c0_46 = arith.constant 0 : index
    %c24 = arith.constant 24 : index
    %133 = vector.load %arg16[%c0_46, %c24] : memref<8x32xf32, #tpu.memory_space<vmem>>, vector<8x8xf32>
    tpu.vector_store %arg16[%c0_46, %c24], %132 {strides = array<i32>} : memref<8x32xf32, #tpu.memory_space<vmem>>, vector<8x8xf32>,
    %c0_47 = arith.constant 0 : index
    %c0_48 = arith.constant 0 : index
    %134 = vector.load %arg16[%c0_47, %c0_48] : memref<8x32xf32, #tpu.memory_space<vmem>>, vector<8x32xf32>
    %c0_49 = arith.constant 0 : index
    %c0_50 = arith.constant 0 : index
    %135 = vector.load %arg6[%c0_49, %c0_50] : memref<32x32xbf16, #tpu.memory_space<vmem>>, vector<32x32xbf16>
    %136 = arith.truncf %134 : vector<8x32xf32> to vector<8x32xbf16>
    %cst_51 = arith.constant dense<0.000000e+00> : vector<8x32xf32>
    %137 = tpu.matmul %136, %135, %cst_51 {dimension_numbers = #tpu.dot_dimension_numbers<[1], [0], [0], [1], [0, 0, 1, 1], [], []>} : vector<8x32xbf16>, vector<32x32xbf16>, vector<8x32xf32> -> vector<8x32xf32>
    %138 = arith.addf %1, %137 : vector<8x32xf32>
    %c0_52 = arith.constant 0 : index
    %c0_53 = arith.constant 0 : index
    %139 = vector.load %arg7[%c0_52, %c0_53] : memref<1x32xf32, #tpu.memory_space<vmem>>, vector<1x32xf32>
    %c0_54 = arith.constant 0 : index
    %c0_55 = arith.constant 0 : index
    %140 = vector.load %arg8[%c0_54, %c0_55] : memref<1x32xf32, #tpu.memory_space<vmem>>, vector<1x32xf32>
    %cst_56 = arith.constant dense<0.000000e+00> : vector<8xf32>
    %141 = vector.multi_reduction <add>, %138, %cst_56 [1] : vector<8x32xf32> to vector<8xf32>
    %142 = vector.shape_cast %141 : vector<8xf32> to vector<8x1xf32>
    %cst_57 = arith.constant 3.200000e+01 : f32
    %143 = vector.broadcast %cst_57 : f32 to vector<8x1xf32>
    %144 = arith.divf %142, %143 : vector<8x1xf32>
    %145 = vector.broadcast %144 : vector<8x1xf32> to vector<8x32xf32>
    %146 = arith.subf %138, %145 : vector<8x32xf32>
    %147 = arith.mulf %146, %146 : vector<8x32xf32>
    %cst_58 = arith.constant dense<0.000000e+00> : vector<8xf32>
    %148 = vector.multi_reduction <add>, %147, %cst_58 [1] : vector<8x32xf32> to vector<8xf32>
    %149 = vector.shape_cast %148 : vector<8xf32> to vector<8x1xf32>
    %cst_59 = arith.constant 3.200000e+01 : f32
    %150 = vector.broadcast %cst_59 : f32 to vector<8x1xf32>
    %151 = arith.divf %149, %150 : vector<8x1xf32>
    %cst_60 = arith.constant 9.99999974E-6 : f32
    %152 = vector.broadcast %cst_60 : f32 to vector<8x1xf32>
    %153 = arith.addf %151, %152 : vector<8x1xf32>
    %154 = math.rsqrt %153 : vector<8x1xf32>
    %155 = vector.broadcast %154 : vector<8x1xf32> to vector<8x32xf32>
    %156 = arith.mulf %146, %155 : vector<8x32xf32>
    %157 = vector.broadcast %139 : vector<1x32xf32> to vector<8x32xf32>
    %158 = arith.mulf %156, %157 : vector<8x32xf32>
    %159 = vector.broadcast %140 : vector<1x32xf32> to vector<8x32xf32>
    %160 = arith.addf %158, %159 : vector<8x32xf32>
    %c0_61 = arith.constant 0 : index
    %c0_62 = arith.constant 0 : index
    %161 = vector.load %arg9[%c0_61, %c0_62] : memref<32x64xbf16, #tpu.memory_space<vmem>>, vector<32x64xbf16>
    %162 = arith.truncf %160 : vector<8x32xf32> to vector<8x32xbf16>
    %cst_63 = arith.constant dense<0.000000e+00> : vector<8x64xf32>
    %163 = tpu.matmul %162, %161, %cst_63 {dimension_numbers = #tpu.dot_dimension_numbers<[1], [0], [0], [1], [0, 0, 1, 1], [], []>} : vector<8x32xbf16>, vector<32x64xbf16>, vector<8x64xf32> -> vector<8x64xf32>
    %c0_64 = arith.constant 0 : index
    %c0_65 = arith.constant 0 : index
    %164 = vector.load %arg10[%c0_64, %c0_65] : memref<1x64xf32, #tpu.memory_space<vmem>>, vector<1x64xf32>
    %165 = vector.broadcast %164 : vector<1x64xf32> to vector<8x64xf32>
    %166 = arith.addf %163, %165 : vector<8x64xf32>
    %cst_66 = arith.constant 0.000000e+00 : f32
    %167 = vector.broadcast %cst_66 : f32 to vector<8x64xf32>
    %168 = arith.maximumf %166, %167 : vector<8x64xf32>
    %c0_67 = arith.constant 0 : index
    %c0_68 = arith.constant 0 : index
    %169 = vector.load %arg11[%c0_67, %c0_68] : memref<64x32xbf16, #tpu.memory_space<vmem>>, vector<64x32xbf16>
    %170 = arith.truncf %168 : vector<8x64xf32> to vector<8x64xbf16>
    %cst_69 = arith.constant dense<0.000000e+00> : vector<8x32xf32>
    %171 = tpu.matmul %170, %169, %cst_69 {dimension_numbers = #tpu.dot_dimension_numbers<[1], [0], [0], [1], [0, 0, 1, 1], [], []>} : vector<8x64xbf16>, vector<64x32xbf16>, vector<8x32xf32> -> vector<8x32xf32>
    %c0_70 = arith.constant 0 : index
    %c0_71 = arith.constant 0 : index
    %172 = vector.load %arg12[%c0_70, %c0_71] : memref<1x32xf32, #tpu.memory_space<vmem>>, vector<1x32xf32>
    %173 = vector.broadcast %172 : vector<1x32xf32> to vector<8x32xf32>
    %174 = arith.addf %171, %173 : vector<8x32xf32>
    %175 = arith.addf %160, %174 : vector<8x32xf32>
    %c0_72 = arith.constant 0 : index
    %c0_73 = arith.constant 0 : index
    %176 = vector.load %arg13[%c0_72, %c0_73] : memref<1x32xf32, #tpu.memory_space<vmem>>, vector<1x32xf32>
    %c0_74 = arith.constant 0 : index
    %c0_75 = arith.constant 0 : index
    %177 = vector.load %arg14[%c0_74, %c0_75] : memref<1x32xf32, #tpu.memory_space<vmem>>, vector<1x32xf32>
    %cst_76 = arith.constant dense<0.000000e+00> : vector<8xf32>
    %178 = vector.multi_reduction <add>, %175, %cst_76 [1] : vector<8x32xf32> to vector<8xf32>
    %179 = vector.shape_cast %178 : vector<8xf32> to vector<8x1xf32>
    %cst_77 = arith.constant 3.200000e+01 : f32
    %180 = vector.broadcast %cst_77 : f32 to vector<8x1xf32>
    %181 = arith.divf %179, %180 : vector<8x1xf32>
    %182 = vector.broadcast %181 : vector<8x1xf32> to vector<8x32xf32>
    %183 = arith.subf %175, %182 : vector<8x32xf32>
    %184 = arith.mulf %183, %183 : vector<8x32xf32>
    %cst_78 = arith.constant dense<0.000000e+00> : vector<8xf32>
    %185 = vector.multi_reduction <add>, %184, %cst_78 [1] : vector<8x32xf32> to vector<8xf32>
    %186 = vector.shape_cast %185 : vector<8xf32> to vector<8x1xf32>
    %cst_79 = arith.constant 3.200000e+01 : f32
    %187 = vector.broadcast %cst_79 : f32 to vector<8x1xf32>
    %188 = arith.divf %186, %187 : vector<8x1xf32>
    %cst_80 = arith.constant 9.99999974E-6 : f32
    %189 = vector.broadcast %cst_80 : f32 to vector<8x1xf32>
    %190 = arith.addf %188, %189 : vector<8x1xf32>
    %191 = math.rsqrt %190 : vector<8x1xf32>
    %192 = vector.broadcast %191 : vector<8x1xf32> to vector<8x32xf32>
    %193 = arith.mulf %183, %192 : vector<8x32xf32>
    %194 = vector.broadcast %176 : vector<1x32xf32> to vector<8x32xf32>
    %195 = arith.mulf %193, %194 : vector<8x32xf32>
    %196 = vector.broadcast %177 : vector<1x32xf32> to vector<8x32xf32>
    %197 = arith.addf %195, %196 : vector<8x32xf32>
    %198 = vector.shape_cast %197 : vector<8x32xf32> to vector<1x8x32xf32>
    %c0_81 = arith.constant 0 : index
    %c0_82 = arith.constant 0 : index
    %c0_83 = arith.constant 0 : index
    %199 = vector.load %arg15[%c0_81, %c0_82, %c0_83] : memref<1x8x32xf32, #tpu.memory_space<vmem>>, vector<1x8x32xf32>
    tpu.vector_store %arg15[%c0_81, %c0_82, %c0_83], %198 {strides = array<i32>} : memref<1x8x32xf32, #tpu.memory_space<vmem>>, vector<1x8x32xf32>,
    return
  }
  func.func @transform_0(%arg0: i32, %arg1: memref<8xi32, #tpu.memory_space<smem>>) -> (i32, i32, i32) {
    %c0_i32 = arith.constant 0 : i32
    %c0_i32_0 = arith.constant 0 : i32
    %c0_i32_1 = arith.constant 0 : i32
    return %arg0, %c0_i32, %c0_i32_0 : i32, i32, i32
  }
  func.func @transform_1(%arg0: i32, %arg1: memref<8xi32, #tpu.memory_space<smem>>) -> (i32, i32) {
    %c0_i32 = arith.constant 0 : i32
    %c0_i32_0 = arith.constant 0 : i32
    %c0_i32_1 = arith.constant 0 : i32
    return %c0_i32, %c0_i32_0 : i32, i32
  }
  func.func @transform_2(%arg0: i32, %arg1: memref<8xi32, #tpu.memory_space<smem>>) -> (i32, i32) {
    %c0_i32 = arith.constant 0 : i32
    %c0_i32_0 = arith.constant 0 : i32
    %c0_i32_1 = arith.constant 0 : i32
    return %c0_i32, %c0_i32_0 : i32, i32
  }
  func.func @transform_3(%arg0: i32, %arg1: memref<8xi32, #tpu.memory_space<smem>>) -> (i32, i32) {
    %c0_i32 = arith.constant 0 : i32
    %c0_i32_0 = arith.constant 0 : i32
    %c0_i32_1 = arith.constant 0 : i32
    return %c0_i32, %c0_i32_0 : i32, i32
  }
  func.func @transform_4(%arg0: i32, %arg1: memref<8xi32, #tpu.memory_space<smem>>) -> (i32, i32) {
    %c0_i32 = arith.constant 0 : i32
    %c0_i32_0 = arith.constant 0 : i32
    %c0_i32_1 = arith.constant 0 : i32
    return %c0_i32, %c0_i32_0 : i32, i32
  }
  func.func @transform_5(%arg0: i32, %arg1: memref<8xi32, #tpu.memory_space<smem>>) -> (i32, i32) {
    %c0_i32 = arith.constant 0 : i32
    %c0_i32_0 = arith.constant 0 : i32
    %c0_i32_1 = arith.constant 0 : i32
    return %c0_i32, %c0_i32_0 : i32, i32
  }
  func.func @transform_6(%arg0: i32, %arg1: memref<8xi32, #tpu.memory_space<smem>>) -> (i32, i32) {
    %c0_i32 = arith.constant 0 : i32
    %c0_i32_0 = arith.constant 0 : i32
    %c0_i32_1 = arith.constant 0 : i32
    return %c0_i32, %c0_i32_0 : i32, i32
  }
  func.func @transform_7(%arg0: i32, %arg1: memref<8xi32, #tpu.memory_space<smem>>) -> (i32, i32) {
    %c0_i32 = arith.constant 0 : i32
    %c0_i32_0 = arith.constant 0 : i32
    %c0_i32_1 = arith.constant 0 : i32
    return %c0_i32, %c0_i32_0 : i32, i32
  }
  func.func @transform_8(%arg0: i32, %arg1: memref<8xi32, #tpu.memory_space<smem>>) -> (i32, i32) {
    %c0_i32 = arith.constant 0 : i32
    %c0_i32_0 = arith.constant 0 : i32
    %c0_i32_1 = arith.constant 0 : i32
    return %c0_i32, %c0_i32_0 : i32, i32
  }
  func.func @transform_9(%arg0: i32, %arg1: memref<8xi32, #tpu.memory_space<smem>>) -> (i32, i32) {
    %c0_i32 = arith.constant 0 : i32
    %c0_i32_0 = arith.constant 0 : i32
    %c0_i32_1 = arith.constant 0 : i32
    return %c0_i32, %c0_i32_0 : i32, i32
  }
  func.func @transform_10(%arg0: i32, %arg1: memref<8xi32, #tpu.memory_space<smem>>) -> (i32, i32) {
    %c0_i32 = arith.constant 0 : i32
    %c0_i32_0 = arith.constant 0 : i32
    %c0_i32_1 = arith.constant 0 : i32
    return %c0_i32, %c0_i32_0 : i32, i32
  }
  func.func @transform_11(%arg0: i32, %arg1: memref<8xi32, #tpu.memory_space<smem>>) -> (i32, i32) {
    %c0_i32 = arith.constant 0 : i32
    %c0_i32_0 = arith.constant 0 : i32
    %c0_i32_1 = arith.constant 0 : i32
    return %c0_i32, %c0_i32_0 : i32, i32
  }
  func.func @transform_12(%arg0: i32, %arg1: memref<8xi32, #tpu.memory_space<smem>>) -> (i32, i32) {
    %c0_i32 = arith.constant 0 : i32
    %c0_i32_0 = arith.constant 0 : i32
    %c0_i32_1 = arith.constant 0 : i32
    return %c0_i32, %c0_i32_0 : i32, i32
  }
  func.func @transform_13(%arg0: i32, %arg1: memref<8xi32, #tpu.memory_space<smem>>) -> (i32, i32, i32) {
    %c0_i32 = arith.constant 0 : i32
    %c0_i32_0 = arith.constant 0 : i32
    %c0_i32_1 = arith.constant 0 : i32
    return %arg0, %c0_i32, %c0_i32_0 : i32, i32, i32
  }
}

</mosaic_0001>

<llo_original>
// kernel: tpu_custom_call.1
$region0: #{tpu_custom_call.1}
  #allocation0 [shape = 'u32[]', space=smem, size = 0x4, offset = 0x4, fixed_abs, tag = 'smem constant byte address 0x4 - core index']
  #allocation1 [shape = 'u32[72,128]{1,0:T(1,128)}', space=vmem, size = 0x9000, scoped, tag = 'internal scratch']
  #allocation2 [shape = 'f32[8,32]{1,0:T(8,128)}', space=vmem, size = 0x1000, scoped, tag = 'scratch operand']
  #allocation3 [shape = 's32[1]{0}', space=sflag, size = 0x4, scoped, tag = 'scoped memory for tpu_custom_call.1']
  #allocation4 [shape = 'u8[512]{0}', space=smem, size = 0x200, scoped, tag = 'prefetched SMEM operand 0']
  %s0 = inlined_call_operand.hbm [shape: s32[8], index: 0, kind: input, shape index: {}]
  %s1 = inlined_call_operand.vmem [shape: f32[2,8,32], index: 1, kind: input, shape index: {}]
  %s2 = inlined_call_operand.vmem [shape: bf16[32,32], index: 2, kind: input, shape index: {}]
  %s3 = inlined_call_operand.vmem [shape: bf16[32,32], index: 3, kind: input, shape index: {}]
  %s4 = inlined_call_operand.hbm [shape: bf16[32,32], index: 4, kind: input, shape index: {}]
  %s5 = inlined_call_operand.hbm [shape: bf16[32,32], index: 5, kind: input, shape index: {}]
  %s6 = inlined_call_operand.vmem [shape: f32[1,32], index: 6, kind: input, shape index: {}]
  %s7 = inlined_call_operand.vmem [shape: f32[1,32], index: 7, kind: input, shape index: {}]
  %s8 = inlined_call_operand.hbm [shape: bf16[32,64], index: 8, kind: input, shape index: {}]
  %s9 = inlined_call_operand.vmem [shape: f32[1,64], index: 9, kind: input, shape index: {}]
  %s10 = inlined_call_operand.vmem [shape: bf16[64,32], index: 10, kind: input, shape index: {}]
  %s11 = inlined_call_operand.vmem [shape: f32[1,32], index: 11, kind: input, shape index: {}]
  %s12 = inlined_call_operand.vmem [shape: f32[1,32], index: 12, kind: input, shape index: {}]
  %s13 = inlined_call_operand.vmem [shape: f32[1,32], index: 13, kind: input, shape index: {}]
  %s14 = inlined_call_operand.hbm [shape: f32[2,8,32], index: 14, kind: output, shape index: {}]
  %s15 = sld [smem:[#allocation0]]
  $region97: #{tpu_custom_call.1} parent=0
    _
  %s17 = ssub.s32 1, %s15
  %s18 = scalar_select 0, %s17, %s15
  %s20 = sshll.u32 %s0, 4
  %s21 = int_to_ptr.hbm [resolvable:$true] %s20
  %23 = dma.hbm_to_smem %s21, 16, [#allocation4], [#allocation3]
  %25 = dma.done [#allocation3], 16
  %26 = sfence
  $region1: #{tpu_custom_call.1} parent=0
    #allocation5 [shape = 'u8[8192]{0}', space=vmem, size = 0x2000, scoped, tag = 'input window, operand 4, single buffered']
    #allocation6 [shape = 's32[2]{0}', space=sflag, size = 0x8, scoped, tag = 'scoped memory for tpu_custom_call.1']
    #allocation7 [shape = 's32[2]{0}', space=sflag, size = 0x8, scoped, tag = 'scoped memory for tpu_custom_call.1']
    #allocation8 [shape = 'u8[8192]{0}', space=vmem, size = 0x2000, scoped, tag = 'input window, operand 5, single buffered']
    #allocation9 [shape = 's32[1]{0}', space=sflag, size = 0x4, scoped, tag = 'scoped memory for tpu_custom_call.1']
    #allocation10 [shape = 'u8[8192]{0}', space=vmem, size = 0x2000, scoped, tag = 'input window, operand 8, single buffered']
    #allocation11 [shape = 'u8[8192]{0}', space=vmem, size = 0x2000, scoped, tag = 'output window, operand 0']
    %27 = vsyncpa [#allocation6], 0
    %28 = vsyncpa [#allocation9], 0
    %29 = vsyncpa [#allocation7], 0
    %s30 = scalar_lea.sflag [#allocation7], 1
    %31 = vsyncpa %s30, 0
    loop: start=0, step=1, limit=4
    $region2: #{tpu_custom_call.1} parent=1 // loop_pre_header
      _
    $region3: #{tpu_custom_call.1} parent=1 // loop_header
      %s33 = sphi 0, %s37
      %p34 = scmp.ge.s32.totalorder %s33, 4
      %s43 = sphi 0, %s45
      %s46 = sphi 0, %s43
      %s47 = sphi 0, %s46
      %s63 = sphi 0, %s47
      %s67 = sphi 0, %s67
      %s69 = sphi 0, %s67
      %s70 = sphi 0, %s69
      %s84 = sphi 0, %s70
      %s88 = sphi 0, %s88
      %s90 = sphi 0, %s88
      %s91 = sphi 0, %s90
      %s105 = sphi 0, %s91
      %s109 = sphi 0, %s109
      %s111 = sphi 0, %s109
      %s112 = sphi 0, %s111
      %s126 = sphi 0, %s112
      %s130 = sphi 0, %s130
      %s132 = sphi 0, %s130
      %s133 = sphi 0, %s132
      %s147 = sphi 0, %s133
      %s151 = sphi 0, %s151
      %s153 = sphi 0, %s151
      %s154 = sphi 0, %s153
      %s168 = sphi 0, %s154
      %s172 = sphi 0, %s172
      %s174 = sphi 0, %s172
      %s175 = sphi 0, %s174
      %s189 = sphi 0, %s175
      %s193 = sphi 0, %s193
      %s195 = sphi 0, %s193
      %s196 = sphi 0, %s195
      %s210 = sphi 0, %s196
      %s214 = sphi 0, %s214
      %s216 = sphi 0, %s214
      %s217 = sphi 0, %s216
      %s231 = sphi 0, %s217
      %s235 = sphi 0, %s235
      %s237 = sphi 0, %s235
      %s238 = sphi 0, %s237
      %s252 = sphi 0, %s238
      %s256 = sphi 0, %s256
      %s258 = sphi 0, %s256
      %s259 = sphi 0, %s258
      %s273 = sphi 0, %s259
      %s277 = sphi 0, %s277
      %s279 = sphi 0, %s277
      %s280 = sphi 0, %s279
      %s294 = sphi 0, %s280
      %s298 = sphi 0, %s298
      %s300 = sphi 0, %s298
      %s301 = sphi 0, %s300
      %s315 = sphi 0, %s301
      %s321 = sphi 0, %s323
      %s324 = sphi 0, %s321
      %s325 = sphi 0, %s324
      %s341 = sphi 0, %s325
    $region4: #{tpu_custom_call.1} parent=1 // loop_header_branch
      %36 = sbr.rel (%p34) target = $region8
    $region5: #{tpu_custom_call.1} parent=1 // loop_body
      %s38 = ssub.s32 %s33, 1
      %s39 = ssub.s32 %s33, 2
      %s40 = sadd.s32 %s33, 1
      %s41 = ssub.s32 %s33, %s40
      %p42 = scmp.eq.s32.totalorder %s41, 0
      %s44 = sadd.s32 %s43, 1
      %s45 = scalar_select %p42, %s43, %s44
      %p48 = pneg %p42
      %p49 = scmp.eq.s32.totalorder %s33, 1
      %p50 = por %p48, %p49
      %p51 = scmp.ne.s32.totalorder %s43, %s46
      %p52 = scmp.eq.s32.totalorder %s33, 0
      %p53 = por %p51, %p52
      %p54 = scmp.ne.s32.totalorder %s43, %s46
      %p55 = scmp.eq.s32.totalorder %s38, 1
      %p56 = por %p54, %p55
      %p57 = scmp.ne.s32.totalorder %s46, %s47
      %p58 = scmp.eq.s32.totalorder %s38, 0
      %p59 = por %p57, %p58
      %p60 = scmp.ne.s32.totalorder %s46, %s47
      %p61 = scmp.eq.s32.totalorder %s39, 1
      %p62 = por %p60, %p61
      %p64 = scmp.ne.s32.totalorder %s47, %s63
      %p65 = scmp.eq.s32.totalorder %s39, 0
      %p66 = por %p64, %p65
      %s68 = sadd.s32 %s67, 1
      %p71 = scmp.eq.s32.totalorder %s33, 1
      %p72 = scmp.ne.s32.totalorder %s67, %s69
      %p73 = scmp.eq.s32.totalorder %s33, 0
      %p74 = por %p72, %p73
      %p75 = scmp.ne.s32.totalorder %s67, %s69
      %p76 = scmp.eq.s32.totalorder %s38, 1
      %p77 = por %p75, %p76
      %p78 = scmp.ne.s32.totalorder %s69, %s70
      %p79 = scmp.eq.s32.totalorder %s38, 0
      %p80 = por %p78, %p79
      %p81 = scmp.ne.s32.totalorder %s69, %s70
      %p82 = scmp.eq.s32.totalorder %s39, 1
      %p83 = por %p81, %p82
      %p85 = scmp.ne.s32.totalorder %s70, %s84
      %p86 = scmp.eq.s32.totalorder %s39, 0
      %p87 = por %p85, %p86
      %s89 = sadd.s32 %s88, 1
      %p92 = scmp.eq.s32.totalorder %s33, 1
      %p93 = scmp.ne.s32.totalorder %s88, %s90
      %p94 = scmp.eq.s32.totalorder %s33, 0
      %p95 = por %p93, %p94
      %p96 = scmp.ne.s32.totalorder %s88, %s90
      %p97 = scmp.eq.s32.totalorder %s38, 1
      %p98 = por %p96, %p97
      %p99 = scmp.ne.s32.totalorder %s90, %s91
      %p100 = scmp.eq.s32.totalorder %s38, 0
      %p101 = por %p99, %p100
      %p102 = scmp.ne.s32.totalorder %s90, %s91
      %p103 = scmp.eq.s32.totalorder %s39, 1
      %p104 = por %p102, %p103
      %p106 = scmp.ne.s32.totalorder %s91, %s105
      %p107 = scmp.eq.s32.totalorder %s39, 0
      %p108 = por %p106, %p107
      %s110 = sadd.s32 %s109, 1
      %p113 = scmp.eq.s32.totalorder %s33, 1
      %p114 = scmp.ne.s32.totalorder %s109, %s111
      %p115 = scmp.eq.s32.totalorder %s33, 0
      %p116 = por %p114, %p115
      %p117 = scmp.ne.s32.totalorder %s109, %s111
      %p118 = scmp.eq.s32.totalorder %s38, 1
      %p119 = por %p117, %p118
      %p120 = scmp.ne.s32.totalorder %s111, %s112
      %p121 = scmp.eq.s32.totalorder %s38, 0
      %p122 = por %p120, %p121
      %p123 = scmp.ne.s32.totalorder %s111, %s112
      %p124 = scmp.eq.s32.totalorder %s39, 1
      %p125 = por %p123, %p124
      %p127 = scmp.ne.s32.totalorder %s112, %s126
      %p128 = scmp.eq.s32.totalorder %s39, 0
      %p129 = por %p127, %p128
      %s131 = sadd.s32 %s130, 1
      %p134 = scmp.eq.s32.totalorder %s33, 1
      %p135 = scmp.ne.s32.totalorder %s130, %s132
      %p136 = scmp.eq.s32.totalorder %s33, 0
      %p137 = por %p135, %p136
      %p138 = scmp.ne.s32.totalorder %s130, %s132
      %p139 = scmp.eq.s32.totalorder %s38, 1
      %p140 = por %p138, %p139
      %p141 = scmp.ne.s32.totalorder %s132, %s133
      %p142 = scmp.eq.s32.totalorder %s38, 0
      %p143 = por %p141, %p142
      %p144 = scmp.ne.s32.totalorder %s132, %s133
      %p145 = scmp.eq.s32.totalorder %s39, 1
      %p146 = por %p144, %p145
      %p148 = scmp.ne.s32.totalorder %s133, %s147
      %p149 = scmp.eq.s32.totalorder %s39, 0
      %p150 = por %p148, %p149
      %s152 = sadd.s32 %s151, 1
      %p155 = scmp.eq.s32.totalorder %s33, 1
      %p156 = scmp.ne.s32.totalorder %s151, %s153
      %p157 = scmp.eq.s32.totalorder %s33, 0
      %p158 = por %p156, %p157
      %p159 = scmp.ne.s32.totalorder %s151, %s153
      %p160 = scmp.eq.s32.totalorder %s38, 1
      %p161 = por %p159, %p160
      %p162 = scmp.ne.s32.totalorder %s153, %s154
      %p163 = scmp.eq.s32.totalorder %s38, 0
      %p164 = por %p162, %p163
      %p165 = scmp.ne.s32.totalorder %s153, %s154
      %p166 = scmp.eq.s32.totalorder %s39, 1
      %p167 = por %p165, %p166
      %p169 = scmp.ne.s32.totalorder %s154, %s168
      %p170 = scmp.eq.s32.totalorder %s39, 0
      %p171 = por %p169, %p170
      %s173 = sadd.s32 %s172, 1
      %p176 = scmp.eq.s32.totalorder %s33, 1
      %p177 = scmp.ne.s32.totalorder %s172, %s174
      %p178 = scmp.eq.s32.totalorder %s33, 0
      %p179 = por %p177, %p178
      %p180 = scmp.ne.s32.totalorder %s172, %s174
      %p181 = scmp.eq.s32.totalorder %s38, 1
      %p182 = por %p180, %p181
      %p183 = scmp.ne.s32.totalorder %s174, %s175
      %p184 = scmp.eq.s32.totalorder %s38, 0
      %p185 = por %p183, %p184
      %p186 = scmp.ne.s32.totalorder %s174, %s175
      %p187 = scmp.eq.s32.totalorder %s39, 1
      %p188 = por %p186, %p187
      %p190 = scmp.ne.s32.totalorder %s175, %s189
      %p191 = scmp.eq.s32.totalorder %s39, 0
      %p192 = por %p190, %p191
      %s194 = sadd.s32 %s193, 1
      %p197 = scmp.eq.s32.totalorder %s33, 1
      %p198 = scmp.ne.s32.totalorder %s193, %s195
      %p199 = scmp.eq.s32.totalorder %s33, 0
      %p200 = por %p198, %p199
      %p201 = scmp.ne.s32.totalorder %s193, %s195
      %p202 = scmp.eq.s32.totalorder %s38, 1
      %p203 = por %p201, %p202
      %p204 = scmp.ne.s32.totalorder %s195, %s196
      %p205 = scmp.eq.s32.totalorder %s38, 0
      %p206 = por %p204, %p205
      %p207 = scmp.ne.s32.totalorder %s195, %s196
      %p208 = scmp.eq.s32.totalorder %s39, 1
      %p209 = por %p207, %p208
      %p211 = scmp.ne.s32.totalorder %s196, %s210
      %p212 = scmp.eq.s32.totalorder %s39, 0
      %p213 = por %p211, %p212
      %s215 = sadd.s32 %s214, 1
      %p218 = scmp.eq.s32.totalorder %s33, 1
      %p219 = scmp.ne.s32.totalorder %s214, %s216
      %p220 = scmp.eq.s32.totalorder %s33, 0
      %p221 = por %p219, %p220
      %p222 = scmp.ne.s32.totalorder %s214, %s216
      %p223 = scmp.eq.s32.totalorder %s38, 1
      %p224 = por %p222, %p223
      %p225 = scmp.ne.s32.totalorder %s216, %s217
      %p226 = scmp.eq.s32.totalorder %s38, 0
      %p227 = por %p225, %p226
      %p228 = scmp.ne.s32.totalorder %s216, %s217
      %p229 = scmp.eq.s32.totalorder %s39, 1
      %p230 = por %p228, %p229
      %p232 = scmp.ne.s32.totalorder %s217, %s231
      %p233 = scmp.eq.s32.totalorder %s39, 0
      %p234 = por %p232, %p233
      %s236 = sadd.s32 %s235, 1
      %p239 = scmp.eq.s32.totalorder %s33, 1
      %p240 = scmp.ne.s32.totalorder %s235, %s237
      %p241 = scmp.eq.s32.totalorder %s33, 0
      %p242 = por %p240, %p241
      %p243 = scmp.ne.s32.totalorder %s235, %s237
      %p244 = scmp.eq.s32.totalorder %s38, 1
      %p245 = por %p243, %p244
      %p246 = scmp.ne.s32.totalorder %s237, %s238
      %p247 = scmp.eq.s32.totalorder %s38, 0
      %p248 = por %p246, %p247
      %p249 = scmp.ne.s32.totalorder %s237, %s238
      %p250 = scmp.eq.s32.totalorder %s39, 1
      %p251 = por %p249, %p250
      %p253 = scmp.ne.s32.totalorder %s238, %s252
      %p254 = scmp.eq.s32.totalorder %s39, 0
      %p255 = por %p253, %p254
      %s257 = sadd.s32 %s256, 1
      %p260 = scmp.eq.s32.totalorder %s33, 1
      %p261 = scmp.ne.s32.totalorder %s256, %s258
      %p262 = scmp.eq.s32.totalorder %s33, 0
      %p263 = por %p261, %p262
      %p264 = scmp.ne.s32.totalorder %s256, %s258
      %p265 = scmp.eq.s32.totalorder %s38, 1
      %p266 = por %p264, %p265
      %p267 = scmp.ne.s32.totalorder %s258, %s259
      %p268 = scmp.eq.s32.totalorder %s38, 0
      %p269 = por %p267, %p268
      %p270 = scmp.ne.s32.totalorder %s258, %s259
      %p271 = scmp.eq.s32.totalorder %s39, 1
      %p272 = por %p270, %p271
      %p274 = scmp.ne.s32.totalorder %s259, %s273
      %p275 = scmp.eq.s32.totalorder %s39, 0
      %p276 = por %p274, %p275
      %s278 = sadd.s32 %s277, 1
      %p281 = scmp.eq.s32.totalorder %s33, 1
      %p282 = scmp.ne.s32.totalorder %s277, %s279
      %p283 = scmp.eq.s32.totalorder %s33, 0
      %p284 = por %p282, %p283
      %p285 = scmp.ne.s32.totalorder %s277, %s279
      %p286 = scmp.eq.s32.totalorder %s38, 1
      %p287 = por %p285, %p286
      %p288 = scmp.ne.s32.totalorder %s279, %s280
      %p289 = scmp.eq.s32.totalorder %s38, 0
      %p290 = por %p288, %p289
      %p291 = scmp.ne.s32.totalorder %s279, %s280
      %p292 = scmp.eq.s32.totalorder %s39, 1
      %p293 = por %p291, %p292
      %p295 = scmp.ne.s32.totalorder %s280, %s294
      %p296 = scmp.eq.s32.totalorder %s39, 0
      %p297 = por %p295, %p296
      %s299 = sadd.s32 %s298, 1
      %p302 = scmp.eq.s32.totalorder %s33, 1
      %p303 = scmp.ne.s32.totalorder %s298, %s300
      %p304 = scmp.eq.s32.totalorder %s33, 0
      %p305 = por %p303, %p304
      %p306 = scmp.ne.s32.totalorder %s298, %s300
      %p307 = scmp.eq.s32.totalorder %s38, 1
      %p308 = por %p306, %p307
      %p309 = scmp.ne.s32.totalorder %s300, %s301
      %p310 = scmp.eq.s32.totalorder %s38, 0
      %p311 = por %p309, %p310
      %p312 = scmp.ne.s32.totalorder %s300, %s301
      %p313 = scmp.eq.s32.totalorder %s39, 1
      %p314 = por %p312, %p313
      %p316 = scmp.ne.s32.totalorder %s301, %s315
      %p317 = scmp.eq.s32.totalorder %s39, 0
      %p318 = por %p316, %p317
      %s319 = ssub.s32 %s33, %s40
      %p320 = scmp.eq.s32.totalorder %s319, 0
      %s322 = sadd.s32 %s321, 1
      %s323 = scalar_select %p320, %s321, %s322
      %p326 = pneg %p320
      %p327 = scmp.eq.s32.totalorder %s33, 1
      %p328 = por %p326, %p327
      %p329 = scmp.ne.s32.totalorder %s321, %s324
      %p330 = scmp.eq.s32.totalorder %s33, 0
      %p331 = por %p329, %p330
      %p332 = scmp.ne.s32.totalorder %s321, %s324
      %p333 = scmp.eq.s32.totalorder %s38, 1
      %p334 = por %p332, %p333
      %p335 = scmp.ne.s32.totalorder %s324, %s325
      %p336 = scmp.eq.s32.totalorder %s38, 0
      %p337 = por %p335, %p336
      %p338 = scmp.ne.s32.totalorder %s324, %s325
      %p339 = scmp.eq.s32.totalorder %s39, 1
      %p340 = por %p338, %p339
      %p342 = scmp.ne.s32.totalorder %s325, %s341
      %p343 = scmp.eq.s32.totalorder %s39, 0
      %p344 = por %p342, %p343
      %p345 = scmp.le.s32.totalorder 1, %s33
      %p346 = scmp.lt.s32.totalorder %s33, 3
      %p347 = pnand %p345, %p346
      %p348 = pneg %p347
      // Predicated region
      $region9: #{tpu_custom_call.1} parent=5 // pred_check
        _
      $region10: #{tpu_custom_call.1} parent=5 // pred_check_branch
        %350 = sbr.rel (%p347) target = $region12
      $region11: #{tpu_custom_call.1} parent=5 // pred_region
        %s351 = ssub.s32 %s33, 1
        // Predicated region
        $region13: #{tpu_custom_call.1} parent=11 // pred_check
          %p352 = pneg %p80
        $region14: #{tpu_custom_call.1} parent=11 // pred_check_branch
          %354 = sbr.rel (%p352) target = $region16
        $region15: #{tpu_custom_call.1} parent=11 // pred_region
          _
        $region16: #{tpu_custom_call.1} parent=11 // pred_fallthru
          _
        // Predicated region
        $region17: #{tpu_custom_call.1} parent=11 // pred_check
          %p355 = pneg %p101
        $region18: #{tpu_custom_call.1} parent=11 // pred_check_branch
          %357 = sbr.rel (%p355) target = $region20
        $region19: #{tpu_custom_call.1} parent=11 // pred_region
          _
        $region20: #{tpu_custom_call.1} parent=11 // pred_fallthru
          _
        // Predicated region
        $region21: #{tpu_custom_call.1} parent=11 // pred_check
          %p358 = pneg %p122
        $region22: #{tpu_custom_call.1} parent=11 // pred_check_branch
          %360 = sbr.rel (%p358) target = $region24
        $region23: #{tpu_custom_call.1} parent=11 // pred_region
          %362 = vsyncadd [#allocation6], 0
          %s363 = sshll.u32 %s4, 4
          %s364 = int_to_ptr.hbm [resolvable:$true] %s363
          %s365 = sshll.u32 [#allocation5], 4
          %s366 = int_to_ptr.vmem [resolvable:$true] %s365
          %371 = dma.hbm_to_vmem [thread:$0]  %s364, 256, %s366, [#allocation6], 64, 64, 4
        $region24: #{tpu_custom_call.1} parent=11 // pred_fallthru
          _
        // Predicated region
        $region25: #{tpu_custom_call.1} parent=11 // pred_check
          %p372 = pneg %p143
        $region26: #{tpu_custom_call.1} parent=11 // pred_check_branch
          %374 = sbr.rel (%p372) target = $region28
        $region27: #{tpu_custom_call.1} parent=11 // pred_region
          %376 = vsyncadd [#allocation9], 0
          %s377 = sshll.u32 %s5, 4
          %s378 = int_to_ptr.hbm [resolvable:$true] %s377
          %s379 = sshll.u32 [#allocation8], 4
          %s380 = int_to_ptr.vmem [resolvable:$true] %s379
          %385 = dma.hbm_to_vmem [thread:$0]  %s378, 256, %s380, [#allocation9], 64, 64, 4
        $region28: #{tpu_custom_call.1} parent=11 // pred_fallthru
          _
        // Predicated region
        $region29: #{tpu_custom_call.1} parent=11 // pred_check
          %p386 = pneg %p164
        $region30: #{tpu_custom_call.1} parent=11 // pred_check_branch
          %388 = sbr.rel (%p386) target = $region32
        $region31: #{tpu_custom_call.1} parent=11 // pred_region
          _
        $region32: #{tpu_custom_call.1} parent=11 // pred_fallthru
          _
        // Predicated region
        $region33: #{tpu_custom_call.1} parent=11 // pred_check
          %p389 = pneg %p185
        $region34: #{tpu_custom_call.1} parent=11 // pred_check_branch
          %391 = sbr.rel (%p389) target = $region36
        $region35: #{tpu_custom_call.1} parent=11 // pred_region
          _
        $region36: #{tpu_custom_call.1} parent=11 // pred_fallthru
          _
        // Predicated region
        $region37: #{tpu_custom_call.1} parent=11 // pred_check
          %p392 = pneg %p206
        $region38: #{tpu_custom_call.1} parent=11 // pred_check_branch
          %394 = sbr.rel (%p392) target = $region40
        $region39: #{tpu_custom_call.1} parent=11 // pred_region
          %396 = vsyncadd [#allocation9], 0
          %s397 = sshll.u32 %s8, 4
          %s398 = int_to_ptr.hbm [resolvable:$true] %s397
          %s399 = sshll.u32 [#allocation10], 4
          %s400 = int_to_ptr.vmem [resolvable:$true] %s399
          %405 = dma.hbm_to_vmem [thread:$0]  %s398, 256, %s400, [#allocation9], 64, 64, 4
        $region40: #{tpu_custom_call.1} parent=11 // pred_fallthru
          _
        // Predicated region
        $region41: #{tpu_custom_call.1} parent=11 // pred_check
          %p406 = pneg %p227
        $region42: #{tpu_custom_call.1} parent=11 // pred_check_branch
          %408 = sbr.rel (%p406) target = $region44
        $region43: #{tpu_custom_call.1} parent=11 // pred_region
          _
        $region44: #{tpu_custom_call.1} parent=11 // pred_fallthru
          _
        // Predicated region
        $region45: #{tpu_custom_call.1} parent=11 // pred_check
          %p409 = pneg %p248
        $region46: #{tpu_custom_call.1} parent=11 // pred_check_branch
          %411 = sbr.rel (%p409) target = $region48
        $region47: #{tpu_custom_call.1} parent=11 // pred_region
          _
        $region48: #{tpu_custom_call.1} parent=11 // pred_fallthru
          _
        // Predicated region
        $region49: #{tpu_custom_call.1} parent=11 // pred_check
          %p412 = pneg %p269
        $region50: #{tpu_custom_call.1} parent=11 // pred_check_branch
          %414 = sbr.rel (%p412) target = $region52
        $region51: #{tpu_custom_call.1} parent=11 // pred_region
          _
        $region52: #{tpu_custom_call.1} parent=11 // pred_fallthru
          _
        // Predicated region
        $region53: #{tpu_custom_call.1} parent=11 // pred_check
          %p415 = pneg %p290
        $region54: #{tpu_custom_call.1} parent=11 // pred_check_branch
          %417 = sbr.rel (%p415) target = $region56
        $region55: #{tpu_custom_call.1} parent=11 // pred_region
          _
        $region56: #{tpu_custom_call.1} parent=11 // pred_fallthru
          _
        // Predicated region
        $region57: #{tpu_custom_call.1} parent=11 // pred_check
          %p418 = pneg %p311
        $region58: #{tpu_custom_call.1} parent=11 // pred_check_branch
          %420 = sbr.rel (%p418) target = $region60
        $region59: #{tpu_custom_call.1} parent=11 // pred_region
          _
        $region60: #{tpu_custom_call.1} parent=11 // pred_fallthru
          _
      $region12: #{tpu_custom_call.1} parent=5 // pred_fallthru
        _
      %p421 = scmp.lt.s32.totalorder %s33, 2
      // Predicated region
      $region61: #{tpu_custom_call.1} parent=5 // pred_check
        %p422 = pneg %p421
      $region62: #{tpu_custom_call.1} parent=5 // pred_check_branch
        %424 = sbr.rel (%p422) target = $region64
      $region63: #{tpu_custom_call.1} parent=5 // pred_region
        // Predicated region
        $region65: #{tpu_custom_call.1} parent=63 // pred_check
          %p425 = pneg %p53
        $region66: #{tpu_custom_call.1} parent=63 // pred_check_branch
          %427 = sbr.rel (%p425) target = $region68
        $region67: #{tpu_custom_call.1} parent=63 // pred_region
          %p428 = scmp.lt.s32.totalorder %s33, 1
          %s429 = scalar_select %p428, %s33, 1
          %s430 = smul.addr %s429, 8
          %s431 = scalar_lea.vmem %s1, %s430
        $region68: #{tpu_custom_call.1} parent=63 // pred_fallthru
          _
      $region64: #{tpu_custom_call.1} parent=5 // pred_fallthru
        _
      %p432 = scmp.le.s32.totalorder 1, %s33
      %p433 = scmp.lt.s32.totalorder %s33, 3
      %p434 = pnand %p432, %p433
      %p435 = pneg %p434
      // Predicated region
      $region69: #{tpu_custom_call.1} parent=5 // pred_check
        _
      $region70: #{tpu_custom_call.1} parent=5 // pred_check_branch
        %437 = sbr.rel (%p434) target = $region72
      $region71: #{tpu_custom_call.1} parent=5 // pred_region
        %s438 = ssub.s32 %s33, 1
        // Predicated region
        $region73: #{tpu_custom_call.1} parent=71 // pred_check
          %p439 = pneg %p122
        $region74: #{tpu_custom_call.1} parent=71 // pred_check_branch
          %441 = sbr.rel (%p439) target = $region76
        $region75: #{tpu_custom_call.1} parent=71 // pred_region
          %443 = dma.done [#allocation6], 256
        $region76: #{tpu_custom_call.1} parent=71 // pred_fallthru
          _
        // Predicated region
        $region77: #{tpu_custom_call.1} parent=71 // pred_check
          %p444 = pneg %p143
        $region78: #{tpu_custom_call.1} parent=71 // pred_check_branch
          %446 = sbr.rel (%p444) target = $region80
        $region79: #{tpu_custom_call.1} parent=71 // pred_region
          %448 = dma.done [#allocation9], 256
        $region80: #{tpu_custom_call.1} parent=71 // pred_fallthru
          _
        // Predicated region
        $region81: #{tpu_custom_call.1} parent=71 // pred_check
          %p449 = pneg %p206
        $region82: #{tpu_custom_call.1} parent=71 // pred_check_branch
          %451 = sbr.rel (%p449) target = $region84
        $region83: #{tpu_custom_call.1} parent=71 // pred_region
          %453 = dma.done [#allocation9], 256
        $region84: #{tpu_custom_call.1} parent=71 // pred_fallthru
          _
        %p454 = scmp.lt.s32.totalorder %s38, 1
        %s455 = scalar_select %p454, %s38, 1
        %s456 = smul.addr %s455, 8
        %s457 = scalar_lea.vmem %s1, %s456
        %p458 = pneg %p59
        %p459 = pneg %p56
        %p460 = pneg %p80
        %p461 = pneg %p77
        %p462 = pneg %p101
        %p463 = pneg %p98
        %p464 = pneg %p122
        %p465 = pneg %p119
        %p466 = pneg %p143
        %p467 = pneg %p140
        %p468 = pneg %p164
        %p469 = pneg %p161
        %p470 = pneg %p185
        %p471 = pneg %p182
        %p472 = pneg %p206
        %p473 = pneg %p203
        %p474 = pneg %p227
        %p475 = pneg %p224
        %p476 = pneg %p248
        %p477 = pneg %p245
        %p478 = pneg %p269
        %p479 = pneg %p266
        %p480 = pneg %p290
        %p481 = pneg %p287
        %p482 = pneg %p311
        %p483 = pneg %p308
        %p484 = pneg %p337
        %p485 = pneg %p334
        %s486 = sand.u32 %s324, 1
        %s487 = scalar_lea.sflag [#allocation7], %s486
        %s488 = sand.u32 %s324, 1
        %s489 = smul.addr %s488, 8
        %s490 = scalar_lea.vmem [#allocation11], %s489
        %p491 = scmp.lt.s32.totalorder %s38, 1
        %s492 = scalar_select %p491, %s38, 1
        %s493 = smul.addr %s492, 8
        %s494 = scalar_lea.vmem %s1, %s493
        %v496 = vld [vmem:[%s494] sm:$0xff]
        %v497 = vmul.f32 %v496, 0.35355338
        %v498 = vld [vmem:[%s2] sm:$0xf]
        %v499 = vld [vmem:[%s2 + $0x4] sm:$0xf]
        %v500 = vld [vmem:[%s2 + $0x8] sm:$0xf]
        %v501 = vld [vmem:[%s2 + $0xc] sm:$0xf]
        %v502 = vpack.c.bf16 %v497, %v497
        %v507 = vunpack.c.l.b16 %v498
        %v508 = vunpack.c.l.b16 %v499
        %v509 = vunpack.c.l.b16 %v500
        %v510 = vunpack.c.l.b16 %v501
        %v511 = vpack.c.b16 %v508, %v507
        %v512 = vpack.c.b16 %v510, %v509
        %vm515 = vcmask 261120
        %v517 = vsel %vm515, %v502, 0
        %519 = vmatpush.bf16.msra.mxu0 0
        %520 = vmatpush.bf16.msra.mxu0 0
        %521 = vmatpush.bf16.msra.mxu0 0
        %522 = vmatpush.bf16.msra.mxu0 0
        %523 = vmatpush.bf16.msra.mxu0 0
        %524 = vmatpush.bf16.msra.mxu0 0
        %525 = vmatpush.bf16.msra.mxu0 %v512
        %526 = vmatpush.bf16.msra.mxu0 %v511
        %527 = vmatmul.bf16.gmra.mxu0 %v517
        %v528 = vpop.f32.mrf.mxu0
        %v529 = vadd.f32 0.0, %v528
        %v530 = vpop.f32.mrf.mxu0
        %531 = vdwg.mxu0
        %v532 = vld [vmem:[%s3] sm:$0xf]
        %v533 = vld [vmem:[%s3 + $0x4] sm:$0xf]
        %v534 = vld [vmem:[%s3 + $0x8] sm:$0xf]
        %v535 = vld [vmem:[%s3 + $0xc] sm:$0xf]
        %v536 = vpack.c.bf16 %v496, %v496
        %v541 = vunpack.c.l.b16 %v532
        %v542 = vunpack.c.l.b16 %v533
        %v543 = vunpack.c.l.b16 %v534
        %v544 = vunpack.c.l.b16 %v535
        %v545 = vpack.c.b16 %v542, %v541
        %v546 = vpack.c.b16 %v544, %v543
        %v550 = vsel %vm515, %v536, 0
        %552 = vmatpush.bf16.msra.mxu0 0
        %553 = vmatpush.bf16.msra.mxu0 0
        %554 = vmatpush.bf16.msra.mxu0 0
        %555 = vmatpush.bf16.msra.mxu0 0
        %556 = vmatpush.bf16.msra.mxu0 0
        %557 = vmatpush.bf16.msra.mxu0 0
        %558 = vmatpush.bf16.msra.mxu0 %v546
        %559 = vmatpush.bf16.msra.mxu0 %v545
        %560 = vmatmul.bf16.gmra.mxu0 %v550
        %v561 = vpop.f32.mrf.mxu0
        %v562 = vadd.f32 0.0, %v561
        %v563 = vpop.f32.mrf.mxu0
        %564 = vdwg.mxu0
        %v565 = vld [vmem:[#allocation5] sm:$0xf]
        %v566 = vld [vmem:[#allocation5 + $0x4] sm:$0xf]
        %v567 = vld [vmem:[#allocation5 + $0x8] sm:$0xf]
        %v568 = vld [vmem:[#allocation5 + $0xc] sm:$0xf]
        %v573 = vunpack.c.l.b16 %v565
        %v574 = vunpack.c.l.b16 %v566
        %v575 = vunpack.c.l.b16 %v567
        %v576 = vunpack.c.l.b16 %v568
        %v577 = vpack.c.b16 %v574, %v573
        %v578 = vpack.c.b16 %v576, %v575
        %581 = vmatpush.bf16.msra.mxu0 0
        %582 = vmatpush.bf16.msra.mxu0 0
        %583 = vmatpush.bf16.msra.mxu0 0
        %584 = vmatpush.bf16.msra.mxu0 0
        %585 = vmatpush.bf16.msra.mxu0 0
        %586 = vmatpush.bf16.msra.mxu0 0
        %587 = vmatpush.bf16.msra.mxu0 %v578
        %588 = vmatpush.bf16.msra.mxu0 %v577
        %589 = vmatmul.bf16.gmra.mxu0 %v550
        %v590 = vpop.f32.mrf.mxu0
        %v591 = vadd.f32 0.0, %v590
        %v592 = vpop.f32.mrf.mxu0
        %593 = vdwg.mxu0
        %v594 = vlaneseq
        %v595 = vand.u32 %v594, 127
        %v596 = vpack.c.bf16 %v529, %v529
        %v597 = vpack.c.bf16 %v562, %v562
        %vm598 = vcmask 64512
        %v600 = vsel %vm598, %v596, 0
        %v603 = vsel %vm598, %v597, 0
        %605 = vmatpush.bf16.xpose.msra.mxu0 0
        %606 = vmatpush.bf16.xpose.msra.mxu0 0
        %607 = vmatpush.bf16.xpose.msra.mxu0 0
        %608 = vmatpush.bf16.xpose.msra.mxu0 0
        %609 = vmatpush.bf16.xpose.msra.mxu0 0
        %610 = vmatpush.bf16.xpose.msra.mxu0 0
        %611 = vmatpush.bf16.xpose.msra.mxu0 0
        %612 = vmatpush.bf16.xpose.msra.mxu0 %v603
        %613 = vmatmul.bf16.gmra.mxu0 %v600
        %v614 = vpop.f32.mrf.mxu0
        %v615 = vadd.f32 0.0, %v614
        %v616 = vpop.f32.mrf.mxu0
        %617 = vdwg.mxu0
        %s618 = smul.u32 %s38, 4
        %s619 = sld [smem:[#allocation4 + %s618]]
        %v620 = vstv %s619
        %vm621 = vcmp.lt.s32.totalorder %v595, %v620
        %v622 = vsel %vm621, %v615, -1000000.0
        %v623 = vsel %vm598, %v622, -inf
        %624 = vmax.xlane.f32.xlu0 %v623
        %v625 = vpop.xlane.xlu0 %624
        %v626 = vsub.f32 %v622, %v625
        %v627 = vmul.f32 %v626, 1.442695
        %v628 = vpow.pop %v627
        %v629 = vsel %vm598, %v628, 0.0
        %630 = vadd.xlane.f32.xlu0 %v629
        %v631 = vpop.xlane.xlu0 %630
        %v632 = vrcp.pop %v631
        %v633 = vmul.f32 %v628, %v632
        %v634 = vpack.c.bf16 %v633, %v633
        %v635 = vpack.c.bf16 %v591, %v591
        %v637 = vsel %vm598, %v634, 0
        %vm639 = vcmask 1043456
        %v641 = vsel %vm639, %v635, 0
        %643 = vmatpush.bf16.msra.mxu0 0
        %644 = vmatpush.bf16.msra.mxu0 0
        %645 = vmatpush.bf16.msra.mxu0 0
        %646 = vmatpush.bf16.msra.mxu0 0
        %647 = vmatpush.bf16.msra.mxu0 0
        %648 = vmatpush.bf16.msra.mxu0 0
        %649 = vmatpush.bf16.msra.mxu0 0
        %650 = vmatpush.bf16.msra.mxu0 %v641
        %651 = vmatmul.bf16.gmra.mxu0 %v637
        %v652 = vpop.f32.mrf.mxu0
        %v653 = vadd.f32 0.0, %v652
        %v654 = vpop.f32.mrf.mxu0
        %655 = vdwg.mxu0
        %656 = vst.msk [vmem:[#allocation2] sm:$0xff] %vm598, %v653
        %658 = vrot.lane.b32.xlu0 %v596, 120
        %v659 = vpop.permute.xlu0 %658
        %661 = vrot.lane.b32.xlu0 %v597, 120
        %v662 = vpop.permute.xlu0 %661
        %v664 = vsel %vm598, %v659, 0
        %v667 = vsel %vm598, %v662, 0
        %669 = vmatpush.bf16.xpose.msra.mxu0 0
        %670 = vmatpush.bf16.xpose.msra.mxu0 0
        %671 = vmatpush.bf16.xpose.msra.mxu0 0
        %672 = vmatpush.bf16.xpose.msra.mxu0 0
        %673 = vmatpush.bf16.xpose.msra.mxu0 0
        %674 = vmatpush.bf16.xpose.msra.mxu0 0
        %675 = vmatpush.bf16.xpose.msra.mxu0 0
        %676 = vmatpush.bf16.xpose.msra.mxu0 %v667
        %677 = vmatmul.bf16.gmra.mxu0 %v664
        %v678 = vpop.f32.mrf.mxu0
        %v679 = vadd.f32 0.0, %v678
        %v680 = vpop.f32.mrf.mxu0
        %681 = vdwg.mxu0
        %s682 = sadd.s32 %s618, 1
        %s683 = sld [smem:[#allocation4 + %s682]]
        %v684 = vstv %s683
        %vm685 = vcmp.lt.s32.totalorder %v595, %v684
        %v686 = vsel %vm685, %v679, -1000000.0
        %v687 = vsel %vm598, %v686, -inf
        %688 = vmax.xlane.f32.xlu0 %v687
        %v689 = vpop.xlane.xlu0 %688
        %v690 = vsub.f32 %v686, %v689
        %v691 = vmul.f32 %v690, 1.442695
        %v692 = vpow.pop %v691
        %v693 = vsel %vm598, %v692, 0.0
        %694 = vadd.xlane.f32.xlu0 %v693
        %v695 = vpop.xlane.xlu0 %694
        %v696 = vrcp.pop %v695
        %v697 = vmul.f32 %v692, %v696
        %v698 = vpack.c.bf16 %v697, %v697
        %700 = vrot.lane.b32.xlu0 %v635, 120
        %v701 = vpop.permute.xlu0 %700
        %v703 = vsel %vm598, %v698, 0
        %v706 = vsel %vm639, %v701, 0
        %708 = vmatpush.bf16.msra.mxu0 0
        %709 = vmatpush.bf16.msra.mxu0 0
        %710 = vmatpush.bf16.msra.mxu0 0
        %711 = vmatpush.bf16.msra.mxu0 0
        %712 = vmatpush.bf16.msra.mxu0 0
        %713 = vmatpush.bf16.msra.mxu0 0
        %714 = vmatpush.bf16.msra.mxu0 0
        %715 = vmatpush.bf16.msra.mxu0 %v706
        %716 = vmatmul.bf16.gmra.mxu0 %v703
        %v717 = vpop.f32.mrf.mxu0
        %v718 = vadd.f32 0.0, %v717
        %v719 = vpop.f32.mrf.mxu0
        %720 = vdwg.mxu0
        %722 = vrot.lane.b32.xlu0 %v718, 8
        %v723 = vpop.permute.xlu0 %722
        %vm725 = vcmask 130112
        %726 = vst.msk [vmem:[#allocation2] sm:$0xff] %vm725, %v723
        %727 = vrot.lane.b32.xlu0 %v596, 112
        %v728 = vpop.permute.xlu0 %727
        %729 = vrot.lane.b32.xlu0 %v597, 112
        %v730 = vpop.permute.xlu0 %729
        %v732 = vsel %vm598, %v728, 0
        %v735 = vsel %vm598, %v730, 0
        %737 = vmatpush.bf16.xpose.msra.mxu0 0
        %738 = vmatpush.bf16.xpose.msra.mxu0 0
        %739 = vmatpush.bf16.xpose.msra.mxu0 0
        %740 = vmatpush.bf16.xpose.msra.mxu0 0
        %741 = vmatpush.bf16.xpose.msra.mxu0 0
        %742 = vmatpush.bf16.xpose.msra.mxu0 0
        %743 = vmatpush.bf16.xpose.msra.mxu0 0
        %744 = vmatpush.bf16.xpose.msra.mxu0 %v735
        %745 = vmatmul.bf16.gmra.mxu0 %v732
        %v746 = vpop.f32.mrf.mxu0
        %v747 = vadd.f32 0.0, %v746
        %v748 = vpop.f32.mrf.mxu0
        %749 = vdwg.mxu0
        %s750 = sadd.s32 %s618, 2
        %s751 = sld [smem:[#allocation4 + %s750]]
        %v752 = vstv %s751
        %vm753 = vcmp.lt.s32.totalorder %v595, %v752
        %v754 = vsel %vm753, %v747, -1000000.0
        %v755 = vsel %vm598, %v754, -inf
        %756 = vmax.xlane.f32.xlu0 %v755
        %v757 = vpop.xlane.xlu0 %756
        %v758 = vsub.f32 %v754, %v757
        %v759 = vmul.f32 %v758, 1.442695
        %v760 = vpow.pop %v759
        %v761 = vsel %vm598, %v760, 0.0
        %762 = vadd.xlane.f32.xlu0 %v761
        %v763 = vpop.xlane.xlu0 %762
        %v764 = vrcp.pop %v763
        %v765 = vmul.f32 %v760, %v764
        %v766 = vpack.c.bf16 %v765, %v765
        %767 = vrot.lane.b32.xlu0 %v635, 112
        %v768 = vpop.permute.xlu0 %767
        %v770 = vsel %vm598, %v766, 0
        %v773 = vsel %vm639, %v768, 0
        %775 = vmatpush.bf16.msra.mxu0 0
        %776 = vmatpush.bf16.msra.mxu0 0
        %777 = vmatpush.bf16.msra.mxu0 0
        %778 = vmatpush.bf16.msra.mxu0 0
        %779 = vmatpush.bf16.msra.mxu0 0
        %780 = vmatpush.bf16.msra.mxu0 0
        %781 = vmatpush.bf16.msra.mxu0 0
        %782 = vmatpush.bf16.msra.mxu0 %v773
        %783 = vmatmul.bf16.gmra.mxu0 %v770
        %v784 = vpop.f32.mrf.mxu0
        %v785 = vadd.f32 0.0, %v784
        %v786 = vpop.f32.mrf.mxu0
        %787 = vdwg.mxu0
        %789 = vrot.lane.b32.xlu0 %v785, 16
        %v790 = vpop.permute.xlu0 %789
        %vm792 = vcmask 195712
        %793 = vst.msk [vmem:[#allocation2] sm:$0xff] %vm792, %v790
        %794 = vrot.lane.b32.xlu0 %v596, 104
        %v795 = vpop.permute.xlu0 %794
        %796 = vrot.lane.b32.xlu0 %v597, 104
        %v797 = vpop.permute.xlu0 %796
        %v799 = vsel %vm598, %v795, 0
        %v802 = vsel %vm598, %v797, 0
        %804 = vmatpush.bf16.xpose.msra.mxu0 0
        %805 = vmatpush.bf16.xpose.msra.mxu0 0
        %806 = vmatpush.bf16.xpose.msra.mxu0 0
        %807 = vmatpush.bf16.xpose.msra.mxu0 0
        %808 = vmatpush.bf16.xpose.msra.mxu0 0
        %809 = vmatpush.bf16.xpose.msra.mxu0 0
        %810 = vmatpush.bf16.xpose.msra.mxu0 0
        %811 = vmatpush.bf16.xpose.msra.mxu0 %v802
        %812 = vmatmul.bf16.gmra.mxu0 %v799
        %v813 = vpop.f32.mrf.mxu0
        %v814 = vadd.f32 0.0, %v813
        %v815 = vpop.f32.mrf.mxu0
        %816 = vdwg.mxu0
        %s817 = sadd.s32 %s618, 3
        %s818 = sld [smem:[#allocation4 + %s817]]
        %v819 = vstv %s818
        %vm820 = vcmp.lt.s32.totalorder %v595, %v819
        %v821 = vsel %vm820, %v814, -1000000.0
        %v822 = vsel %vm598, %v821, -inf
        %823 = vmax.xlane.f32.xlu0 %v822
        %v824 = vpop.xlane.xlu0 %823
        %v825 = vsub.f32 %v821, %v824
        %v826 = vmul.f32 %v825, 1.442695
        %v827 = vpow.pop %v826
        %v828 = vsel %vm598, %v827, 0.0
        %829 = vadd.xlane.f32.xlu0 %v828
        %v830 = vpop.xlane.xlu0 %829
        %v831 = vrcp.pop %v830
        %v832 = vmul.f32 %v827, %v831
        %v833 = vpack.c.bf16 %v832, %v832
        %834 = vrot.lane.b32.xlu0 %v635, 104
        %v835 = vpop.permute.xlu0 %834
        %v837 = vsel %vm598, %v833, 0
        %v840 = vsel %vm639, %v835, 0
        %842 = vmatpush.bf16.msra.mxu0 0
        %843 = vmatpush.bf16.msra.mxu0 0
        %844 = vmatpush.bf16.msra.mxu0 0
        %845 = vmatpush.bf16.msra.mxu0 0
        %846 = vmatpush.bf16.msra.mxu0 0
        %847 = vmatpush.bf16.msra.mxu0 0
        %848 = vmatpush.bf16.msra.mxu0 0
        %849 = vmatpush.bf16.msra.mxu0 %v840
        %850 = vmatmul.bf16.gmra.mxu0 %v837
        %v851 = vpop.f32.mrf.mxu0
        %v852 = vadd.f32 0.0, %v851
        %v853 = vpop.f32.mrf.mxu0
        %854 = vdwg.mxu0
        %856 = vrot.lane.b32.xlu0 %v852, 24
        %v857 = vpop.permute.xlu0 %856
        %vm859 = vcmask 261312
        %860 = vst.msk [vmem:[#allocation2] sm:$0xff] %vm859, %v857
        %v861 = vld [vmem:[#allocation2] sm:$0xff]
        %v862 = vld [vmem:[#allocation8] sm:$0xf]
        %v863 = vld [vmem:[#allocation8 + $0x4] sm:$0xf]
        %v864 = vld [vmem:[#allocation8 + $0x8] sm:$0xf]
        %v865 = vld [vmem:[#allocation8 + $0xc] sm:$0xf]
        %v866 = vpack.c.bf16 %v861, %v861
        %v871 = vunpack.c.l.b16 %v862
        %v872 = vunpack.c.l.b16 %v863
        %v873 = vunpack.c.l.b16 %v864
        %v874 = vunpack.c.l.b16 %v865
        %v875 = vpack.c.b16 %v872, %v871
        %v876 = vpack.c.b16 %v874, %v873
        %v880 = vsel %vm515, %v866, 0
        %882 = vmatpush.bf16.msra.mxu0 0
        %883 = vmatpush.bf16.msra.mxu0 0
        %884 = vmatpush.bf16.msra.mxu0 0
        %885 = vmatpush.bf16.msra.mxu0 0
        %886 = vmatpush.bf16.msra.mxu0 0
        %887 = vmatpush.bf16.msra.mxu0 0
        %888 = vmatpush.bf16.msra.mxu0 %v876
        %889 = vmatpush.bf16.msra.mxu0 %v875
        %890 = vmatmul.bf16.gmra.mxu0 %v880
        %v891 = vpop.f32.mrf.mxu0
        %v892 = vadd.f32 0.0, %v891
        %v893 = vpop.f32.mrf.mxu0
        %894 = vdwg.mxu0
        %v895 = vadd.f32 %v496, %v892
        %v896 = vld [vmem:[%s6] sm:$0x1]
        %v897 = vld [vmem:[%s7] sm:$0x1]
        %v898 = vsel %vm515, %v895, 0.0
        %899 = vadd.xlane.f32.xlu0 %v898
        %v900 = vpop.xlane.xlu0 %899
        %v901 = vrcp.pop 32.0
        %v902 = vmul.f32 32.0, %v901
        %v903 = vsub.f32 1.0, %v902
        %v904 = vmul.f32 %v901, %v903
        %v905 = vadd.f32 %v901, %v904
        %vm906 = vweird.f32 %v901
        %v907 = vsel %vm906, %v901, %v905
        %v908 = vmul.f32 %v900, %v907
        %v909 = vsub.f32 %v895, %v908
        %v910 = vmul.f32 %v909, %v909
        %v911 = vsel %vm515, %v910, 0.0
        %912 = vadd.xlane.f32.xlu0 %v911
        %v913 = vpop.xlane.xlu0 %912
        %v914 = vmul.f32 %v913, %v907
        %v915 = vadd.f32 %v914, 1e-05
        %v916 = vrsqrt.pop %v915
        %v917 = vmul.f32 %v916, %v915
        %v918 = vmul.f32 %v917, %v916
        %v919 = vmul.f32 0.5, %v918
        %v920 = vsub.f32 1.5, %v919
        %v921 = vmul.f32 %v916, %v920
        %vm922 = vweird.f32 %v915
        %vm923 = vweird.f32 %v916
        %vm924 = vmor %vm922, %vm923
        %v925 = vsel %vm924, %v916, %v921
        %v926 = vmul.f32 %v909, %v925
        %v928 = vperm.slane %v896, 0
        %v930 = vmul.f32 %v926, %v928
        %v932 = vperm.slane %v897, 0
        %v934 = vadd.f32 %v930, %v932
        %v935 = vld [vmem:[#allocation10] sm:$0xf]
        %v936 = vld [vmem:[#allocation10 + $0x4] sm:$0xf]
        %v937 = vld [vmem:[#allocation10 + $0x8] sm:$0xf]
        %v938 = vld [vmem:[#allocation10 + $0xc] sm:$0xf]
        %v939 = vpack.c.bf16 %v934, %v934
        %v940 = vld [vmem:[%s9] sm:$0x1]
        %v942 = vperm.slane %v940, 0
        %v948 = vunpack.c.l.b16 %v935
        %v949 = vunpack.c.l.b16 %v936
        %v950 = vunpack.c.l.b16 %v937
        %v951 = vunpack.c.l.b16 %v938
        %v952 = vpack.c.b16 %v949, %v948
        %v953 = vpack.c.b16 %v951, %v950
        %v957 = vsel %vm515, %v939, 0
        %959 = vmatpush.bf16.msra.mxu0 0
        %960 = vmatpush.bf16.msra.mxu0 0
        %961 = vmatpush.bf16.msra.mxu0 0
        %962 = vmatpush.bf16.msra.mxu0 0
        %963 = vmatpush.bf16.msra.mxu0 0
        %964 = vmatpush.bf16.msra.mxu0 0
        %965 = vmatpush.bf16.msra.mxu0 %v953
        %966 = vmatpush.bf16.msra.mxu0 %v952
        %967 = vmatmul.bf16.gmra.mxu0 %v957
        %v968 = vpop.f32.mrf.mxu0
        %v969 = vadd.f32 %v942, %v968
        %v970 = vpop.f32.mrf.mxu0
        %971 = vdwg.mxu0
        %v972 = vmax.f32 %v969, 0.0
        %v973 = vld [vmem:[%s10] sm:$0xf]
        %v974 = vld [vmem:[%s10 + $0x4] sm:$0xf]
        %v975 = vld [vmem:[%s10 + $0x8] sm:$0xf]
        %v976 = vld [vmem:[%s10 + $0xc] sm:$0xf]
        %v977 = vld [vmem:[%s10 + $0x10] sm:$0xf]
        %v978 = vld [vmem:[%s10 + $0x14] sm:$0xf]
        %v979 = vld [vmem:[%s10 + $0x18] sm:$0xf]
        %v980 = vld [vmem:[%s10 + $0x1c] sm:$0xf]
        %v981 = vpack.c.bf16 %v972, %v972
        %v982 = vld [vmem:[%s11] sm:$0x1]
        %v984 = vperm.slane %v982, 0
        %v994 = vunpack.c.l.b16 %v973
        %v995 = vunpack.c.l.b16 %v974
        %v996 = vunpack.c.l.b16 %v975
        %v997 = vunpack.c.l.b16 %v976
        %v998 = vunpack.c.l.b16 %v977
        %v999 = vunpack.c.l.b16 %v978
        %v1000 = vunpack.c.l.b16 %v979
        %v1001 = vunpack.c.l.b16 %v980
        %v1002 = vpack.c.b16 %v995, %v994
        %v1003 = vpack.c.b16 %v997, %v996
        %v1004 = vpack.c.b16 %v999, %v998
        %v1005 = vpack.c.b16 %v1001, %v1000
        %vm1010 = vcmask 523264
        %v1012 = vsel %vm1010, %v981, 0
        %1014 = vmatpush.bf16.msra.mxu0 0
        %1015 = vmatpush.bf16.msra.mxu0 0
        %1016 = vmatpush.bf16.msra.mxu0 0
        %1017 = vmatpush.bf16.msra.mxu0 0
        %1018 = vmatpush.bf16.msra.mxu0 %v1005
        %1019 = vmatpush.bf16.msra.mxu0 %v1004
        %1020 = vmatpush.bf16.msra.mxu0 %v1003
        %1021 = vmatpush.bf16.msra.mxu0 %v1002
        %1022 = vmatmul.bf16.gmra.mxu0 %v1012
        %v1023 = vpop.f32.mrf.mxu0
        %v1024 = vadd.f32 %v984, %v1023
        %v1025 = vpop.f32.mrf.mxu0
        %1026 = vdwg.mxu0
        %v1027 = vadd.f32 %v934, %v1024
        %v1028 = vld [vmem:[%s12] sm:$0x1]
        %v1029 = vld [vmem:[%s13] sm:$0x1]
        %v1030 = vsel %vm515, %v1027, 0.0
        %1031 = vadd.xlane.f32.xlu0 %v1030
        %v1032 = vpop.xlane.xlu0 %1031
        %v1033 = vmul.f32 %v1032, %v907
        %v1034 = vsub.f32 %v1027, %v1033
        %v1035 = vmul.f32 %v1034, %v1034
        %v1036 = vsel %vm515, %v1035, 0.0
        %1037 = vadd.xlane.f32.xlu0 %v1036
        %v1038 = vpop.xlane.xlu0 %1037
        %v1039 = vmul.f32 %v1038, %v907
        %v1040 = vadd.f32 %v1039, 1e-05
        %v1041 = vrsqrt.pop %v1040
        %v1042 = vmul.f32 %v1041, %v1040
        %v1043 = vmul.f32 %v1042, %v1041
        %v1044 = vmul.f32 0.5, %v1043
        %v1045 = vsub.f32 1.5, %v1044
        %v1046 = vmul.f32 %v1041, %v1045
        %vm1047 = vweird.f32 %v1040
        %vm1048 = vweird.f32 %v1041
        %vm1049 = vmor %vm1047, %vm1048
        %v1050 = vsel %vm1049, %v1041, %v1046
        %v1051 = vmul.f32 %v1034, %v1050
        %v1053 = vperm.slane %v1028, 0
        %v1055 = vmul.f32 %v1051, %v1053
        %v1057 = vperm.slane %v1029, 0
        %v1059 = vadd.f32 %v1055, %v1057
        %1060 = vst.msk [vmem:[%s490] sm:$0xff] %vm515, %v1059
        %s1061 = sand.u32 %s324, 1
        %s1062 = scalar_lea.sflag [#allocation7], %s1061
        %s1063 = sand.u32 %s324, 1
        %s1064 = smul.addr %s1063, 8
        %s1065 = scalar_lea.vmem [#allocation11], %s1064
        // Predicated region
        $region85: #{tpu_custom_call.1} parent=71 // pred_check
          %p1066 = pneg %p334
        $region86: #{tpu_custom_call.1} parent=71 // pred_check_branch
          %1068 = sbr.rel (%p1066) target = $region88
        $region87: #{tpu_custom_call.1} parent=71 // pred_region
          %1070 = vsyncadd %s1062, 0
          %s1071 = smul.addr %s38, 8
          %s1072 = scalar_lea.hbm %s14, %s1071
          %s1074 = sshll.u32 %s1065, 4
          %s1075 = int_to_ptr.vmem [resolvable:$true] %s1074
          %s1076 = sshll.u32 %s1072, 4
          %s1077 = int_to_ptr.hbm [resolvable:$true] %s1076
          %1079 = dma.vmem_to_hbm [thread:$0]  %s1075, 128, %s1077, %s1062
        $region88: #{tpu_custom_call.1} parent=71 // pred_fallthru
          _
      $region72: #{tpu_custom_call.1} parent=5 // pred_fallthru
        _
      %p1080 = scmp.le.s32.totalorder 2, %s33
      // Predicated region
      $region89: #{tpu_custom_call.1} parent=5 // pred_check
        %p1081 = pneg %p1080
      $region90: #{tpu_custom_call.1} parent=5 // pred_check_branch
        %1083 = sbr.rel (%p1081) target = $region92
      $region91: #{tpu_custom_call.1} parent=5 // pred_region
        %s1084 = ssub.s32 %s33, 2
        // Predicated region
        $region93: #{tpu_custom_call.1} parent=91 // pred_check
          %p1085 = pneg %p340
        $region94: #{tpu_custom_call.1} parent=91 // pred_check_branch
          %1087 = sbr.rel (%p1085) target = $region96
        $region95: #{tpu_custom_call.1} parent=91 // pred_region
          %s1088 = sand.u32 %s325, 1
          %s1089 = scalar_lea.sflag [#allocation7], %s1088
          %s1090 = sand.u32 %s325, 1
          %s1091 = smul.addr %s1090, 8
          %s1092 = scalar_lea.vmem [#allocation11], %s1091
          %1094 = dma.done %s1089, 128
        $region96: #{tpu_custom_call.1} parent=91 // pred_fallthru
          _
      $region92: #{tpu_custom_call.1} parent=5 // pred_fallthru
        _
    $region6: #{tpu_custom_call.1} parent=1 // loop_footer
      %s37 = sadd.s32 1, %s33
    $region7: #{tpu_custom_call.1} parent=1 // loop_footer_branch
      %32 = sbr.rel target = $region3
    $region8: #{tpu_custom_call.1} parent=1 // loop_exit
      _
    %1095 = vsyncpa [#allocation6], 1
    %s1096 = scalar_lea.sflag [#allocation6], 1
    %1097 = vsyncpa %s1096, 1
    %1098 = vsyncpa [#allocation9], 1
    %1099 = vsyncpa [#allocation7], 1
    %s1100 = scalar_lea.sflag [#allocation7], 1
    %1101 = vsyncpa %s1100, 1

// kernel: tpu_custom_call.1
$region0: #{tpu_custom_call.1}
  #allocation0 [shape = 'u32[]', space=smem, size = 0x4, offset = 0x4, fixed_abs, tag = 'smem constant byte address 0x4 - core index']
  #allocation1 [shape = 'u32[72,128]{1,0:T(1,128)}', space=vmem, size = 0x9000, scoped, tag = 'internal scratch']
  #allocation2 [shape = 'f32[8,32]{1,0:T(8,128)}', space=vmem, size = 0x1000, scoped, tag = 'scratch operand']
  #allocation3 [shape = 's32[1]{0}', space=sflag, size = 0x4, scoped, tag = 'scoped memory for tpu_custom_call.1']
  #allocation4 [shape = 'u8[512]{0}', space=smem, size = 0x200, scoped, tag = 'prefetched SMEM operand 0']
  %s0 = inlined_call_operand.hbm [shape: s32[8], index: 0, kind: input, shape index: {}]
  %s1 = inlined_call_operand.vmem [shape: f32[2,8,32], index: 1, kind: input, shape index: {}]
  %s2 = inlined_call_operand.vmem [shape: bf16[32,32], index: 2, kind: input, shape index: {}]
  %s3 = inlined_call_operand.vmem [shape: bf16[32,32], index: 3, kind: input, shape index: {}]
  %s4 = inlined_call_operand.hbm [shape: bf16[32,32], index: 4, kind: input, shape index: {}]
  %s5 = inlined_call_operand.hbm [shape: bf16[32,32], index: 5, kind: input, shape index: {}]
  %s6 = inlined_call_operand.vmem [shape: f32[1,32], index: 6, kind: input, shape index: {}]
  %s7 = inlined_call_operand.vmem [shape: f32[1,32], index: 7, kind: input, shape index: {}]
  %s8 = inlined_call_operand.hbm [shape: bf16[32,64], index: 8, kind: input, shape index: {}]
  %s9 = inlined_call_operand.vmem [shape: f32[1,64], index: 9, kind: input, shape index: {}]
  %s10 = inlined_call_operand.vmem [shape: bf16[64,32], index: 10, kind: input, shape index: {}]
  %s11 = inlined_call_operand.vmem [shape: f32[1,32], index: 11, kind: input, shape index: {}]
  %s12 = inlined_call_operand.vmem [shape: f32[1,32], index: 12, kind: input, shape index: {}]
  %s13 = inlined_call_operand.vmem [shape: f32[1,32], index: 13, kind: input, shape index: {}]
  %s14 = inlined_call_operand.hbm [shape: f32[2,8,32], index: 14, kind: output, shape index: {}]
  %s15 = sld [smem:[#allocation0]]
  $region97: #{tpu_custom_call.1} parent=0
    _
  %s17 = ssub.s32 1, %s15
  %s18 = scalar_select 0, %s17, %s15
  %s20 = sshll.u32 %s0, 4
  %s21 = int_to_ptr.hbm [resolvable:$true] %s20
  %23 = dma.hbm_to_smem %s21, 16, [#allocation4], [#allocation3]
  %25 = dma.done [#allocation3], 16
  %26 = sfence
  $region1: #{tpu_custom_call.1} parent=0
    #allocation5 [shape = 'u8[8192]{0}', space=vmem, size = 0x2000, scoped, tag = 'input window, operand 4, single buffered']
    #allocation6 [shape = 's32[2]{0}', space=sflag, size = 0x8, scoped, tag = 'scoped memory for tpu_custom_call.1']
    #allocation7 [shape = 's32[2]{0}', space=sflag, size = 0x8, scoped, tag = 'scoped memory for tpu_custom_call.1']
    #allocation8 [shape = 'u8[8192]{0}', space=vmem, size = 0x2000, scoped, tag = 'input window, operand 5, single buffered']
    #allocation9 [shape = 's32[1]{0}', space=sflag, size = 0x4, scoped, tag = 'scoped memory for tpu_custom_call.1']
    #allocation10 [shape = 'u8[8192]{0}', space=vmem, size = 0x2000, scoped, tag = 'input window, operand 8, single buffered']
    #allocation11 [shape = 'u8[8192]{0}', space=vmem, size = 0x2000, scoped, tag = 'output window, operand 0']
    %27 = vsyncpa [#allocation6], 0
    %28 = vsyncpa [#allocation9], 0
    %29 = vsyncpa [#allocation7], 0
    %s30 = scalar_lea.sflag [#allocation7], 1
    %31 = vsyncpa %s30, 0
    loop: start=0, step=1, limit=4
    $region2: #{tpu_custom_call.1} parent=1 // loop_pre_header
      _
    $region3: #{tpu_custom_call.1} parent=1 // loop_header
      %s33 = sphi 0, %s37
      %p34 = scmp.ge.s32.totalorder %s33, 4
      %s43 = sphi 0, %s45
      %s46 = sphi 0, %s43
      %s47 = sphi 0, %s46
      %s63 = sphi 0, %s47
      %s67 = sphi 0, %s67
      %s69 = sphi 0, %s67
      %s70 = sphi 0, %s69
      %s84 = sphi 0, %s70
      %s88 = sphi 0, %s88
      %s90 = sphi 0, %s88
      %s91 = sphi 0, %s90
      %s105 = sphi 0, %s91
      %s109 = sphi 0, %s109
      %s111 = sphi 0, %s109
      %s112 = sphi 0, %s111
      %s126 = sphi 0, %s112
      %s130 = sphi 0, %s130
      %s132 = sphi 0, %s130
      %s133 = sphi 0, %s132
      %s147 = sphi 0, %s133
      %s151 = sphi 0, %s151
      %s153 = sphi 0, %s151
      %s154 = sphi 0, %s153
      %s168 = sphi 0, %s154
      %s172 = sphi 0, %s172
      %s174 = sphi 0, %s172
      %s175 = sphi 0, %s174
      %s189 = sphi 0, %s175
      %s193 = sphi 0, %s193
      %s195 = sphi 0, %s193
      %s196 = sphi 0, %s195
      %s210 = sphi 0, %s196
      %s214 = sphi 0, %s214
      %s216 = sphi 0, %s214
      %s217 = sphi 0, %s216
      %s231 = sphi 0, %s217
      %s235 = sphi 0, %s235
      %s237 = sphi 0, %s235
      %s238 = sphi 0, %s237
      %s252 = sphi 0, %s238
      %s256 = sphi 0, %s256
      %s258 = sphi 0, %s256
      %s259 = sphi 0, %s258
      %s273 = sphi 0, %s259
      %s277 = sphi 0, %s277
      %s279 = sphi 0, %s277
      %s280 = sphi 0, %s279
      %s294 = sphi 0, %s280
      %s298 = sphi 0, %s298
      %s300 = sphi 0, %s298
      %s301 = sphi 0, %s300
      %s315 = sphi 0, %s301
      %s321 = sphi 0, %s323
      %s324 = sphi 0, %s321
      %s325 = sphi 0, %s324
      %s341 = sphi 0, %s325
    $region4: #{tpu_custom_call.1} parent=1 // loop_header_branch
      %36 = sbr.rel (%p34) target = $region8
    $region5: #{tpu_custom_call.1} parent=1 // loop_body
      %s38 = ssub.s32 %s33, 1
      %s39 = ssub.s32 %s33, 2
      %s40 = sadd.s32 %s33, 1
      %s41 = ssub.s32 %s33, %s40
      %p42 = scmp.eq.s32.totalorder %s41, 0
      %s44 = sadd.s32 %s43, 1
      %s45 = scalar_select %p42, %s43, %s44
      %p48 = pneg %p42
      %p49 = scmp.eq.s32.totalorder %s33, 1
      %p50 = por %p48, %p49
      %p51 = scmp.ne.s32.totalorder %s43, %s46
      %p52 = scmp.eq.s32.totalorder %s33, 0
      %p53 = por %p51, %p52
      %p54 = scmp.ne.s32.totalorder %s43, %s46
      %p55 = scmp.eq.s32.totalorder %s38, 1
      %p56 = por %p54, %p55
      %p57 = scmp.ne.s32.totalorder %s46, %s47
      %p58 = scmp.eq.s32.totalorder %s38, 0
      %p59 = por %p57, %p58
      %p60 = scmp.ne.s32.totalorder %s46, %s47
      %p61 = scmp.eq.s32.totalorder %s39, 1
      %p62 = por %p60, %p61
      %p64 = scmp.ne.s32.totalorder %s47, %s63
      %p65 = scmp.eq.s32.totalorder %s39, 0
      %p66 = por %p64, %p65
      %s68 = sadd.s32 %s67, 1
      %p71 = scmp.eq.s32.totalorder %s33, 1
      %p72 = scmp.ne.s32.totalorder %s67, %s69
      %p73 = scmp.eq.s32.totalorder %s33, 0
      %p74 = por %p72, %p73
      %p75 = scmp.ne.s32.totalorder %s67, %s69
      %p76 = scmp.eq.s32.totalorder %s38, 1
      %p77 = por %p75, %p76
      %p78 = scmp.ne.s32.totalorder %s69, %s70
      %p79 = scmp.eq.s32.totalorder %s38, 0
      %p80 = por %p78, %p79
      %p81 = scmp.ne.s32.totalorder %s69, %s70
      %p82 = scmp.eq.s32.totalorder %s39, 1
      %p83 = por %p81, %p82
      %p85 = scmp.ne.s32.totalorder %s70, %s84
      %p86 = scmp.eq.s32.totalorder %s39, 0
      %p87 = por %p85, %p86
      %s89 = sadd.s32 %s88, 1
      %p92 = scmp.eq.s32.totalorder %s33, 1
      %p93 = scmp.ne.s32.totalorder %s88, %s90
      %p94 = scmp.eq.s32.totalorder %s33, 0
      %p95 = por %p93, %p94
      %p96 = scmp.ne.s32.totalorder %s88, %s90
      %p97 = scmp.eq.s32.totalorder %s38, 1
      %p98 = por %p96, %p97
      %p99 = scmp.ne.s32.totalorder %s90, %s91
      %p100 = scmp.eq.s32.totalorder %s38, 0
      %p101 = por %p99, %p100
      %p102 = scmp.ne.s32.totalorder %s90, %s91
      %p103 = scmp.eq.s32.totalorder %s39, 1
      %p104 = por %p102, %p103
      %p106 = scmp.ne.s32.totalorder %s91, %s105
      %p107 = scmp.eq.s32.totalorder %s39, 0
      %p108 = por %p106, %p107
      %s110 = sadd.s32 %s109, 1
      %p113 = scmp.eq.s32.totalorder %s33, 1
      %p114 = scmp.ne.s32.totalorder %s109, %s111
      %p115 = scmp.eq.s32.totalorder %s33, 0
      %p116 = por %p114, %p115
      %p117 = scmp.ne.s32.totalorder %s109, %s111
      %p118 = scmp.eq.s32.totalorder %s38, 1
      %p119 = por %p117, %p118
      %p120 = scmp.ne.s32.totalorder %s111, %s112
      %p121 = scmp.eq.s32.totalorder %s38, 0
      %p122 = por %p120, %p121
      %p123 = scmp.ne.s32.totalorder %s111, %s112
      %p124 = scmp.eq.s32.totalorder %s39, 1
      %p125 = por %p123, %p124
      %p127 = scmp.ne.s32.totalorder %s112, %s126
      %p128 = scmp.eq.s32.totalorder %s39, 0
      %p129 = por %p127, %p128
      %s131 = sadd.s32 %s130, 1
      %p134 = scmp.eq.s32.totalorder %s33, 1
      %p135 = scmp.ne.s32.totalorder %s130, %s132
      %p136 = scmp.eq.s32.totalorder %s33, 0
      %p137 = por %p135, %p136
      %p138 = scmp.ne.s32.totalorder %s130, %s132
      %p139 = scmp.eq.s32.totalorder %s38, 1
      %p140 = por %p138, %p139
      %p141 = scmp.ne.s32.totalorder %s132, %s133
      %p142 = scmp.eq.s32.totalorder %s38, 0
      %p143 = por %p141, %p142
      %p144 = scmp.ne.s32.totalorder %s132, %s133
      %p145 = scmp.eq.s32.totalorder %s39, 1
      %p146 = por %p144, %p145
      %p148 = scmp.ne.s32.totalorder %s133, %s147
      %p149 = scmp.eq.s32.totalorder %s39, 0
      %p150 = por %p148, %p149
      %s152 = sadd.s32 %s151, 1
      %p155 = scmp.eq.s32.totalorder %s33, 1
      %p156 = scmp.ne.s32.totalorder %s151, %s153
      %p157 = scmp.eq.s32.totalorder %s33, 0
      %p158 = por %p156, %p157
      %p159 = scmp.ne.s32.totalorder %s151, %s153
      %p160 = scmp.eq.s32.totalorder %s38, 1
      %p161 = por %p159, %p160
      %p162 = scmp.ne.s32.totalorder %s153, %s154
      %p163 = scmp.eq.s32.totalorder %s38, 0
      %p164 = por %p162, %p163
      %p165 = scmp.ne.s32.totalorder %s153, %s154
      %p166 = scmp.eq.s32.totalorder %s39, 1
      %p167 = por %p165, %p166
      %p169 = scmp.ne.s32.totalorder %s154, %s168
      %p170 = scmp.eq.s32.totalorder %s39, 0
      %p171 = por %p169, %p170
      %s173 = sadd.s32 %s172, 1
      %p176 = scmp.eq.s32.totalorder %s33, 1
      %p177 = scmp.ne.s32.totalorder %s172, %s174
      %p178 = scmp.eq.s32.totalorder %s33, 0
      %p179 = por %p177, %p178
      %p180 = scmp.ne.s32.totalorder %s172, %s174
      %p181 = scmp.eq.s32.totalorder %s38, 1
      %p182 = por %p180, %p181
      %p183 = scmp.ne.s32.totalorder %s174, %s175
      %p184 = scmp.eq.s32.totalorder %s38, 0
      %p185 = por %p183, %p184
      %p186 = scmp.ne.s32.totalorder %s174, %s175
      %p187 = scmp.eq.s32.totalorder %s39, 1
      %p188 = por %p186, %p187
      %p190 = scmp.ne.s32.totalorder %s175, %s189
      %p191 = scmp.eq.s32.totalorder %s39, 0
      %p192 = por %p190, %p191
      %s194 = sadd.s32 %s193, 1
      %p197 = scmp.eq.s32.totalorder %s33, 1
      %p198 = scmp.ne.s32.totalorder %s193, %s195
      %p199 = scmp.eq.s32.totalorder %s33, 0
      %p200 = por %p198, %p199
      %p201 = scmp.ne.s32.totalorder %s193, %s195
      %p202 = scmp.eq.s32.totalorder %s38, 1
      %p203 = por %p201, %p202
      %p204 = scmp.ne.s32.totalorder %s195, %s196
      %p205 = scmp.eq.s32.totalorder %s38, 0
      %p206 = por %p204, %p205
      %p207 = scmp.ne.s32.totalorder %s195, %s196
      %p208 = scmp.eq.s32.totalorder %s39, 1
      %p209 = por %p207, %p208
      %p211 = scmp.ne.s32.totalorder %s196, %s210
      %p212 = scmp.eq.s32.totalorder %s39, 0
      %p213 = por %p211, %p212
      %s215 = sadd.s32 %s214, 1
      %p218 = scmp.eq.s32.totalorder %s33, 1
      %p219 = scmp.ne.s32.totalorder %s214, %s216
      %p220 = scmp.eq.s32.totalorder %s33, 0
      %p221 = por %p219, %p220
      %p222 = scmp.ne.s32.totalorder %s214, %s216
      %p223 = scmp.eq.s32.totalorder %s38, 1
      %p224 = por %p222, %p223
      %p225 = scmp.ne.s32.totalorder %s216, %s217
      %p226 = scmp.eq.s32.totalorder %s38, 0
      %p227 = por %p225, %p226
      %p228 = scmp.ne.s32.totalorder %s216, %s217
      %p229 = scmp.eq.s32.totalorder %s39, 1
      %p230 = por %p228, %p229
      %p232 = scmp.ne.s32.totalorder %s217, %s231
      %p233 = scmp.eq.s32.totalorder %s39, 0
      %p234 = por %p232, %p233
      %s236 = sadd.s32 %s235, 1
      %p239 = scmp.eq.s32.totalorder %s33, 1
      %p240 = scmp.ne.s32.totalorder %s235, %s237
      %p241 = scmp.eq.s32.totalorder %s33, 0
      %p242 = por %p240, %p241
      %p243 = scmp.ne.s32.totalorder %s235, %s237
      %p244 = scmp.eq.s32.totalorder %s38, 1
      %p245 = por %p243, %p244
      %p246 = scmp.ne.s32.totalorder %s237, %s238
      %p247 = scmp.eq.s32.totalorder %s38, 0
      %p248 = por %p246, %p247
      %p249 = scmp.ne.s32.totalorder %s237, %s238
      %p250 = scmp.eq.s32.totalorder %s39, 1
      %p251 = por %p249, %p250
      %p253 = scmp.ne.s32.totalorder %s238, %s252
      %p254 = scmp.eq.s32.totalorder %s39, 0
      %p255 = por %p253, %p254
      %s257 = sadd.s32 %s256, 1
      %p260 = scmp.eq.s32.totalorder %s33, 1
      %p261 = scmp.ne.s32.totalorder %s256, %s258
      %p262 = scmp.eq.s32.totalorder %s33, 0
      %p263 = por %p261, %p262
      %p264 = scmp.ne.s32.totalorder %s256, %s258
      %p265 = scmp.eq.s32.totalorder %s38, 1
      %p266 = por %p264, %p265
      %p267 = scmp.ne.s32.totalorder %s258, %s259
      %p268 = scmp.eq.s32.totalorder %s38, 0
      %p269 = por %p267, %p268
      %p270 = scmp.ne.s32.totalorder %s258, %s259
      %p271 = scmp.eq.s32.totalorder %s39, 1
      %p272 = por %p270, %p271
      %p274 = scmp.ne.s32.totalorder %s259, %s273
      %p275 = scmp.eq.s32.totalorder %s39, 0
      %p276 = por %p274, %p275
      %s278 = sadd.s32 %s277, 1
      %p281 = scmp.eq.s32.totalorder %s33, 1
      %p282 = scmp.ne.s32.totalorder %s277, %s279
      %p283 = scmp.eq.s32.totalorder %s33, 0
      %p284 = por %p282, %p283
      %p285 = scmp.ne.s32.totalorder %s277, %s279
      %p286 = scmp.eq.s32.totalorder %s38, 1
      %p287 = por %p285, %p286
      %p288 = scmp.ne.s32.totalorder %s279, %s280
      %p289 = scmp.eq.s32.totalorder %s38, 0
      %p290 = por %p288, %p289
      %p291 = scmp.ne.s32.totalorder %s279, %s280
      %p292 = scmp.eq.s32.totalorder %s39, 1
      %p293 = por %p291, %p292
      %p295 = scmp.ne.s32.totalorder %s280, %s294
      %p296 = scmp.eq.s32.totalorder %s39, 0
      %p297 = por %p295, %p296
      %s299 = sadd.s32 %s298, 1
      %p302 = scmp.eq.s32.totalorder %s33, 1
      %p303 = scmp.ne.s32.totalorder %s298, %s300
      %p304 = scmp.eq.s32.totalorder %s33, 0
      %p305 = por %p303, %p304
      %p306 = scmp.ne.s32.totalorder %s298, %s300
      %p307 = scmp.eq.s32.totalorder %s38, 1
      %p308 = por %p306, %p307
      %p309 = scmp.ne.s32.totalorder %s300, %s301
      %p310 = scmp.eq.s32.totalorder %s38, 0
      %p311 = por %p309, %p310
      %p312 = scmp.ne.s32.totalorder %s300, %s301
      %p313 = scmp.eq.s32.totalorder %s39, 1
      %p314 = por %p312, %p313
      %p316 = scmp.ne.s32.totalorder %s301, %s315
      %p317 = scmp.eq.s32.totalorder %s39, 0
      %p318 = por %p316, %p317
      %s319 = ssub.s32 %s33, %s40
      %p320 = scmp.eq.s32.totalorder %s319, 0
      %s322 = sadd.s32 %s321, 1
      %s323 = scalar_select %p320, %s321, %s322
      %p326 = pneg %p320
      %p327 = scmp.eq.s32.totalorder %s33, 1
      %p328 = por %p326, %p327
      %p329 = scmp.ne.s32.totalorder %s321, %s324
      %p330 = scmp.eq.s32.totalorder %s33, 0
      %p331 = por %p329, %p330
      %p332 = scmp.ne.s32.totalorder %s321, %s324
      %p333 = scmp.eq.s32.totalorder %s38, 1
      %p334 = por %p332, %p333
      %p335 = scmp.ne.s32.totalorder %s324, %s325
      %p336 = scmp.eq.s32.totalorder %s38, 0
      %p337 = por %p335, %p336
      %p338 = scmp.ne.s32.totalorder %s324, %s325
      %p339 = scmp.eq.s32.totalorder %s39, 1
      %p340 = por %p338, %p339
      %p342 = scmp.ne.s32.totalorder %s325, %s341
      %p343 = scmp.eq.s32.totalorder %s39, 0
      %p344 = por %p342, %p343
      %p345 = scmp.le.s32.totalorder 1, %s33
      %p346 = scmp.lt.s32.totalorder %s33, 3
      %p347 = pnand %p345, %p346
      %p348 = pneg %p347
      // Predicated region
      $region9: #{tpu_custom_call.1} parent=5 // pred_check
        _
      $region10: #{tpu_custom_call.1} parent=5 // pred_check_branch
        %350 = sbr.rel (%p347) target = $region12
      $region11: #{tpu_custom_call.1} parent=5 // pred_region
        %s351 = ssub.s32 %s33, 1
        // Predicated region
        $region13: #{tpu_custom_call.1} parent=11 // pred_check
          %p352 = pneg %p80
        $region14: #{tpu_custom_call.1} parent=11 // pred_check_branch
          %354 = sbr.rel (%p352) target = $region16
        $region15: #{tpu_custom_call.1} parent=11 // pred_region
          _
        $region16: #{tpu_custom_call.1} parent=11 // pred_fallthru
          _
        // Predicated region
        $region17: #{tpu_custom_call.1} parent=11 // pred_check
          %p355 = pneg %p101
        $region18: #{tpu_custom_call.1} parent=11 // pred_check_branch
          %357 = sbr.rel (%p355) target = $region20
        $region19: #{tpu_custom_call.1} parent=11 // pred_region
          _
        $region20: #{tpu_custom_call.1} parent=11 // pred_fallthru
          _
        // Predicated region
        $region21: #{tpu_custom_call.1} parent=11 // pred_check
          %p358 = pneg %p122
        $region22: #{tpu_custom_call.1} parent=11 // pred_check_branch
          %360 = sbr.rel (%p358) target = $region24
        $region23: #{tpu_custom_call.1} parent=11 // pred_region
          %362 = vsyncadd [#allocation6], 0
          %s363 = sshll.u32 %s4, 4
          %s364 = int_to_ptr.hbm [resolvable:$true] %s363
          %s365 = sshll.u32 [#allocation5], 4
          %s366 = int_to_ptr.vmem [resolvable:$true] %s365
          %371 = dma.hbm_to_vmem [thread:$0]  %s364, 256, %s366, [#allocation6], 64, 64, 4
        $region24: #{tpu_custom_call.1} parent=11 // pred_fallthru
          _
        // Predicated region
        $region25: #{tpu_custom_call.1} parent=11 // pred_check
          %p372 = pneg %p143
        $region26: #{tpu_custom_call.1} parent=11 // pred_check_branch
          %374 = sbr.rel (%p372) target = $region28
        $region27: #{tpu_custom_call.1} parent=11 // pred_region
          %376 = vsyncadd [#allocation9], 0
          %s377 = sshll.u32 %s5, 4
          %s378 = int_to_ptr.hbm [resolvable:$true] %s377
          %s379 = sshll.u32 [#allocation8], 4
          %s380 = int_to_ptr.vmem [resolvable:$true] %s379
          %385 = dma.hbm_to_vmem [thread:$0]  %s378, 256, %s380, [#allocation9], 64, 64, 4
        $region28: #{tpu_custom_call.1} parent=11 // pred_fallthru
          _
        // Predicated region
        $region29: #{tpu_custom_call.1} parent=11 // pred_check
          %p386 = pneg %p164
        $region30: #{tpu_custom_call.1} parent=11 // pred_check_branch
          %388 = sbr.rel (%p386) target = $region32
        $region31: #{tpu_custom_call.1} parent=11 // pred_region
          _
        $region32: #{tpu_custom_call.1} parent=11 // pred_fallthru
          _
        // Predicated region
        $region33: #{tpu_custom_call.1} parent=11 // pred_check
          %p389 = pneg %p185
        $region34: #{tpu_custom_call.1} parent=11 // pred_check_branch
          %391 = sbr.rel (%p389) target = $region36
        $region35: #{tpu_custom_call.1} parent=11 // pred_region
          _
        $region36: #{tpu_custom_call.1} parent=11 // pred_fallthru
          _
        // Predicated region
        $region37: #{tpu_custom_call.1} parent=11 // pred_check
          %p392 = pneg %p206
        $region38: #{tpu_custom_call.1} parent=11 // pred_check_branch
          %394 = sbr.rel (%p392) target = $region40
        $region39: #{tpu_custom_call.1} parent=11 // pred_region
          %396 = vsyncadd [#allocation9], 0
          %s397 = sshll.u32 %s8, 4
          %s398 = int_to_ptr.hbm [resolvable:$true] %s397
          %s399 = sshll.u32 [#allocation10], 4
          %s400 = int_to_ptr.vmem [resolvable:$true] %s399
          %405 = dma.hbm_to_vmem [thread:$0]  %s398, 256, %s400, [#allocation9], 64, 64, 4
        $region40: #{tpu_custom_call.1} parent=11 // pred_fallthru
          _
        // Predicated region
        $region41: #{tpu_custom_call.1} parent=11 // pred_check
          %p406 = pneg %p227
        $region42: #{tpu_custom_call.1} parent=11 // pred_check_branch
          %408 = sbr.rel (%p406) target = $region44
        $region43: #{tpu_custom_call.1} parent=11 // pred_region
          _
        $region44: #{tpu_custom_call.1} parent=11 // pred_fallthru
          _
        // Predicated region
        $region45: #{tpu_custom_call.1} parent=11 // pred_check
          %p409 = pneg %p248
        $region46: #{tpu_custom_call.1} parent=11 // pred_check_branch
          %411 = sbr.rel (%p409) target = $region48
        $region47: #{tpu_custom_call.1} parent=11 // pred_region
          _
        $region48: #{tpu_custom_call.1} parent=11 // pred_fallthru
          _
        // Predicated region
        $region49: #{tpu_custom_call.1} parent=11 // pred_check
          %p412 = pneg %p269
        $region50: #{tpu_custom_call.1} parent=11 // pred_check_branch
          %414 = sbr.rel (%p412) target = $region52
        $region51: #{tpu_custom_call.1} parent=11 // pred_region
          _
        $region52: #{tpu_custom_call.1} parent=11 // pred_fallthru
          _
        // Predicated region
        $region53: #{tpu_custom_call.1} parent=11 // pred_check
          %p415 = pneg %p290
        $region54: #{tpu_custom_call.1} parent=11 // pred_check_branch
          %417 = sbr.rel (%p415) target = $region56
        $region55: #{tpu_custom_call.1} parent=11 // pred_region
          _
        $region56: #{tpu_custom_call.1} parent=11 // pred_fallthru
          _
        // Predicated region
        $region57: #{tpu_custom_call.1} parent=11 // pred_check
          %p418 = pneg %p311
        $region58: #{tpu_custom_call.1} parent=11 // pred_check_branch
          %420 = sbr.rel (%p418) target = $region60
        $region59: #{tpu_custom_call.1} parent=11 // pred_region
          _
        $region60: #{tpu_custom_call.1} parent=11 // pred_fallthru
          _
      $region12: #{tpu_custom_call.1} parent=5 // pred_fallthru
        _
      %p421 = scmp.lt.s32.totalorder %s33, 2
      // Predicated region
      $region61: #{tpu_custom_call.1} parent=5 // pred_check
        %p422 = pneg %p421
      $region62: #{tpu_custom_call.1} parent=5 // pred_check_branch
        %424 = sbr.rel (%p422) target = $region64
      $region63: #{tpu_custom_call.1} parent=5 // pred_region
        // Predicated region
        $region65: #{tpu_custom_call.1} parent=63 // pred_check
          %p425 = pneg %p53
        $region66: #{tpu_custom_call.1} parent=63 // pred_check_branch
          %427 = sbr.rel (%p425) target = $region68
        $region67: #{tpu_custom_call.1} parent=63 // pred_region
          %p428 = scmp.lt.s32.totalorder %s33, 1
          %s429 = scalar_select %p428, %s33, 1
          %s430 = smul.addr %s429, 8
          %s431 = scalar_lea.vmem %s1, %s430
        $region68: #{tpu_custom_call.1} parent=63 // pred_fallthru
          _
      $region64: #{tpu_custom_call.1} parent=5 // pred_fallthru
        _
      %p432 = scmp.le.s32.totalorder 1, %s33
      %p433 = scmp.lt.s32.totalorder %s33, 3
      %p434 = pnand %p432, %p433
      %p435 = pneg %p434
      // Predicated region
      $region69: #{tpu_custom_call.1} parent=5 // pred_check
        _
      $region70: #{tpu_custom_call.1} parent=5 // pred_check_branch
        %437 = sbr.rel (%p434) target = $region72
      $region71: #{tpu_custom_call.1} parent=5 // pred_region
        %s438 = ssub.s32 %s33, 1
        // Predicated region
        $region73: #{tpu_custom_call.1} parent=71 // pred_check
          %p439 = pneg %p122
        $region74: #{tpu_custom_call.1} parent=71 // pred_check_branch
          %441 = sbr.rel (%p439) target = $region76
        $region75: #{tpu_custom_call.1} parent=71 // pred_region
          %443 = dma.done [#allocation6], 256
        $region76: #{tpu_custom_call.1} parent=71 // pred_fallthru
          _
        // Predicated region
        $region77: #{tpu_custom_call.1} parent=71 // pred_check
          %p444 = pneg %p143
        $region78: #{tpu_custom_call.1} parent=71 // pred_check_branch
          %446 = sbr.rel (%p444) target = $region80
        $region79: #{tpu_custom_call.1} parent=71 // pred_region
          %448 = dma.done [#allocation9], 256
        $region80: #{tpu_custom_call.1} parent=71 // pred_fallthru
          _
        // Predicated region
        $region81: #{tpu_custom_call.1} parent=71 // pred_check
          %p449 = pneg %p206
        $region82: #{tpu_custom_call.1} parent=71 // pred_check_branch
          %451 = sbr.rel (%p449) target = $region84
        $region83: #{tpu_custom_call.1} parent=71 // pred_region
          %453 = dma.done [#allocation9], 256
        $region84: #{tpu_custom_call.1} parent=71 // pred_fallthru
          _
        %p454 = scmp.lt.s32.totalorder %s38, 1
        %s455 = scalar_select %p454, %s38, 1
        %s456 = smul.addr %s455, 8
        %s457 = scalar_lea.vmem %s1, %s456
        %p458 = pneg %p59
        %p459 = pneg %p56
        %p460 = pneg %p80
        %p461 = pneg %p77
        %p462 = pneg %p101
        %p463 = pneg %p98
        %p464 = pneg %p122
        %p465 = pneg %p119
        %p466 = pneg %p143
        %p467 = pneg %p140
        %p468 = pneg %p164
        %p469 = pneg %p161
        %p470 = pneg %p185
        %p471 = pneg %p182
        %p472 = pneg %p206
        %p473 = pneg %p203
        %p474 = pneg %p227
        %p475 = pneg %p224
        %p476 = pneg %p248
        %p477 = pneg %p245
        %p478 = pneg %p269
        %p479 = pneg %p266
        %p480 = pneg %p290
        %p481 = pneg %p287
        %p482 = pneg %p311
        %p483 = pneg %p308
        %p484 = pneg %p337
        %p485 = pneg %p334
        %s486 = sand.u32 %s324, 1
        %s487 = scalar_lea.sflag [#allocation7], %s486
        %s488 = sand.u32 %s324, 1
        %s489 = smul.addr %s488, 8
        %s490 = scalar_lea.vmem [#allocation11], %s489
        %p491 = scmp.lt.s32.totalorder %s38, 1
        %s492 = scalar_select %p491, %s38, 1
        %s493 = smul.addr %s492, 8
        %s494 = scalar_lea.vmem %s1, %s493
        %v496 = vld [vmem:[%s494] sm:$0xff]
        %v497 = vmul.f32 %v496, 0.35355338
        %v498 = vld [vmem:[%s2] sm:$0xf]
        %v499 = vld [vmem:[%s2 + $0x4] sm:$0xf]
        %v500 = vld [vmem:[%s2 + $0x8] sm:$0xf]
        %v501 = vld [vmem:[%s2 + $0xc] sm:$0xf]
        %v502 = vpack.c.bf16 %v497, %v497
        %v507 = vunpack.c.l.b16 %v498
        %v508 = vunpack.c.l.b16 %v499
        %v509 = vunpack.c.l.b16 %v500
        %v510 = vunpack.c.l.b16 %v501
        %v511 = vpack.c.b16 %v508, %v507
        %v512 = vpack.c.b16 %v510, %v509
        %vm515 = vcmask 261120
        %v517 = vsel %vm515, %v502, 0
        %519 = vmatpush.bf16.msra.mxu0 0
        %520 = vmatpush.bf16.msra.mxu0 0
        %521 = vmatpush.bf16.msra.mxu0 0
        %522 = vmatpush.bf16.msra.mxu0 0
        %523 = vmatpush.bf16.msra.mxu0 0
        %524 = vmatpush.bf16.msra.mxu0 0
        %525 = vmatpush.bf16.msra.mxu0 %v512
        %526 = vmatpush.bf16.msra.mxu0 %v511
        %527 = vmatmul.bf16.gmra.mxu0 %v517
        %v528 = vpop.f32.mrf.mxu0
        %v529 = vadd.f32 0.0, %v528
        %v530 = vpop.f32.mrf.mxu0
        %531 = vdwg.mxu0
        %v532 = vld [vmem:[%s3] sm:$0xf]
        %v533 = vld [vmem:[%s3 + $0x4] sm:$0xf]
        %v534 = vld [vmem:[%s3 + $0x8] sm:$0xf]
        %v535 = vld [vmem:[%s3 + $0xc] sm:$0xf]
        %v536 = vpack.c.bf16 %v496, %v496
        %v541 = vunpack.c.l.b16 %v532
        %v542 = vunpack.c.l.b16 %v533
        %v543 = vunpack.c.l.b16 %v534
        %v544 = vunpack.c.l.b16 %v535
        %v545 = vpack.c.b16 %v542, %v541
        %v546 = vpack.c.b16 %v544, %v543
        %v550 = vsel %vm515, %v536, 0
        %552 = vmatpush.bf16.msra.mxu0 0
        %553 = vmatpush.bf16.msra.mxu0 0
        %554 = vmatpush.bf16.msra.mxu0 0
        %555 = vmatpush.bf16.msra.mxu0 0
        %556 = vmatpush.bf16.msra.mxu0 0
        %557 = vmatpush.bf16.msra.mxu0 0
        %558 = vmatpush.bf16.msra.mxu0 %v546
        %559 = vmatpush.bf16.msra.mxu0 %v545
        %560 = vmatmul.bf16.gmra.mxu0 %v550
        %v561 = vpop.f32.mrf.mxu0
        %v562 = vadd.f32 0.0, %v561
        %v563 = vpop.f32.mrf.mxu0
        %564 = vdwg.mxu0
        %v565 = vld [vmem:[#allocation5] sm:$0xf]
        %v566 = vld [vmem:[#allocation5 + $0x4] sm:$0xf]
        %v567 = vld [vmem:[#allocation5 + $0x8] sm:$0xf]
        %v568 = vld [vmem:[#allocation5 + $0xc] sm:$0xf]
        %v573 = vunpack.c.l.b16 %v565
        %v574 = vunpack.c.l.b16 %v566
        %v575 = vunpack.c.l.b16 %v567
        %v576 = vunpack.c.l.b16 %v568
        %v577 = vpack.c.b16 %v574, %v573
        %v578 = vpack.c.b16 %v576, %v575
        %581 = vmatpush.bf16.msra.mxu0 0
        %582 = vmatpush.bf16.msra.mxu0 0
        %583 = vmatpush.bf16.msra.mxu0 0
        %584 = vmatpush.bf16.msra.mxu0 0
        %585 = vmatpush.bf16.msra.mxu0 0
        %586 = vmatpush.bf16.msra.mxu0 0
        %587 = vmatpush.bf16.msra.mxu0 %v578
        %588 = vmatpush.bf16.msra.mxu0 %v577
        %589 = vmatmul.bf16.gmra.mxu0 %v550
        %v590 = vpop.f32.mrf.mxu0
        %v591 = vadd.f32 0.0, %v590
        %v592 = vpop.f32.mrf.mxu0
        %593 = vdwg.mxu0
        %v594 = vlaneseq
        %v595 = vand.u32 %v594, 127
        %v596 = vpack.c.bf16 %v529, %v529
        %v597 = vpack.c.bf16 %v562, %v562
        %vm598 = vcmask 64512
        %v600 = vsel %vm598, %v596, 0
        %v603 = vsel %vm598, %v597, 0
        %605 = vmatpush.bf16.xpose.msra.mxu0 0
        %606 = vmatpush.bf16.xpose.msra.mxu0 0
        %607 = vmatpush.bf16.xpose.msra.mxu0 0
        %608 = vmatpush.bf16.xpose.msra.mxu0 0
        %609 = vmatpush.bf16.xpose.msra.mxu0 0
        %610 = vmatpush.bf16.xpose.msra.mxu0 0
        %611 = vmatpush.bf16.xpose.msra.mxu0 0
        %612 = vmatpush.bf16.xpose.msra.mxu0 %v603
        %613 = vmatmul.bf16.gmra.mxu0 %v600
        %v614 = vpop.f32.mrf.mxu0
        %v615 = vadd.f32 0.0, %v614
        %v616 = vpop.f32.mrf.mxu0
        %617 = vdwg.mxu0
        %s618 = smul.u32 %s38, 4
        %s619 = sld [smem:[#allocation4 + %s618]]
        %v620 = vstv %s619
        %vm621 = vcmp.lt.s32.totalorder %v595, %v620
        %v622 = vsel %vm621, %v615, -1000000.0
        %v623 = vsel %vm598, %v622, -inf
        %624 = vmax.xlane.f32.xlu0 %v623
        %v625 = vpop.xlane.xlu0 %624
        %v626 = vsub.f32 %v622, %v625
        %v627 = vmul.f32 %v626, 1.442695
        %v628 = vpow.pop %v627
        %v629 = vsel %vm598, %v628, 0.0
        %630 = vadd.xlane.f32.xlu0 %v629
        %v631 = vpop.xlane.xlu0 %630
        %v632 = vrcp.pop %v631
        %v633 = vmul.f32 %v628, %v632
        %v634 = vpack.c.bf16 %v633, %v633
        %v635 = vpack.c.bf16 %v591, %v591
        %v637 = vsel %vm598, %v634, 0
        %vm639 = vcmask 1043456
        %v641 = vsel %vm639, %v635, 0
        %643 = vmatpush.bf16.msra.mxu0 0
        %644 = vmatpush.bf16.msra.mxu0 0
        %645 = vmatpush.bf16.msra.mxu0 0
        %646 = vmatpush.bf16.msra.mxu0 0
        %647 = vmatpush.bf16.msra.mxu0 0
        %648 = vmatpush.bf16.msra.mxu0 0
        %649 = vmatpush.bf16.msra.mxu0 0
        %650 = vmatpush.bf16.msra.mxu0 %v641
        %651 = vmatmul.bf16.gmra.mxu0 %v637
        %v652 = vpop.f32.mrf.mxu0
        %v653 = vadd.f32 0.0, %v652
        %v654 = vpop.f32.mrf.mxu0
        %655 = vdwg.mxu0
        %656 = vst.msk [vmem:[#allocation2] sm:$0xff] %vm598, %v653
        %658 = vrot.lane.b32.xlu0 %v596, 120
        %v659 = vpop.permute.xlu0 %658
        %661 = vrot.lane.b32.xlu0 %v597, 120
        %v662 = vpop.permute.xlu0 %661
        %v664 = vsel %vm598, %v659, 0
        %v667 = vsel %vm598, %v662, 0
        %669 = vmatpush.bf16.xpose.msra.mxu0 0
        %670 = vmatpush.bf16.xpose.msra.mxu0 0
        %671 = vmatpush.bf16.xpose.msra.mxu0 0
        %672 = vmatpush.bf16.xpose.msra.mxu0 0
        %673 = vmatpush.bf16.xpose.msra.mxu0 0
        %674 = vmatpush.bf16.xpose.msra.mxu0 0
        %675 = vmatpush.bf16.xpose.msra.mxu0 0
        %676 = vmatpush.bf16.xpose.msra.mxu0 %v667
        %677 = vmatmul.bf16.gmra.mxu0 %v664
        %v678 = vpop.f32.mrf.mxu0
        %v679 = vadd.f32 0.0, %v678
        %v680 = vpop.f32.mrf.mxu0
        %681 = vdwg.mxu0
        %s682 = sadd.s32 %s618, 1
        %s683 = sld [smem:[#allocation4 + %s682]]
        %v684 = vstv %s683
        %vm685 = vcmp.lt.s32.totalorder %v595, %v684
        %v686 = vsel %vm685, %v679, -1000000.0
        %v687 = vsel %vm598, %v686, -inf
        %688 = vmax.xlane.f32.xlu0 %v687
        %v689 = vpop.xlane.xlu0 %688
        %v690 = vsub.f32 %v686, %v689
        %v691 = vmul.f32 %v690, 1.442695
        %v692 = vpow.pop %v691
        %v693 = vsel %vm598, %v692, 0.0
        %694 = vadd.xlane.f32.xlu0 %v693
        %v695 = vpop.xlane.xlu0 %694
        %v696 = vrcp.pop %v695
        %v697 = vmul.f32 %v692, %v696
        %v698 = vpack.c.bf16 %v697, %v697
        %700 = vrot.lane.b32.xlu0 %v635, 120
        %v701 = vpop.permute.xlu0 %700
        %v703 = vsel %vm598, %v698, 0
        %v706 = vsel %vm639, %v701, 0
        %708 = vmatpush.bf16.msra.mxu0 0
        %709 = vmatpush.bf16.msra.mxu0 0
        %710 = vmatpush.bf16.msra.mxu0 0
        %711 = vmatpush.bf16.msra.mxu0 0
        %712 = vmatpush.bf16.msra.mxu0 0
        %713 = vmatpush.bf16.msra.mxu0 0
        %714 = vmatpush.bf16.msra.mxu0 0
        %715 = vmatpush.bf16.msra.mxu0 %v706
        %716 = vmatmul.bf16.gmra.mxu0 %v703
        %v717 = vpop.f32.mrf.mxu0
        %v718 = vadd.f32 0.0, %v717
        %v719 = vpop.f32.mrf.mxu0
        %720 = vdwg.mxu0
        %722 = vrot.lane.b32.xlu0 %v718, 8
        %v723 = vpop.permute.xlu0 %722
        %vm725 = vcmask 130112
        %726 = vst.msk [vmem:[#allocation2] sm:$0xff] %vm725, %v723
        %727 = vrot.lane.b32.xlu0 %v596, 112
        %v728 = vpop.permute.xlu0 %727
        %729 = vrot.lane.b32.xlu0 %v597, 112
        %v730 = vpop.permute.xlu0 %729
        %v732 = vsel %vm598, %v728, 0
        %v735 = vsel %vm598, %v730, 0
        %737 = vmatpush.bf16.xpose.msra.mxu0 0
        %738 = vmatpush.bf16.xpose.msra.mxu0 0
        %739 = vmatpush.bf16.xpose.msra.mxu0 0
        %740 = vmatpush.bf16.xpose.msra.mxu0 0
        %741 = vmatpush.bf16.xpose.msra.mxu0 0
        %742 = vmatpush.bf16.xpose.msra.mxu0 0
        %743 = vmatpush.bf16.xpose.msra.mxu0 0
        %744 = vmatpush.bf16.xpose.msra.mxu0 %v735
        %745 = vmatmul.bf16.gmra.mxu0 %v732
        %v746 = vpop.f32.mrf.mxu0
        %v747 = vadd.f32 0.0, %v746
        %v748 = vpop.f32.mrf.mxu0
        %749 = vdwg.mxu0
        %s750 = sadd.s32 %s618, 2
        %s751 = sld [smem:[#allocation4 + %s750]]
        %v752 = vstv %s751
        %vm753 = vcmp.lt.s32.totalorder %v595, %v752
        %v754 = vsel %vm753, %v747, -1000000.0
        %v755 = vsel %vm598, %v754, -inf
        %756 = vmax.xlane.f32.xlu0 %v755
        %v757 = vpop.xlane.xlu0 %756
        %v758 = vsub.f32 %v754, %v757
        %v759 = vmul.f32 %v758, 1.442695
        %v760 = vpow.pop %v759
        %v761 = vsel %vm598, %v760, 0.0
        %762 = vadd.xlane.f32.xlu0 %v761
        %v763 = vpop.xlane.xlu0 %762
        %v764 = vrcp.pop %v763
        %v765 = vmul.f32 %v760, %v764
        %v766 = vpack.c.bf16 %v765, %v765
        %767 = vrot.lane.b32.xlu0 %v635, 112
        %v768 = vpop.permute.xlu0 %767
        %v770 = vsel %vm598, %v766, 0
        %v773 = vsel %vm639, %v768, 0
        %775 = vmatpush.bf16.msra.mxu0 0
        %776 = vmatpush.bf16.msra.mxu0 0
        %777 = vmatpush.bf16.msra.mxu0 0
        %778 = vmatpush.bf16.msra.mxu0 0
        %779 = vmatpush.bf16.msra.mxu0 0
        %780 = vmatpush.bf16.msra.mxu0 0
        %781 = vmatpush.bf16.msra.mxu0 0
        %782 = vmatpush.bf16.msra.mxu0 %v773
        %783 = vmatmul.bf16.gmra.mxu0 %v770
        %v784 = vpop.f32.mrf.mxu0
        %v785 = vadd.f32 0.0, %v784
        %v786 = vpop.f32.mrf.mxu0
        %787 = vdwg.mxu0
        %789 = vrot.lane.b32.xlu0 %v785, 16
        %v790 = vpop.permute.xlu0 %789
        %vm792 = vcmask 195712
        %793 = vst.msk [vmem:[#allocation2] sm:$0xff] %vm792, %v790
        %794 = vrot.lane.b32.xlu0 %v596, 104
        %v795 = vpop.permute.xlu0 %794
        %796 = vrot.lane.b32.xlu0 %v597, 104
        %v797 = vpop.permute.xlu0 %796
        %v799 = vsel %vm598, %v795, 0
        %v802 = vsel %vm598, %v797, 0
        %804 = vmatpush.bf16.xpose.msra.mxu0 0
        %805 = vmatpush.bf16.xpose.msra.mxu0 0
        %806 = vmatpush.bf16.xpose.msra.mxu0 0
        %807 = vmatpush.bf16.xpose.msra.mxu0 0
        %808 = vmatpush.bf16.xpose.msra.mxu0 0
        %809 = vmatpush.bf16.xpose.msra.mxu0 0
        %810 = vmatpush.bf16.xpose.msra.mxu0 0
        %811 = vmatpush.bf16.xpose.msra.mxu0 %v802
        %812 = vmatmul.bf16.gmra.mxu0 %v799
        %v813 = vpop.f32.mrf.mxu0
        %v814 = vadd.f32 0.0, %v813
        %v815 = vpop.f32.mrf.mxu0
        %816 = vdwg.mxu0
        %s817 = sadd.s32 %s618, 3
        %s818 = sld [smem:[#allocation4 + %s817]]
        %v819 = vstv %s818
        %vm820 = vcmp.lt.s32.totalorder %v595, %v819
        %v821 = vsel %vm820, %v814, -1000000.0
        %v822 = vsel %vm598, %v821, -inf
        %823 = vmax.xlane.f32.xlu0 %v822
        %v824 = vpop.xlane.xlu0 %823
        %v825 = vsub.f32 %v821, %v824
        %v826 = vmul.f32 %v825, 1.442695
        %v827 = vpow.pop %v826
        %v828 = vsel %vm598, %v827, 0.0
        %829 = vadd.xlane.f32.xlu0 %v828
        %v830 = vpop.xlane.xlu0 %829
        %v831 = vrcp.pop %v830
        %v832 = vmul.f32 %v827, %v831
        %v833 = vpack.c.bf16 %v832, %v832
        %834 = vrot.lane.b32.xlu0 %v635, 104
        %v835 = vpop.permute.xlu0 %834
        %v837 = vsel %vm598, %v833, 0
        %v840 = vsel %vm639, %v835, 0
        %842 = vmatpush.bf16.msra.mxu0 0
        %843 = vmatpush.bf16.msra.mxu0 0
        %844 = vmatpush.bf16.msra.mxu0 0
        %845 = vmatpush.bf16.msra.mxu0 0
        %846 = vmatpush.bf16.msra.mxu0 0
        %847 = vmatpush.bf16.msra.mxu0 0
        %848 = vmatpush.bf16.msra.mxu0 0
        %849 = vmatpush.bf16.msra.mxu0 %v840
        %850 = vmatmul.bf16.gmra.mxu0 %v837
        %v851 = vpop.f32.mrf.mxu0
        %v852 = vadd.f32 0.0, %v851
        %v853 = vpop.f32.mrf.mxu0
        %854 = vdwg.mxu0
        %856 = vrot.lane.b32.xlu0 %v852, 24
        %v857 = vpop.permute.xlu0 %856
        %vm859 = vcmask 261312
        %860 = vst.msk [vmem:[#allocation2] sm:$0xff] %vm859, %v857
        %v861 = vld [vmem:[#allocation2] sm:$0xff]
        %v862 = vld [vmem:[#allocation8] sm:$0xf]
        %v863 = vld [vmem:[#allocation8 + $0x4] sm:$0xf]
        %v864 = vld [vmem:[#allocation8 + $0x8] sm:$0xf]
        %v865 = vld [vmem:[#allocation8 + $0xc] sm:$0xf]
        %v866 = vpack.c.bf16 %v861, %v861
        %v871 = vunpack.c.l.b16 %v862
        %v872 = vunpack.c.l.b16 %v863
        %v873 = vunpack.c.l.b16 %v864
        %v874 = vunpack.c.l.b16 %v865
        %v875 = vpack.c.b16 %v872, %v871
        %v876 = vpack.c.b16 %v874, %v873
        %v880 = vsel %vm515, %v866, 0
        %882 = vmatpush.bf16.msra.mxu0 0
        %883 = vmatpush.bf16.msra.mxu0 0
        %884 = vmatpush.bf16.msra.mxu0 0
        %885 = vmatpush.bf16.msra.mxu0 0
        %886 = vmatpush.bf16.msra.mxu0 0
        %887 = vmatpush.bf16.msra.mxu0 0
        %888 = vmatpush.bf16.msra.mxu0 %v876
        %889 = vmatpush.bf16.msra.mxu0 %v875
        %890 = vmatmul.bf16.gmra.mxu0 %v880
        %v891 = vpop.f32.mrf.mxu0
        %v892 = vadd.f32 0.0, %v891
        %v893 = vpop.f32.mrf.mxu0
        %894 = vdwg.mxu0
        %v895 = vadd.f32 %v496, %v892
        %v896 = vld [vmem:[%s6] sm:$0x1]
        %v897 = vld [vmem:[%s7] sm:$0x1]
        %v898 = vsel %vm515, %v895, 0.0
        %899 = vadd.xlane.f32.xlu0 %v898
        %v900 = vpop.xlane.xlu0 %899
        %v901 = vrcp.pop 32.0
        %v902 = vmul.f32 32.0, %v901
        %v903 = vsub.f32 1.0, %v902
        %v904 = vmul.f32 %v901, %v903
        %v905 = vadd.f32 %v901, %v904
        %vm906 = vweird.f32 %v901
        %v907 = vsel %vm906, %v901, %v905
        %v908 = vmul.f32 %v900, %v907
        %v909 = vsub.f32 %v895, %v908
        %v910 = vmul.f32 %v909, %v909
        %v911 = vsel %vm515, %v910, 0.0
        %912 = vadd.xlane.f32.xlu0 %v911
        %v913 = vpop.xlane.xlu0 %912
        %v914 = vmul.f32 %v913, %v907
        %v915 = vadd.f32 %v914, 1e-05
        %v916 = vrsqrt.pop %v915
        %v917 = vmul.f32 %v916, %v915
        %v918 = vmul.f32 %v917, %v916
        %v919 = vmul.f32 0.5, %v918
        %v920 = vsub.f32 1.5, %v919
        %v921 = vmul.f32 %v916, %v920
        %vm922 = vweird.f32 %v915
        %vm923 = vweird.f32 %v916
        %vm924 = vmor %vm922, %vm923
        %v925 = vsel %vm924, %v916, %v921
        %v926 = vmul.f32 %v909, %v925
        %v928 = vperm.slane %v896, 0
        %v930 = vmul.f32 %v926, %v928
        %v932 = vperm.slane %v897, 0
        %v934 = vadd.f32 %v930, %v932
        %v935 = vld [vmem:[#allocation10] sm:$0xf]
        %v936 = vld [vmem:[#allocation10 + $0x4] sm:$0xf]
        %v937 = vld [vmem:[#allocation10 + $0x8] sm:$0xf]
        %v938 = vld [vmem:[#allocation10 + $0xc] sm:$0xf]
        %v939 = vpack.c.bf16 %v934, %v934
        %v940 = vld [vmem:[%s9] sm:$0x1]
        %v942 = vperm.slane %v940, 0
        %v948 = vunpack.c.l.b16 %v935
        %v949 = vunpack.c.l.b16 %v936
        %v950 = vunpack.c.l.b16 %v937
        %v951 = vunpack.c.l.b16 %v938
        %v952 = vpack.c.b16 %v949, %v948
        %v953 = vpack.c.b16 %v951, %v950
        %v957 = vsel %vm515, %v939, 0
        %959 = vmatpush.bf16.msra.mxu0 0
        %960 = vmatpush.bf16.msra.mxu0 0
        %961 = vmatpush.bf16.msra.mxu0 0
        %962 = vmatpush.bf16.msra.mxu0 0
        %963 = vmatpush.bf16.msra.mxu0 0
        %964 = vmatpush.bf16.msra.mxu0 0
        %965 = vmatpush.bf16.msra.mxu0 %v953
        %966 = vmatpush.bf16.msra.mxu0 %v952
        %967 = vmatmul.bf16.gmra.mxu0 %v957
        %v968 = vpop.f32.mrf.mxu0
        %v969 = vadd.f32 %v942, %v968
        %v970 = vpop.f32.mrf.mxu0
        %971 = vdwg.mxu0
        %v972 = vmax.f32 %v969, 0.0
        %v973 = vld [vmem:[%s10] sm:$0xf]
        %v974 = vld [vmem:[%s10 + $0x4] sm:$0xf]
        %v975 = vld [vmem:[%s10 + $0x8] sm:$0xf]
        %v976 = vld [vmem:[%s10 + $0xc] sm:$0xf]
        %v977 = vld [vmem:[%s10 + $0x10] sm:$0xf]
        %v978 = vld [vmem:[%s10 + $0x14] sm:$0xf]
        %v979 = vld [vmem:[%s10 + $0x18] sm:$0xf]
        %v980 = vld [vmem:[%s10 + $0x1c] sm:$0xf]
        %v981 = vpack.c.bf16 %v972, %v972
        %v982 = vld [vmem:[%s11] sm:$0x1]
        %v984 = vperm.slane %v982, 0
        %v994 = vunpack.c.l.b16 %v973
        %v995 = vunpack.c.l.b16 %v974
        %v996 = vunpack.c.l.b16 %v975
        %v997 = vunpack.c.l.b16 %v976
        %v998 = vunpack.c.l.b16 %v977
        %v999 = vunpack.c.l.b16 %v978
        %v1000 = vunpack.c.l.b16 %v979
        %v1001 = vunpack.c.l.b16 %v980
        %v1002 = vpack.c.b16 %v995, %v994
        %v1003 = vpack.c.b16 %v997, %v996
        %v1004 = vpack.c.b16 %v999, %v998
        %v1005 = vpack.c.b16 %v1001, %v1000
        %vm1010 = vcmask 523264
        %v1012 = vsel %vm1010, %v981, 0
        %1014 = vmatpush.bf16.msra.mxu0 0
        %1015 = vmatpush.bf16.msra.mxu0 0
        %1016 = vmatpush.bf16.msra.mxu0 0
        %1017 = vmatpush.bf16.msra.mxu0 0
        %1018 = vmatpush.bf16.msra.mxu0 %v1005
        %1019 = vmatpush.bf16.msra.mxu0 %v1004
        %1020 = vmatpush.bf16.msra.mxu0 %v1003
        %1021 = vmatpush.bf16.msra.mxu0 %v1002
        %1022 = vmatmul.bf16.gmra.mxu0 %v1012
        %v1023 = vpop.f32.mrf.mxu0
        %v1024 = vadd.f32 %v984, %v1023
        %v1025 = vpop.f32.mrf.mxu0
        %1026 = vdwg.mxu0
        %v1027 = vadd.f32 %v934, %v1024
        %v1028 = vld [vmem:[%s12] sm:$0x1]
        %v1029 = vld [vmem:[%s13] sm:$0x1]
        %v1030 = vsel %vm515, %v1027, 0.0
        %1031 = vadd.xlane.f32.xlu0 %v1030
        %v1032 = vpop.xlane.xlu0 %1031
        %v1033 = vmul.f32 %v1032, %v907
        %v1034 = vsub.f32 %v1027, %v1033
        %v1035 = vmul.f32 %v1034, %v1034
        %v1036 = vsel %vm515, %v1035, 0.0
        %1037 = vadd.xlane.f32.xlu0 %v1036
        %v1038 = vpop.xlane.xlu0 %1037
        %v1039 = vmul.f32 %v1038, %v907
        %v1040 = vadd.f32 %v1039, 1e-05
        %v1041 = vrsqrt.pop %v1040
        %v1042 = vmul.f32 %v1041, %v1040
        %v1043 = vmul.f32 %v1042, %v1041
        %v1044 = vmul.f32 0.5, %v1043
        %v1045 = vsub.f32 1.5, %v1044
        %v1046 = vmul.f32 %v1041, %v1045
        %vm1047 = vweird.f32 %v1040
        %vm1048 = vweird.f32 %v1041
        %vm1049 = vmor %vm1047, %vm1048
        %v1050 = vsel %vm1049, %v1041, %v1046
        %v1051 = vmul.f32 %v1034, %v1050
        %v1053 = vperm.slane %v1028, 0
        %v1055 = vmul.f32 %v1051, %v1053
        %v1057 = vperm.slane %v1029, 0
        %v1059 = vadd.f32 %v1055, %v1057
        %1060 = vst.msk [vmem:[%s490] sm:$0xff] %vm515, %v1059
        %s1061 = sand.u32 %s324, 1
        %s1062 = scalar_lea.sflag [#allocation7], %s1061
        %s1063 = sand.u32 %s324, 1
        %s1064 = smul.addr %s1063, 8
        %s1065 = scalar_lea.vmem [#allocation11], %s1064
        // Predicated region
        $region85: #{tpu_custom_call.1} parent=71 // pred_check
          %p1066 = pneg %p334
        $region86: #{tpu_custom_call.1} parent=71 // pred_check_branch
          %1068 = sbr.rel (%p1066) target = $region88
        $region87: #{tpu_custom_call.1} parent=71 // pred_region
          %1070 = vsyncadd %s1062, 0
          %s1071 = smul.addr %s38, 8
          %s1072 = scalar_lea.hbm %s14, %s1071
          %s1074 = sshll.u32 %s1065, 4
          %s1075 = int_to_ptr.vmem [resolvable:$true] %s1074
          %s1076 = sshll.u32 %s1072, 4
          %s1077 = int_to_ptr.hbm [resolvable:$true] %s1076
          %1079 = dma.vmem_to_hbm [thread:$0]  %s1075, 128, %s1077, %s1062
        $region88: #{tpu_custom_call.1} parent=71 // pred_fallthru
          _
      $region72: #{tpu_custom_call.1} parent=5 // pred_fallthru
        _
      %p1080 = scmp.le.s32.totalorder 2, %s33
      // Predicated region
      $region89: #{tpu_custom_call.1} parent=5 // pred_check
        %p1081 = pneg %p1080
      $region90: #{tpu_custom_call.1} parent=5 // pred_check_branch
        %1083 = sbr.rel (%p1081) target = $region92
      $region91: #{tpu_custom_call.1} parent=5 // pred_region
        %s1084 = ssub.s32 %s33, 2
        // Predicated region
        $region93: #{tpu_custom_call.1} parent=91 // pred_check
          %p1085 = pneg %p340
        $region94: #{tpu_custom_call.1} parent=91 // pred_check_branch
          %1087 = sbr.rel (%p1085) target = $region96
        $region95: #{tpu_custom_call.1} parent=91 // pred_region
          %s1088 = sand.u32 %s325, 1
          %s1089 = scalar_lea.sflag [#allocation7], %s1088
          %s1090 = sand.u32 %s325, 1
          %s1091 = smul.addr %s1090, 8
          %s1092 = scalar_lea.vmem [#allocation11], %s1091
          %1094 = dma.done %s1089, 128
        $region96: #{tpu_custom_call.1} parent=91 // pred_fallthru
          _
      $region92: #{tpu_custom_call.1} parent=5 // pred_fallthru
        _
    $region6: #{tpu_custom_call.1} parent=1 // loop_footer
      %s37 = sadd.s32 1, %s33
    $region7: #{tpu_custom_call.1} parent=1 // loop_footer_branch
      %32 = sbr.rel target = $region3
    $region8: #{tpu_custom_call.1} parent=1 // loop_exit
      _
    %1095 = vsyncpa [#allocation6], 1
    %s1096 = scalar_lea.sflag [#allocation6], 1
    %1097 = vsyncpa %s1096, 1
    %1098 = vsyncpa [#allocation9], 1
    %1099 = vsyncpa [#allocation7], 1
    %s1100 = scalar_lea.sflag [#allocation7], 1
    %1101 = vsyncpa %s1100, 1

</llo_original>
